<compile_context>
chip_gen: v7x
topology: tpu7x:2x2x1
jax: 0.10.0
libtpu: 0.0.40
codegen_flags: <defaults>
</compile_context>

<pallas_src>
import functools

import jax
import jax.numpy as jnp
from jax.experimental import pallas as pl
from jax.experimental.pallas import tpu as pltpu

_C = 128  # lane-dense padded channel width used throughout the kernel


def _full_spec(shape):
    # Whole-array block; block_shape equals the full array dims so the
    # (8, 128) divisibility constraint does not apply.
    return pl.BlockSpec(shape, lambda i: (0,) * len(shape))


# ------------------------------- fused kernel ------------------------------ #

def _codegen_fused_kernel(p1_ref, w1_ref, s1_ref, b1_ref,
                          w2_ref, s2_ref, b2_ref,
                          w3_ref, s3_ref, b3_ref,
                          w4_ref, b4_ref,
                          o_ref, c1pad_ref, *, n, h1):
    """Whole CodeGen forward (eval mode) in one kernel.

    p1_ref : (4*h1*h1*n, K1p) conv1 im2col patches, rows = (pool_slab, h, w, n)
    w1_ref : (K1p, 128)        conv1 weight (K padded, cout padded)
    s1/b1  : (1, 128)          folded BN1 scale / bias
    w2_ref : (25*128, 128)     conv2 weight per tap (rows = (i, j, cin) blocks)
    s2/b2  : (1, 128)          folded BN2 scale / bias
    w3_ref : (h2*h2*128, H1p)  l1 weight, rows permuted to (h, w, c) blocks
    s3/b3  : (1, H1p)          folded BN1d scale / bias
    w4_ref : (H1p, Hp)         l2 weight (padded)
    b4_ref : (1, Hp)           l2 bias (padded)
    o_ref  : (n, Hp)           tanh output (padded hash dim)
    c1pad_ref : VMEM scratch, ((h1+4)*n, (h1+4)*128) spatially padded conv2 in
    """
    C = _C
    h2 = h1 // 2                 # final spatial side (2)
    po1 = h1 * h1 * n            # rows per conv1 pooling slab

    # -------- conv1: one (4*Po, K) matmul + BN(eval) + ReLU + row-block maxpool
    s1 = s1_ref[...]
    b1 = b1_ref[...]
    y1 = jnp.dot(p1_ref[...], w1_ref[...], preferred_element_type=jnp.float32)
    y1 = jnp.maximum(y1 * s1 + b1, 0.0)          # BN + ReLU before the pool max
    c1 = jnp.maximum(jnp.maximum(y1[0 * po1:1 * po1, :], y1[1 * po1:2 * po1, :]),
                     jnp.maximum(y1[2 * po1:3 * po1, :], y1[3 * po1:4 * po1, :]))
    # c1: (h1*h1*n, C), rows ordered (h, w, n).  Dropout2d is identity (eval).

    # -------- scatter c1 into the zero-padded conv2 input scratch
    # c1pad layout: rows = h_pad*n + n_idx, cols = w_pad*C + c   (pad ring = 2)
    c1pad_ref[...] = jnp.zeros(c1pad_ref.shape, jnp.float32)
    for hh in range(h1):
        for ww in range(h1):
            src = c1[(hh * h1 + ww) * n:(hh * h1 + ww + 1) * n, :]
            c1pad_ref[(hh + 2) * n:(hh + 3) * n, (ww + 2) * C:(ww + 3) * C] = src

    # -------- conv2: in-kernel im2col into ONE wide lane-aligned LHS, then a
    # single MXU matmul (K = 25*C, accumulation stays inside the MXU).
    # LHS rows ordered (ow, oh, n); column blocks ordered (i, j) to match w2.
    s2 = s2_ref[...]
    b2 = b2_ref[...]
    tap_cols = []
    for i in range(5):
        rows_i = c1pad_ref[i * n:(i + h1) * n, :]          # (h1*n, (h1+4)*C)
        for j in range(5):
            tap_cols.append(jnp.concatenate(
                [rows_i[:, (j + q) * C:(j + q + 1) * C] for q in range(h1)],
                axis=0))                                   # (h1*h1*n, C)
    lhs2 = jnp.concatenate(tap_cols, axis=1)               # (h1*h1*n, 25*C)
    y2 = jnp.dot(lhs2, w2_ref[...], preferred_element_type=jnp.float32)
    y2 = jnp.maximum(y2 * s2 + b2, 0.0)                    # BN + ReLU

    # -------- 2x2 maxpool + l1 as ONE matmul (torch NCHW flatten folded into
    # the permuted w3 row blocks, ordered (po*h2 + qo)).
    s3 = s3_ref[...]
    b3 = b3_ref[...]
    pooled_blocks = []
    for po in range(h2):
        for qo in range(h2):
            parts = []
            for dq in range(2):
                for dp in range(2):
                    r0 = (2 * qo + dq) * h1 * n + (2 * po + dp) * n
                    parts.append(y2[r0:r0 + n, :])
            pooled_blocks.append(
                jnp.maximum(jnp.maximum(parts[0], parts[1]),
                            jnp.maximum(parts[2], parts[3])))   # (n, C)
    pooled = jnp.concatenate(pooled_blocks, axis=1)             # (n, h2*h2*C)
    l1out = jnp.dot(pooled, w3_ref[...], preferred_element_type=jnp.float32)

    # -------- BN1d + sigmoid + l2 + tanh
    hid = jax.nn.sigmoid(l1out * s3 + b3)
    z = jnp.dot(hid, w4_ref[...], preferred_element_type=jnp.float32) + b4_ref[...]
    o_ref[...] = jnp.tanh(z)


# ----------------------- one-time parameter preparation --------------------- #

def prepare_params(params, eps=1e-5):
    """Fold BN into scale/bias and pad/permute weights to lane-dense layouts."""
    C = _C
    # conv1
    w1 = params["conv1_w"]                          # (5, 5, 16, 32) HWIO
    kh, kw, _, co1 = w1.shape
    K1 = kh * kw * w1.shape[2]
    K1p = pl.cdiv(K1, 128) * 128
    w1p = jnp.zeros((K1p, C), jnp.float32).at[:K1, :co1].set(w1.reshape(K1, co1))
    sc1 = params["bn1_g"] / jnp.sqrt(params["bn1_v"] + eps)
    bi1 = (params["conv1_b"] - params["bn1_m"]) * sc1 + params["bn1_b"]
    s1 = jnp.zeros((1, C), jnp.float32).at[0, :co1].set(sc1)
    b1 = jnp.zeros((1, C), jnp.float32).at[0, :co1].set(bi1)

    # conv2
    w2 = params["conv2_w"]                          # (5, 5, 32, 80) HWIO
    ci2, co2 = w2.shape[2], w2.shape[3]
    w2p = jnp.zeros((kh, kw, C, C), jnp.float32).at[:, :, :ci2, :co2].set(w2)
    w2s = w2p.reshape(kh * kw * C, C)               # rows = (i, j, cin)
    sc2 = params["bn2_g"] / jnp.sqrt(params["bn2_v"] + eps)
    bi2 = (params["conv2_b"] - params["bn2_m"]) * sc2 + params["bn2_b"]
    s2 = jnp.zeros((1, C), jnp.float32).at[0, :co2].set(sc2)
    b2 = jnp.zeros((1, C), jnp.float32).at[0, :co2].set(bi2)

    # head: permute l1 rows from torch (c, h, w) flatten order into (h, w, c)
    # 128-wide channel blocks; pad hidden 200 -> 256 and hash 32 -> 128.
    l1w = params["l1_w"]                            # (80*Hf*Wf, 200)
    H1 = l1w.shape[1]
    H1p = pl.cdiv(H1, 128) * 128
    hfwf = l1w.shape[0] // co2
    Hf = int(round(hfwf ** 0.5))
    Wf = hfwf // Hf
    l1w = l1w.reshape(co2, Hf, Wf, H1).transpose(1, 2, 0, 3)   # (Hf, Wf, c, H1)
    w3 = jnp.zeros((Hf, Wf, C, H1p), jnp.float32).at[:, :, :co2, :H1].set(l1w)
    w3 = w3.reshape(Hf * Wf * C, H1p)
    sc3 = params["bn3_g"] / jnp.sqrt(params["bn3_v"] + eps)
    bi3 = (params["l1_b"] - params["bn3_m"]) * sc3 + params["bn3_b"]
    s3 = jnp.zeros((1, H1p), jnp.float32).at[0, :H1].set(sc3)
    b3 = jnp.zeros((1, H1p), jnp.float32).at[0, :H1].set(bi3)

    l2w = params["l2_w"]
    Hh = l2w.shape[1]
    Hhp = pl.cdiv(Hh, 128) * 128
    w4 = jnp.zeros((H1p, Hhp), jnp.float32).at[:H1, :Hh].set(l2w)
    b4 = jnp.zeros((1, Hhp), jnp.float32).at[0, :Hh].set(params["l2_b"])

    return dict(w1p=w1p, s1=s1, b1=b1, w2s=w2s, s2=s2, b2=b2,
                w3=w3, s3=s3, b3=b3, w4=w4, b4=b4)


# --------------------------------- forward --------------------------------- #

@functools.partial(jax.jit, static_argnames=("hash_size",))
def codegen_forward(x_nchw, prep, *, hash_size):
    C = _C
    x = jnp.transpose(x_nchw, (0, 2, 3, 1)).astype(jnp.float32)   # NHWC
    N, H, W, Cin = x.shape
    kh = kw = 5
    K1 = kh * kw * Cin
    K1p = prep["w1p"].shape[0]
    Ho, Wo = H // 2, W // 2

    # conv1 im2col (XLA glue on the tiny HBM input), grouped by the four
    # maxpool sub-positions; rows ordered (slab, h, w, n); K zero-padded.
    xp = jnp.pad(x, ((0, 0), (2, 2), (2, 2), (0, 0)))
    taps = [xp[:, i:i + H, j:j + W, :] for i in range(kh) for j in range(kw)]
    patches = jnp.concatenate(taps, axis=-1)                      # (N, H, W, K1)
    slabs = []
    for a in range(2):
        for b in range(2):
            s = patches[:, a::2, b::2, :]                         # (N, Ho, Wo, K1)
            slabs.append(jnp.transpose(s, (1, 2, 0, 3)).reshape(Ho * Wo * N, K1))
    p1 = jnp.concatenate(slabs, axis=0)                           # (4*Ho*Wo*N, K1)
    p1 = jnp.pad(p1, ((0, 0), (0, K1p - K1)))

    H1p = prep["w3"].shape[1]
    Hhp = prep["w4"].shape[1]

    in_arrays = (p1, prep["w1p"], prep["s1"], prep["b1"],
                 prep["w2s"], prep["s2"], prep["b2"],
                 prep["w3"], prep["s3"], prep["b3"],
                 prep["w4"], prep["b4"])

    flops = 2 * (p1.shape[0] * K1p * C              # conv1 matmul
                 + Ho * Wo * N * (kh * kw * C) * C  # conv2 single wide matmul
                 + N * (Ho // 2) * (Wo // 2) * C * H1p
                 + N * H1p * Hhp)
    bytes_accessed = sum(int(a.size) * 4 for a in in_arrays) + N * Hhp * 4

    kernel = functools.partial(_codegen_fused_kernel, n=N, h1=Ho)
    out = pl.pallas_call(
        kernel,
        out_shape=jax.ShapeDtypeStruct((N, Hhp), jnp.float32),
        grid=(1,),
        in_specs=[_full_spec(a.shape) for a in in_arrays],
        out_specs=_full_spec((N, Hhp)),
        scratch_shapes=[pltpu.VMEM(((Ho + 4) * N, (Wo + 4) * C), jnp.float32)],
        compiler_params=pltpu.CompilerParams(dimension_semantics=("arbitrary",)),
        cost_estimate=pl.CostEstimate(flops=flops,
                                      transcendentals=N * (H1p + Hhp),
                                      bytes_accessed=bytes_accessed),
    )(*in_arrays)
    return out[:, :hash_size]


# ------------------------- deterministic parameters ------------------------ #

def make_params(key, image_scale=16, hash_size=32):
    # BasicExt halves the image once, conv1/conv2 halve twice more.
    final_hw = image_scale // 8
    gen_output_dim = 80 * final_hw * final_hw

    keys = jax.random.split(key, 20)
    it = iter(keys)

    def nrm(shape, scl=0.1):
        return (scl * jax.random.normal(next(it), shape)).astype(jnp.float32)

    def uni(shape, lo, hi):
        return jax.random.uniform(next(it), shape, jnp.float32, lo, hi)

    return dict(
        conv1_w=nrm((5, 5, 16, 32)), conv1_b=nrm((32,)),
        bn1_g=uni((32,), 0.5, 1.5), bn1_b=nrm((32,)),
        bn1_m=nrm((32,)), bn1_v=uni((32,), 0.5, 1.5),

        conv2_w=nrm((5, 5, 32, 80)), conv2_b=nrm((80,)),
        bn2_g=uni((80,), 0.5, 1.5), bn2_b=nrm((80,)),
        bn2_m=nrm((80,)), bn2_v=uni((80,), 0.5, 1.5),

        l1_w=nrm((gen_output_dim, 200)), l1_b=nrm((200,)),
        bn3_g=uni((200,), 0.5, 1.5), bn3_b=nrm((200,)),
        bn3_m=nrm((200,)), bn3_v=uni((200,), 0.5, 1.5),

        l2_w=nrm((200, hash_size)), l2_b=nrm((hash_size,)),
    )


if __name__ == "__main__":
    key = jax.random.PRNGKey(0)
    k_param, k_x = jax.random.split(key)

    image_scale = 16           # params.image_scale
    hash_size = 32             # params.hash_size
    params = make_params(k_param, image_scale=image_scale, hash_size=hash_size)
    prep = prepare_params(params)   # one-time: BN fold + pad/permute weights

    # CodeGen's input is the output of BasicExt: (N, 16, image_scale/2, image_scale/2)
    x = jax.random.normal(k_x, (2, 16, image_scale // 2, image_scale // 2),
                          dtype=jnp.float32)

    out = codegen_forward(x, prep, hash_size=hash_size)
    out = jax.block_until_ready(out)
    assert out.shape == (2, hash_size), out.shape
    assert bool(jnp.all(jnp.isfinite(out)))
    print("KERNEL_OK")
</pallas_src>

<mosaic_0001>
module attributes {stable_mosaic.version = 11 : i64} {
  func.func @_codegen_fused_kernel(%arg0: i32, %arg1: memref<128x512xf32, #tpu.memory_space<vmem>>, %arg2: memref<512x128xf32, #tpu.memory_space<vmem>>, %arg3: memref<1x128xf32, #tpu.memory_space<vmem>>, %arg4: memref<1x128xf32, #tpu.memory_space<vmem>>, %arg5: memref<3200x128xf32, #tpu.memory_space<vmem>>, %arg6: memref<1x128xf32, #tpu.memory_space<vmem>>, %arg7: memref<1x128xf32, #tpu.memory_space<vmem>>, %arg8: memref<512x256xf32, #tpu.memory_space<vmem>>, %arg9: memref<1x256xf32, #tpu.memory_space<vmem>>, %arg10: memref<1x256xf32, #tpu.memory_space<vmem>>, %arg11: memref<256x128xf32, #tpu.memory_space<vmem>>, %arg12: memref<1x128xf32, #tpu.memory_space<vmem>>, %arg13: memref<2x128xf32, #tpu.memory_space<vmem>>, %arg14: memref<16x1024xf32, #tpu.memory_space<vmem>>) attributes {dimension_semantics = [#tpu.dimension_semantics<arbitrary>], iteration_bounds = array<i64: 1>, scalar_prefetch = 0 : i64, scratch_operands = 1 : i64, tpu.core_type = #tpu.core_type<tc>, window_params = [{pipeline_mode = #tpu.pipeline_mode<synchronous>, transform_indices = @transform_0, window_bounds = array<i64: 128, 512>}, {pipeline_mode = #tpu.pipeline_mode<synchronous>, transform_indices = @transform_1, window_bounds = array<i64: 512, 128>}, {pipeline_mode = #tpu.pipeline_mode<synchronous>, transform_indices = @transform_2, window_bounds = array<i64: 1, 128>}, {pipeline_mode = #tpu.pipeline_mode<synchronous>, transform_indices = @transform_3, window_bounds = array<i64: 1, 128>}, {pipeline_mode = #tpu.pipeline_mode<synchronous>, transform_indices = @transform_4, window_bounds = array<i64: 3200, 128>}, {pipeline_mode = #tpu.pipeline_mode<synchronous>, transform_indices = @transform_5, window_bounds = array<i64: 1, 128>}, {pipeline_mode = #tpu.pipeline_mode<synchronous>, transform_indices = @transform_6, window_bounds = array<i64: 1, 128>}, {pipeline_mode = #tpu.pipeline_mode<synchronous>, transform_indices = @transform_7, window_bounds = array<i64: 512, 256>}, {pipeline_mode = #tpu.pipeline_mode<synchronous>, transform_indices = @transform_8, window_bounds = array<i64: 1, 256>}, {pipeline_mode = #tpu.pipeline_mode<synchronous>, transform_indices = @transform_9, window_bounds = array<i64: 1, 256>}, {pipeline_mode = #tpu.pipeline_mode<synchronous>, transform_indices = @transform_10, window_bounds = array<i64: 256, 128>}, {pipeline_mode = #tpu.pipeline_mode<synchronous>, transform_indices = @transform_11, window_bounds = array<i64: 1, 128>}, {pipeline_mode = #tpu.pipeline_mode<synchronous>, transform_indices = @transform_12, window_bounds = array<i64: 2, 128>}]} {
    %c0 = arith.constant 0 : index
    %c0_0 = arith.constant 0 : index
    %0 = vector.load %arg3[%c0, %c0_0] : memref<1x128xf32, #tpu.memory_space<vmem>>, vector<1x128xf32>
    %c0_1 = arith.constant 0 : index
    %c0_2 = arith.constant 0 : index
    %1 = vector.load %arg4[%c0_1, %c0_2] : memref<1x128xf32, #tpu.memory_space<vmem>>, vector<1x128xf32>
    %c0_3 = arith.constant 0 : index
    %c0_4 = arith.constant 0 : index
    %2 = vector.load %arg1[%c0_3, %c0_4] : memref<128x512xf32, #tpu.memory_space<vmem>>, vector<128x512xf32>
    %c0_5 = arith.constant 0 : index
    %c0_6 = arith.constant 0 : index
    %3 = vector.load %arg2[%c0_5, %c0_6] : memref<512x128xf32, #tpu.memory_space<vmem>>, vector<512x128xf32>
    %cst = arith.constant dense<0.000000e+00> : vector<128x128xf32>
    %4 = tpu.matmul %2, %3, %cst {dimension_numbers = #tpu.dot_dimension_numbers<[1], [0], [0], [1], [0, 0, 1, 1], [], []>} : vector<128x512xf32>, vector<512x128xf32>, vector<128x128xf32> -> vector<128x128xf32>
    %5 = vector.broadcast %0 : vector<1x128xf32> to vector<128x128xf32>
    %6 = arith.mulf %4, %5 : vector<128x128xf32>
    %7 = vector.broadcast %1 : vector<1x128xf32> to vector<128x128xf32>
    %8 = arith.addf %6, %7 : vector<128x128xf32>
    %cst_7 = arith.constant 0.000000e+00 : f32
    %9 = vector.broadcast %cst_7 : f32 to vector<128x128xf32>
    %10 = arith.maximumf %8, %9 : vector<128x128xf32>
    %11 = vector.extract_strided_slice %10 {offsets = [0, 0], sizes = [32, 128], strides = [1, 1]} : vector<128x128xf32> to vector<32x128xf32>
    %12 = vector.extract_strided_slice %10 {offsets = [32, 0], sizes = [32, 128], strides = [1, 1]} : vector<128x128xf32> to vector<32x128xf32>
    %13 = arith.maximumf %11, %12 : vector<32x128xf32>
    %14 = vector.extract_strided_slice %10 {offsets = [64, 0], sizes = [32, 128], strides = [1, 1]} : vector<128x128xf32> to vector<32x128xf32>
    %15 = vector.extract_strided_slice %10 {offsets = [96, 0], sizes = [32, 128], strides = [1, 1]} : vector<128x128xf32> to vector<32x128xf32>
    %16 = arith.maximumf %14, %15 : vector<32x128xf32>
    %17 = arith.maximumf %13, %16 : vector<32x128xf32>
    %cst_8 = arith.constant 0.000000e+00 : f32
    %18 = vector.broadcast %cst_8 : f32 to vector<16x1024xf32>
    %c0_9 = arith.constant 0 : index
    %c0_10 = arith.constant 0 : index
    %19 = vector.load %arg14[%c0_9, %c0_10] : memref<16x1024xf32, #tpu.memory_space<vmem>>, vector<16x1024xf32>
    tpu.vector_store %arg14[%c0_9, %c0_10], %18 {strides = array<i32>} : memref<16x1024xf32, #tpu.memory_space<vmem>>, vector<16x1024xf32>,
    %20 = vector.extract_strided_slice %17 {offsets = [0, 0], sizes = [2, 128], strides = [1, 1]} : vector<32x128xf32> to vector<2x128xf32>
    %c4 = arith.constant 4 : index
    %c256 = arith.constant 256 : index
    %21 = vector.load %arg14[%c4, %c256] : memref<16x1024xf32, #tpu.memory_space<vmem>>, vector<2x128xf32>
    tpu.vector_store %arg14[%c4, %c256], %20 {strides = array<i32>} : memref<16x1024xf32, #tpu.memory_space<vmem>>, vector<2x128xf32>,
    %22 = vector.extract_strided_slice %17 {offsets = [2, 0], sizes = [2, 128], strides = [1, 1]} : vector<32x128xf32> to vector<2x128xf32>
    %c4_11 = arith.constant 4 : index
    %c384 = arith.constant 384 : index
    %23 = vector.load %arg14[%c4_11, %c384] : memref<16x1024xf32, #tpu.memory_space<vmem>>, vector<2x128xf32>
    tpu.vector_store %arg14[%c4_11, %c384], %22 {strides = array<i32>} : memref<16x1024xf32, #tpu.memory_space<vmem>>, vector<2x128xf32>,
    %24 = vector.extract_strided_slice %17 {offsets = [4, 0], sizes = [2, 128], strides = [1, 1]} : vector<32x128xf32> to vector<2x128xf32>
    %c4_12 = arith.constant 4 : index
    %c512 = arith.constant 512 : index
    %25 = vector.load %arg14[%c4_12, %c512] : memref<16x1024xf32, #tpu.memory_space<vmem>>, vector<2x128xf32>
    tpu.vector_store %arg14[%c4_12, %c512], %24 {strides = array<i32>} : memref<16x1024xf32, #tpu.memory_space<vmem>>, vector<2x128xf32>,
    %26 = vector.extract_strided_slice %17 {offsets = [6, 0], sizes = [2, 128], strides = [1, 1]} : vector<32x128xf32> to vector<2x128xf32>
    %c4_13 = arith.constant 4 : index
    %c640 = arith.constant 640 : index
    %27 = vector.load %arg14[%c4_13, %c640] : memref<16x1024xf32, #tpu.memory_space<vmem>>, vector<2x128xf32>
    tpu.vector_store %arg14[%c4_13, %c640], %26 {strides = array<i32>} : memref<16x1024xf32, #tpu.memory_space<vmem>>, vector<2x128xf32>,
    %28 = vector.extract_strided_slice %17 {offsets = [8, 0], sizes = [2, 128], strides = [1, 1]} : vector<32x128xf32> to vector<2x128xf32>
    %c6 = arith.constant 6 : index
    %c256_14 = arith.constant 256 : index
    %29 = vector.load %arg14[%c6, %c256_14] : memref<16x1024xf32, #tpu.memory_space<vmem>>, vector<2x128xf32>
    tpu.vector_store %arg14[%c6, %c256_14], %28 {strides = array<i32>} : memref<16x1024xf32, #tpu.memory_space<vmem>>, vector<2x128xf32>,
    %30 = vector.extract_strided_slice %17 {offsets = [10, 0], sizes = [2, 128], strides = [1, 1]} : vector<32x128xf32> to vector<2x128xf32>
    %c6_15 = arith.constant 6 : index
    %c384_16 = arith.constant 384 : index
    %31 = vector.load %arg14[%c6_15, %c384_16] : memref<16x1024xf32, #tpu.memory_space<vmem>>, vector<2x128xf32>
    tpu.vector_store %arg14[%c6_15, %c384_16], %30 {strides = array<i32>} : memref<16x1024xf32, #tpu.memory_space<vmem>>, vector<2x128xf32>,
    %32 = vector.extract_strided_slice %17 {offsets = [12, 0], sizes = [2, 128], strides = [1, 1]} : vector<32x128xf32> to vector<2x128xf32>
    %c6_17 = arith.constant 6 : index
    %c512_18 = arith.constant 512 : index
    %33 = vector.load %arg14[%c6_17, %c512_18] : memref<16x1024xf32, #tpu.memory_space<vmem>>, vector<2x128xf32>
    tpu.vector_store %arg14[%c6_17, %c512_18], %32 {strides = array<i32>} : memref<16x1024xf32, #tpu.memory_space<vmem>>, vector<2x128xf32>,
    %34 = vector.extract_strided_slice %17 {offsets = [14, 0], sizes = [2, 128], strides = [1, 1]} : vector<32x128xf32> to vector<2x128xf32>
    %c6_19 = arith.constant 6 : index
    %c640_20 = arith.constant 640 : index
    %35 = vector.load %arg14[%c6_19, %c640_20] : memref<16x1024xf32, #tpu.memory_space<vmem>>, vector<2x128xf32>
    tpu.vector_store %arg14[%c6_19, %c640_20], %34 {strides = array<i32>} : memref<16x1024xf32, #tpu.memory_space<vmem>>, vector<2x128xf32>,
    %36 = vector.extract_strided_slice %17 {offsets = [16, 0], sizes = [2, 128], strides = [1, 1]} : vector<32x128xf32> to vector<2x128xf32>
    %c8 = arith.constant 8 : index
    %c256_21 = arith.constant 256 : index
    %37 = vector.load %arg14[%c8, %c256_21] : memref<16x1024xf32, #tpu.memory_space<vmem>>, vector<2x128xf32>
    tpu.vector_store %arg14[%c8, %c256_21], %36 {strides = array<i32>} : memref<16x1024xf32, #tpu.memory_space<vmem>>, vector<2x128xf32>,
    %38 = vector.extract_strided_slice %17 {offsets = [18, 0], sizes = [2, 128], strides = [1, 1]} : vector<32x128xf32> to vector<2x128xf32>
    %c8_22 = arith.constant 8 : index
    %c384_23 = arith.constant 384 : index
    %39 = vector.load %arg14[%c8_22, %c384_23] : memref<16x1024xf32, #tpu.memory_space<vmem>>, vector<2x128xf32>
    tpu.vector_store %arg14[%c8_22, %c384_23], %38 {strides = array<i32>} : memref<16x1024xf32, #tpu.memory_space<vmem>>, vector<2x128xf32>,
    %40 = vector.extract_strided_slice %17 {offsets = [20, 0], sizes = [2, 128], strides = [1, 1]} : vector<32x128xf32> to vector<2x128xf32>
    %c8_24 = arith.constant 8 : index
    %c512_25 = arith.constant 512 : index
    %41 = vector.load %arg14[%c8_24, %c512_25] : memref<16x1024xf32, #tpu.memory_space<vmem>>, vector<2x128xf32>
    tpu.vector_store %arg14[%c8_24, %c512_25], %40 {strides = array<i32>} : memref<16x1024xf32, #tpu.memory_space<vmem>>, vector<2x128xf32>,
    %42 = vector.extract_strided_slice %17 {offsets = [22, 0], sizes = [2, 128], strides = [1, 1]} : vector<32x128xf32> to vector<2x128xf32>
    %c8_26 = arith.constant 8 : index
    %c640_27 = arith.constant 640 : index
    %43 = vector.load %arg14[%c8_26, %c640_27] : memref<16x1024xf32, #tpu.memory_space<vmem>>, vector<2x128xf32>
    tpu.vector_store %arg14[%c8_26, %c640_27], %42 {strides = array<i32>} : memref<16x1024xf32, #tpu.memory_space<vmem>>, vector<2x128xf32>,
    %44 = vector.extract_strided_slice %17 {offsets = [24, 0], sizes = [2, 128], strides = [1, 1]} : vector<32x128xf32> to vector<2x128xf32>
    %c10 = arith.constant 10 : index
    %c256_28 = arith.constant 256 : index
    %45 = vector.load %arg14[%c10, %c256_28] : memref<16x1024xf32, #tpu.memory_space<vmem>>, vector<2x128xf32>
    tpu.vector_store %arg14[%c10, %c256_28], %44 {strides = array<i32>} : memref<16x1024xf32, #tpu.memory_space<vmem>>, vector<2x128xf32>,
    %46 = vector.extract_strided_slice %17 {offsets = [26, 0], sizes = [2, 128], strides = [1, 1]} : vector<32x128xf32> to vector<2x128xf32>
    %c10_29 = arith.constant 10 : index
    %c384_30 = arith.constant 384 : index
    %47 = vector.load %arg14[%c10_29, %c384_30] : memref<16x1024xf32, #tpu.memory_space<vmem>>, vector<2x128xf32>
    tpu.vector_store %arg14[%c10_29, %c384_30], %46 {strides = array<i32>} : memref<16x1024xf32, #tpu.memory_space<vmem>>, vector<2x128xf32>,
    %48 = vector.extract_strided_slice %17 {offsets = [28, 0], sizes = [2, 128], strides = [1, 1]} : vector<32x128xf32> to vector<2x128xf32>
    %c10_31 = arith.constant 10 : index
    %c512_32 = arith.constant 512 : index
    %49 = vector.load %arg14[%c10_31, %c512_32] : memref<16x1024xf32, #tpu.memory_space<vmem>>, vector<2x128xf32>
    tpu.vector_store %arg14[%c10_31, %c512_32], %48 {strides = array<i32>} : memref<16x1024xf32, #tpu.memory_space<vmem>>, vector<2x128xf32>,
    %50 = vector.extract_strided_slice %17 {offsets = [30, 0], sizes = [2, 128], strides = [1, 1]} : vector<32x128xf32> to vector<2x128xf32>
    %c10_33 = arith.constant 10 : index
    %c640_34 = arith.constant 640 : index
    %51 = vector.load %arg14[%c10_33, %c640_34] : memref<16x1024xf32, #tpu.memory_space<vmem>>, vector<2x128xf32>
    tpu.vector_store %arg14[%c10_33, %c640_34], %50 {strides = array<i32>} : memref<16x1024xf32, #tpu.memory_space<vmem>>, vector<2x128xf32>,
    %c0_35 = arith.constant 0 : index
    %c0_36 = arith.constant 0 : index
    %52 = vector.load %arg6[%c0_35, %c0_36] : memref<1x128xf32, #tpu.memory_space<vmem>>, vector<1x128xf32>
    %c0_37 = arith.constant 0 : index
    %c0_38 = arith.constant 0 : index
    %53 = vector.load %arg7[%c0_37, %c0_38] : memref<1x128xf32, #tpu.memory_space<vmem>>, vector<1x128xf32>
    %c0_39 = arith.constant 0 : index
    %c0_40 = arith.constant 0 : index
    %54 = vector.load %arg14[%c0_39, %c0_40] : memref<16x1024xf32, #tpu.memory_space<vmem>>, vector<8x1024xf32>
    %55 = vector.extract_strided_slice %54 {offsets = [0, 0], sizes = [8, 128], strides = [1, 1]} : vector<8x1024xf32> to vector<8x128xf32>
    %56 = vector.extract_strided_slice %54 {offsets = [0, 128], sizes = [8, 128], strides = [1, 1]} : vector<8x1024xf32> to vector<8x128xf32>
    %57 = vector.extract_strided_slice %54 {offsets = [0, 256], sizes = [8, 128], strides = [1, 1]} : vector<8x1024xf32> to vector<8x128xf32>
    %58 = vector.extract_strided_slice %54 {offsets = [0, 384], sizes = [8, 128], strides = [1, 1]} : vector<8x1024xf32> to vector<8x128xf32>
    %59 = tpu.concatenate %55, %56, %57, %58 in 0 : vector<8x128xf32>, vector<8x128xf32>, vector<8x128xf32>, vector<8x128xf32> -> vector<32x128xf32>
    %60 = vector.extract_strided_slice %54 {offsets = [0, 128], sizes = [8, 128], strides = [1, 1]} : vector<8x1024xf32> to vector<8x128xf32>
    %61 = vector.extract_strided_slice %54 {offsets = [0, 256], sizes = [8, 128], strides = [1, 1]} : vector<8x1024xf32> to vector<8x128xf32>
    %62 = vector.extract_strided_slice %54 {offsets = [0, 384], sizes = [8, 128], strides = [1, 1]} : vector<8x1024xf32> to vector<8x128xf32>
    %63 = vector.extract_strided_slice %54 {offsets = [0, 512], sizes = [8, 128], strides = [1, 1]} : vector<8x1024xf32> to vector<8x128xf32>
    %64 = tpu.concatenate %60, %61, %62, %63 in 0 : vector<8x128xf32>, vector<8x128xf32>, vector<8x128xf32>, vector<8x128xf32> -> vector<32x128xf32>
    %65 = vector.extract_strided_slice %54 {offsets = [0, 256], sizes = [8, 128], strides = [1, 1]} : vector<8x1024xf32> to vector<8x128xf32>
    %66 = vector.extract_strided_slice %54 {offsets = [0, 384], sizes = [8, 128], strides = [1, 1]} : vector<8x1024xf32> to vector<8x128xf32>
    %67 = vector.extract_strided_slice %54 {offsets = [0, 512], sizes = [8, 128], strides = [1, 1]} : vector<8x1024xf32> to vector<8x128xf32>
    %68 = vector.extract_strided_slice %54 {offsets = [0, 640], sizes = [8, 128], strides = [1, 1]} : vector<8x1024xf32> to vector<8x128xf32>
    %69 = tpu.concatenate %65, %66, %67, %68 in 0 : vector<8x128xf32>, vector<8x128xf32>, vector<8x128xf32>, vector<8x128xf32> -> vector<32x128xf32>
    %70 = vector.extract_strided_slice %54 {offsets = [0, 384], sizes = [8, 128], strides = [1, 1]} : vector<8x1024xf32> to vector<8x128xf32>
    %71 = vector.extract_strided_slice %54 {offsets = [0, 512], sizes = [8, 128], strides = [1, 1]} : vector<8x1024xf32> to vector<8x128xf32>
    %72 = vector.extract_strided_slice %54 {offsets = [0, 640], sizes = [8, 128], strides = [1, 1]} : vector<8x1024xf32> to vector<8x128xf32>
    %73 = vector.extract_strided_slice %54 {offsets = [0, 768], sizes = [8, 128], strides = [1, 1]} : vector<8x1024xf32> to vector<8x128xf32>
    %74 = tpu.concatenate %70, %71, %72, %73 in 0 : vector<8x128xf32>, vector<8x128xf32>, vector<8x128xf32>, vector<8x128xf32> -> vector<32x128xf32>
    %75 = vector.extract_strided_slice %54 {offsets = [0, 512], sizes = [8, 128], strides = [1, 1]} : vector<8x1024xf32> to vector<8x128xf32>
    %76 = vector.extract_strided_slice %54 {offsets = [0, 640], sizes = [8, 128], strides = [1, 1]} : vector<8x1024xf32> to vector<8x128xf32>
    %77 = vector.extract_strided_slice %54 {offsets = [0, 768], sizes = [8, 128], strides = [1, 1]} : vector<8x1024xf32> to vector<8x128xf32>
    %78 = vector.extract_strided_slice %54 {offsets = [0, 896], sizes = [8, 128], strides = [1, 1]} : vector<8x1024xf32> to vector<8x128xf32>
    %79 = tpu.concatenate %75, %76, %77, %78 in 0 : vector<8x128xf32>, vector<8x128xf32>, vector<8x128xf32>, vector<8x128xf32> -> vector<32x128xf32>
    %c2 = arith.constant 2 : index
    %c0_41 = arith.constant 0 : index
    %80 = vector.load %arg14[%c2, %c0_41] : memref<16x1024xf32, #tpu.memory_space<vmem>>, vector<8x1024xf32>
    %81 = vector.extract_strided_slice %80 {offsets = [0, 0], sizes = [8, 128], strides = [1, 1]} : vector<8x1024xf32> to vector<8x128xf32>
    %82 = vector.extract_strided_slice %80 {offsets = [0, 128], sizes = [8, 128], strides = [1, 1]} : vector<8x1024xf32> to vector<8x128xf32>
    %83 = vector.extract_strided_slice %80 {offsets = [0, 256], sizes = [8, 128], strides = [1, 1]} : vector<8x1024xf32> to vector<8x128xf32>
    %84 = vector.extract_strided_slice %80 {offsets = [0, 384], sizes = [8, 128], strides = [1, 1]} : vector<8x1024xf32> to vector<8x128xf32>
    %85 = tpu.concatenate %81, %82, %83, %84 in 0 : vector<8x128xf32>, vector<8x128xf32>, vector<8x128xf32>, vector<8x128xf32> -> vector<32x128xf32>
    %86 = vector.extract_strided_slice %80 {offsets = [0, 128], sizes = [8, 128], strides = [1, 1]} : vector<8x1024xf32> to vector<8x128xf32>
    %87 = vector.extract_strided_slice %80 {offsets = [0, 256], sizes = [8, 128], strides = [1, 1]} : vector<8x1024xf32> to vector<8x128xf32>
    %88 = vector.extract_strided_slice %80 {offsets = [0, 384], sizes = [8, 128], strides = [1, 1]} : vector<8x1024xf32> to vector<8x128xf32>
    %89 = vector.extract_strided_slice %80 {offsets = [0, 512], sizes = [8, 128], strides = [1, 1]} : vector<8x1024xf32> to vector<8x128xf32>
    %90 = tpu.concatenate %86, %87, %88, %89 in 0 : vector<8x128xf32>, vector<8x128xf32>, vector<8x128xf32>, vector<8x128xf32> -> vector<32x128xf32>
    %91 = vector.extract_strided_slice %80 {offsets = [0, 256], sizes = [8, 128], strides = [1, 1]} : vector<8x1024xf32> to vector<8x128xf32>
    %92 = vector.extract_strided_slice %80 {offsets = [0, 384], sizes = [8, 128], strides = [1, 1]} : vector<8x1024xf32> to vector<8x128xf32>
    %93 = vector.extract_strided_slice %80 {offsets = [0, 512], sizes = [8, 128], strides = [1, 1]} : vector<8x1024xf32> to vector<8x128xf32>
    %94 = vector.extract_strided_slice %80 {offsets = [0, 640], sizes = [8, 128], strides = [1, 1]} : vector<8x1024xf32> to vector<8x128xf32>
    %95 = tpu.concatenate %91, %92, %93, %94 in 0 : vector<8x128xf32>, vector<8x128xf32>, vector<8x128xf32>, vector<8x128xf32> -> vector<32x128xf32>
    %96 = vector.extract_strided_slice %80 {offsets = [0, 384], sizes = [8, 128], strides = [1, 1]} : vector<8x1024xf32> to vector<8x128xf32>
    %97 = vector.extract_strided_slice %80 {offsets = [0, 512], sizes = [8, 128], strides = [1, 1]} : vector<8x1024xf32> to vector<8x128xf32>
    %98 = vector.extract_strided_slice %80 {offsets = [0, 640], sizes = [8, 128], strides = [1, 1]} : vector<8x1024xf32> to vector<8x128xf32>
    %99 = vector.extract_strided_slice %80 {offsets = [0, 768], sizes = [8, 128], strides = [1, 1]} : vector<8x1024xf32> to vector<8x128xf32>
    %100 = tpu.concatenate %96, %97, %98, %99 in 0 : vector<8x128xf32>, vector<8x128xf32>, vector<8x128xf32>, vector<8x128xf32> -> vector<32x128xf32>
    %101 = vector.extract_strided_slice %80 {offsets = [0, 512], sizes = [8, 128], strides = [1, 1]} : vector<8x1024xf32> to vector<8x128xf32>
    %102 = vector.extract_strided_slice %80 {offsets = [0, 640], sizes = [8, 128], strides = [1, 1]} : vector<8x1024xf32> to vector<8x128xf32>
    %103 = vector.extract_strided_slice %80 {offsets = [0, 768], sizes = [8, 128], strides = [1, 1]} : vector<8x1024xf32> to vector<8x128xf32>
    %104 = vector.extract_strided_slice %80 {offsets = [0, 896], sizes = [8, 128], strides = [1, 1]} : vector<8x1024xf32> to vector<8x128xf32>
    %105 = tpu.concatenate %101, %102, %103, %104 in 0 : vector<8x128xf32>, vector<8x128xf32>, vector<8x128xf32>, vector<8x128xf32> -> vector<32x128xf32>
    %c4_42 = arith.constant 4 : index
    %c0_43 = arith.constant 0 : index
    %106 = vector.load %arg14[%c4_42, %c0_43] : memref<16x1024xf32, #tpu.memory_space<vmem>>, vector<8x1024xf32>
    %107 = vector.extract_strided_slice %106 {offsets = [0, 0], sizes = [8, 128], strides = [1, 1]} : vector<8x1024xf32> to vector<8x128xf32>
    %108 = vector.extract_strided_slice %106 {offsets = [0, 128], sizes = [8, 128], strides = [1, 1]} : vector<8x1024xf32> to vector<8x128xf32>
    %109 = vector.extract_strided_slice %106 {offsets = [0, 256], sizes = [8, 128], strides = [1, 1]} : vector<8x1024xf32> to vector<8x128xf32>
    %110 = vector.extract_strided_slice %106 {offsets = [0, 384], sizes = [8, 128], strides = [1, 1]} : vector<8x1024xf32> to vector<8x128xf32>
    %111 = tpu.concatenate %107, %108, %109, %110 in 0 : vector<8x128xf32>, vector<8x128xf32>, vector<8x128xf32>, vector<8x128xf32> -> vector<32x128xf32>
    %112 = vector.extract_strided_slice %106 {offsets = [0, 128], sizes = [8, 128], strides = [1, 1]} : vector<8x1024xf32> to vector<8x128xf32>
    %113 = vector.extract_strided_slice %106 {offsets = [0, 256], sizes = [8, 128], strides = [1, 1]} : vector<8x1024xf32> to vector<8x128xf32>
    %114 = vector.extract_strided_slice %106 {offsets = [0, 384], sizes = [8, 128], strides = [1, 1]} : vector<8x1024xf32> to vector<8x128xf32>
    %115 = vector.extract_strided_slice %106 {offsets = [0, 512], sizes = [8, 128], strides = [1, 1]} : vector<8x1024xf32> to vector<8x128xf32>
    %116 = tpu.concatenate %112, %113, %114, %115 in 0 : vector<8x128xf32>, vector<8x128xf32>, vector<8x128xf32>, vector<8x128xf32> -> vector<32x128xf32>
    %117 = vector.extract_strided_slice %106 {offsets = [0, 256], sizes = [8, 128], strides = [1, 1]} : vector<8x1024xf32> to vector<8x128xf32>
    %118 = vector.extract_strided_slice %106 {offsets = [0, 384], sizes = [8, 128], strides = [1, 1]} : vector<8x1024xf32> to vector<8x128xf32>
    %119 = vector.extract_strided_slice %106 {offsets = [0, 512], sizes = [8, 128], strides = [1, 1]} : vector<8x1024xf32> to vector<8x128xf32>
    %120 = vector.extract_strided_slice %106 {offsets = [0, 640], sizes = [8, 128], strides = [1, 1]} : vector<8x1024xf32> to vector<8x128xf32>
    %121 = tpu.concatenate %117, %118, %119, %120 in 0 : vector<8x128xf32>, vector<8x128xf32>, vector<8x128xf32>, vector<8x128xf32> -> vector<32x128xf32>
    %122 = vector.extract_strided_slice %106 {offsets = [0, 384], sizes = [8, 128], strides = [1, 1]} : vector<8x1024xf32> to vector<8x128xf32>
    %123 = vector.extract_strided_slice %106 {offsets = [0, 512], sizes = [8, 128], strides = [1, 1]} : vector<8x1024xf32> to vector<8x128xf32>
    %124 = vector.extract_strided_slice %106 {offsets = [0, 640], sizes = [8, 128], strides = [1, 1]} : vector<8x1024xf32> to vector<8x128xf32>
    %125 = vector.extract_strided_slice %106 {offsets = [0, 768], sizes = [8, 128], strides = [1, 1]} : vector<8x1024xf32> to vector<8x128xf32>
    %126 = tpu.concatenate %122, %123, %124, %125 in 0 : vector<8x128xf32>, vector<8x128xf32>, vector<8x128xf32>, vector<8x128xf32> -> vector<32x128xf32>
    %127 = vector.extract_strided_slice %106 {offsets = [0, 512], sizes = [8, 128], strides = [1, 1]} : vector<8x1024xf32> to vector<8x128xf32>
    %128 = vector.extract_strided_slice %106 {offsets = [0, 640], sizes = [8, 128], strides = [1, 1]} : vector<8x1024xf32> to vector<8x128xf32>
    %129 = vector.extract_strided_slice %106 {offsets = [0, 768], sizes = [8, 128], strides = [1, 1]} : vector<8x1024xf32> to vector<8x128xf32>
    %130 = vector.extract_strided_slice %106 {offsets = [0, 896], sizes = [8, 128], strides = [1, 1]} : vector<8x1024xf32> to vector<8x128xf32>
    %131 = tpu.concatenate %127, %128, %129, %130 in 0 : vector<8x128xf32>, vector<8x128xf32>, vector<8x128xf32>, vector<8x128xf32> -> vector<32x128xf32>
    %c6_44 = arith.constant 6 : index
    %c0_45 = arith.constant 0 : index
    %132 = vector.load %arg14[%c6_44, %c0_45] : memref<16x1024xf32, #tpu.memory_space<vmem>>, vector<8x1024xf32>
    %133 = vector.extract_strided_slice %132 {offsets = [0, 0], sizes = [8, 128], strides = [1, 1]} : vector<8x1024xf32> to vector<8x128xf32>
    %134 = vector.extract_strided_slice %132 {offsets = [0, 128], sizes = [8, 128], strides = [1, 1]} : vector<8x1024xf32> to vector<8x128xf32>
    %135 = vector.extract_strided_slice %132 {offsets = [0, 256], sizes = [8, 128], strides = [1, 1]} : vector<8x1024xf32> to vector<8x128xf32>
    %136 = vector.extract_strided_slice %132 {offsets = [0, 384], sizes = [8, 128], strides = [1, 1]} : vector<8x1024xf32> to vector<8x128xf32>
    %137 = tpu.concatenate %133, %134, %135, %136 in 0 : vector<8x128xf32>, vector<8x128xf32>, vector<8x128xf32>, vector<8x128xf32> -> vector<32x128xf32>
    %138 = vector.extract_strided_slice %132 {offsets = [0, 128], sizes = [8, 128], strides = [1, 1]} : vector<8x1024xf32> to vector<8x128xf32>
    %139 = vector.extract_strided_slice %132 {offsets = [0, 256], sizes = [8, 128], strides = [1, 1]} : vector<8x1024xf32> to vector<8x128xf32>
    %140 = vector.extract_strided_slice %132 {offsets = [0, 384], sizes = [8, 128], strides = [1, 1]} : vector<8x1024xf32> to vector<8x128xf32>
    %141 = vector.extract_strided_slice %132 {offsets = [0, 512], sizes = [8, 128], strides = [1, 1]} : vector<8x1024xf32> to vector<8x128xf32>
    %142 = tpu.concatenate %138, %139, %140, %141 in 0 : vector<8x128xf32>, vector<8x128xf32>, vector<8x128xf32>, vector<8x128xf32> -> vector<32x128xf32>
    %143 = vector.extract_strided_slice %132 {offsets = [0, 256], sizes = [8, 128], strides = [1, 1]} : vector<8x1024xf32> to vector<8x128xf32>
    %144 = vector.extract_strided_slice %132 {offsets = [0, 384], sizes = [8, 128], strides = [1, 1]} : vector<8x1024xf32> to vector<8x128xf32>
    %145 = vector.extract_strided_slice %132 {offsets = [0, 512], sizes = [8, 128], strides = [1, 1]} : vector<8x1024xf32> to vector<8x128xf32>
    %146 = vector.extract_strided_slice %132 {offsets = [0, 640], sizes = [8, 128], strides = [1, 1]} : vector<8x1024xf32> to vector<8x128xf32>
    %147 = tpu.concatenate %143, %144, %145, %146 in 0 : vector<8x128xf32>, vector<8x128xf32>, vector<8x128xf32>, vector<8x128xf32> -> vector<32x128xf32>
    %148 = vector.extract_strided_slice %132 {offsets = [0, 384], sizes = [8, 128], strides = [1, 1]} : vector<8x1024xf32> to vector<8x128xf32>
    %149 = vector.extract_strided_slice %132 {offsets = [0, 512], sizes = [8, 128], strides = [1, 1]} : vector<8x1024xf32> to vector<8x128xf32>
    %150 = vector.extract_strided_slice %132 {offsets = [0, 640], sizes = [8, 128], strides = [1, 1]} : vector<8x1024xf32> to vector<8x128xf32>
    %151 = vector.extract_strided_slice %132 {offsets = [0, 768], sizes = [8, 128], strides = [1, 1]} : vector<8x1024xf32> to vector<8x128xf32>
    %152 = tpu.concatenate %148, %149, %150, %151 in 0 : vector<8x128xf32>, vector<8x128xf32>, vector<8x128xf32>, vector<8x128xf32> -> vector<32x128xf32>
    %153 = vector.extract_strided_slice %132 {offsets = [0, 512], sizes = [8, 128], strides = [1, 1]} : vector<8x1024xf32> to vector<8x128xf32>
    %154 = vector.extract_strided_slice %132 {offsets = [0, 640], sizes = [8, 128], strides = [1, 1]} : vector<8x1024xf32> to vector<8x128xf32>
    %155 = vector.extract_strided_slice %132 {offsets = [0, 768], sizes = [8, 128], strides = [1, 1]} : vector<8x1024xf32> to vector<8x128xf32>
    %156 = vector.extract_strided_slice %132 {offsets = [0, 896], sizes = [8, 128], strides = [1, 1]} : vector<8x1024xf32> to vector<8x128xf32>
    %157 = tpu.concatenate %153, %154, %155, %156 in 0 : vector<8x128xf32>, vector<8x128xf32>, vector<8x128xf32>, vector<8x128xf32> -> vector<32x128xf32>
    %c8_46 = arith.constant 8 : index
    %c0_47 = arith.constant 0 : index
    %158 = vector.load %arg14[%c8_46, %c0_47] : memref<16x1024xf32, #tpu.memory_space<vmem>>, vector<8x1024xf32>
    %159 = vector.extract_strided_slice %158 {offsets = [0, 0], sizes = [8, 128], strides = [1, 1]} : vector<8x1024xf32> to vector<8x128xf32>
    %160 = vector.extract_strided_slice %158 {offsets = [0, 128], sizes = [8, 128], strides = [1, 1]} : vector<8x1024xf32> to vector<8x128xf32>
    %161 = vector.extract_strided_slice %158 {offsets = [0, 256], sizes = [8, 128], strides = [1, 1]} : vector<8x1024xf32> to vector<8x128xf32>
    %162 = vector.extract_strided_slice %158 {offsets = [0, 384], sizes = [8, 128], strides = [1, 1]} : vector<8x1024xf32> to vector<8x128xf32>
    %163 = tpu.concatenate %159, %160, %161, %162 in 0 : vector<8x128xf32>, vector<8x128xf32>, vector<8x128xf32>, vector<8x128xf32> -> vector<32x128xf32>
    %164 = vector.extract_strided_slice %158 {offsets = [0, 128], sizes = [8, 128], strides = [1, 1]} : vector<8x1024xf32> to vector<8x128xf32>
    %165 = vector.extract_strided_slice %158 {offsets = [0, 256], sizes = [8, 128], strides = [1, 1]} : vector<8x1024xf32> to vector<8x128xf32>
    %166 = vector.extract_strided_slice %158 {offsets = [0, 384], sizes = [8, 128], strides = [1, 1]} : vector<8x1024xf32> to vector<8x128xf32>
    %167 = vector.extract_strided_slice %158 {offsets = [0, 512], sizes = [8, 128], strides = [1, 1]} : vector<8x1024xf32> to vector<8x128xf32>
    %168 = tpu.concatenate %164, %165, %166, %167 in 0 : vector<8x128xf32>, vector<8x128xf32>, vector<8x128xf32>, vector<8x128xf32> -> vector<32x128xf32>
    %169 = vector.extract_strided_slice %158 {offsets = [0, 256], sizes = [8, 128], strides = [1, 1]} : vector<8x1024xf32> to vector<8x128xf32>
    %170 = vector.extract_strided_slice %158 {offsets = [0, 384], sizes = [8, 128], strides = [1, 1]} : vector<8x1024xf32> to vector<8x128xf32>
    %171 = vector.extract_strided_slice %158 {offsets = [0, 512], sizes = [8, 128], strides = [1, 1]} : vector<8x1024xf32> to vector<8x128xf32>
    %172 = vector.extract_strided_slice %158 {offsets = [0, 640], sizes = [8, 128], strides = [1, 1]} : vector<8x1024xf32> to vector<8x128xf32>
    %173 = tpu.concatenate %169, %170, %171, %172 in 0 : vector<8x128xf32>, vector<8x128xf32>, vector<8x128xf32>, vector<8x128xf32> -> vector<32x128xf32>
    %174 = vector.extract_strided_slice %158 {offsets = [0, 384], sizes = [8, 128], strides = [1, 1]} : vector<8x1024xf32> to vector<8x128xf32>
    %175 = vector.extract_strided_slice %158 {offsets = [0, 512], sizes = [8, 128], strides = [1, 1]} : vector<8x1024xf32> to vector<8x128xf32>
    %176 = vector.extract_strided_slice %158 {offsets = [0, 640], sizes = [8, 128], strides = [1, 1]} : vector<8x1024xf32> to vector<8x128xf32>
    %177 = vector.extract_strided_slice %158 {offsets = [0, 768], sizes = [8, 128], strides = [1, 1]} : vector<8x1024xf32> to vector<8x128xf32>
    %178 = tpu.concatenate %174, %175, %176, %177 in 0 : vector<8x128xf32>, vector<8x128xf32>, vector<8x128xf32>, vector<8x128xf32> -> vector<32x128xf32>
    %179 = vector.extract_strided_slice %158 {offsets = [0, 512], sizes = [8, 128], strides = [1, 1]} : vector<8x1024xf32> to vector<8x128xf32>
    %180 = vector.extract_strided_slice %158 {offsets = [0, 640], sizes = [8, 128], strides = [1, 1]} : vector<8x1024xf32> to vector<8x128xf32>
    %181 = vector.extract_strided_slice %158 {offsets = [0, 768], sizes = [8, 128], strides = [1, 1]} : vector<8x1024xf32> to vector<8x128xf32>
    %182 = vector.extract_strided_slice %158 {offsets = [0, 896], sizes = [8, 128], strides = [1, 1]} : vector<8x1024xf32> to vector<8x128xf32>
    %183 = tpu.concatenate %179, %180, %181, %182 in 0 : vector<8x128xf32>, vector<8x128xf32>, vector<8x128xf32>, vector<8x128xf32> -> vector<32x128xf32>
    %184 = tpu.concatenate %59, %64, %69, %74, %79, %85, %90, %95, %100, %105, %111, %116, %121, %126, %131, %137 in 1 : vector<32x128xf32>, vector<32x128xf32>, vector<32x128xf32>, vector<32x128xf32>, vector<32x128xf32>, vector<32x128xf32>, vector<32x128xf32>, vector<32x128xf32>, vector<32x128xf32>, vector<32x128xf32>, vector<32x128xf32>, vector<32x128xf32>, vector<32x128xf32>, vector<32x128xf32>, vector<32x128xf32>, vector<32x128xf32> -> vector<32x2048xf32>
    %185 = tpu.concatenate %142, %147, %152, %157, %163, %168, %173, %178, %183 in 1 : vector<32x128xf32>, vector<32x128xf32>, vector<32x128xf32>, vector<32x128xf32>, vector<32x128xf32>, vector<32x128xf32>, vector<32x128xf32>, vector<32x128xf32>, vector<32x128xf32> -> vector<32x1152xf32>
    %186 = tpu.concatenate %184, %185 in 1 : vector<32x2048xf32>, vector<32x1152xf32> -> vector<32x3200xf32>
    %c0_48 = arith.constant 0 : index
    %c0_49 = arith.constant 0 : index
    %187 = vector.load %arg5[%c0_48, %c0_49] : memref<3200x128xf32, #tpu.memory_space<vmem>>, vector<3200x128xf32>
    %cst_50 = arith.constant dense<0.000000e+00> : vector<32x128xf32>
    %188 = tpu.matmul %186, %187, %cst_50 {dimension_numbers = #tpu.dot_dimension_numbers<[1], [0], [0], [1], [0, 0, 1, 1], [], []>} : vector<32x3200xf32>, vector<3200x128xf32>, vector<32x128xf32> -> vector<32x128xf32>
    %189 = vector.broadcast %52 : vector<1x128xf32> to vector<32x128xf32>
    %190 = arith.mulf %188, %189 : vector<32x128xf32>
    %191 = vector.broadcast %53 : vector<1x128xf32> to vector<32x128xf32>
    %192 = arith.addf %190, %191 : vector<32x128xf32>
    %cst_51 = arith.constant 0.000000e+00 : f32
    %193 = vector.broadcast %cst_51 : f32 to vector<32x128xf32>
    %194 = arith.maximumf %192, %193 : vector<32x128xf32>
    %c0_52 = arith.constant 0 : index
    %c0_53 = arith.constant 0 : index
    %195 = vector.load %arg9[%c0_52, %c0_53] : memref<1x256xf32, #tpu.memory_space<vmem>>, vector<1x256xf32>
    %c0_54 = arith.constant 0 : index
    %c0_55 = arith.constant 0 : index
    %196 = vector.load %arg10[%c0_54, %c0_55] : memref<1x256xf32, #tpu.memory_space<vmem>>, vector<1x256xf32>
    %197 = vector.extract_strided_slice %194 {offsets = [0, 0], sizes = [2, 128], strides = [1, 1]} : vector<32x128xf32> to vector<2x128xf32>
    %198 = vector.extract_strided_slice %194 {offsets = [2, 0], sizes = [2, 128], strides = [1, 1]} : vector<32x128xf32> to vector<2x128xf32>
    %199 = vector.extract_strided_slice %194 {offsets = [8, 0], sizes = [2, 128], strides = [1, 1]} : vector<32x128xf32> to vector<2x128xf32>
    %200 = vector.extract_strided_slice %194 {offsets = [10, 0], sizes = [2, 128], strides = [1, 1]} : vector<32x128xf32> to vector<2x128xf32>
    %201 = arith.maximumf %197, %198 : vector<2x128xf32>
    %202 = arith.maximumf %199, %200 : vector<2x128xf32>
    %203 = arith.maximumf %201, %202 : vector<2x128xf32>
    %204 = vector.extract_strided_slice %194 {offsets = [16, 0], sizes = [2, 128], strides = [1, 1]} : vector<32x128xf32> to vector<2x128xf32>
    %205 = vector.extract_strided_slice %194 {offsets = [18, 0], sizes = [2, 128], strides = [1, 1]} : vector<32x128xf32> to vector<2x128xf32>
    %206 = vector.extract_strided_slice %194 {offsets = [24, 0], sizes = [2, 128], strides = [1, 1]} : vector<32x128xf32> to vector<2x128xf32>
    %207 = vector.extract_strided_slice %194 {offsets = [26, 0], sizes = [2, 128], strides = [1, 1]} : vector<32x128xf32> to vector<2x128xf32>
    %208 = arith.maximumf %204, %205 : vector<2x128xf32>
    %209 = arith.maximumf %206, %207 : vector<2x128xf32>
    %210 = arith.maximumf %208, %209 : vector<2x128xf32>
    %211 = vector.extract_strided_slice %194 {offsets = [4, 0], sizes = [2, 128], strides = [1, 1]} : vector<32x128xf32> to vector<2x128xf32>
    %212 = vector.extract_strided_slice %194 {offsets = [6, 0], sizes = [2, 128], strides = [1, 1]} : vector<32x128xf32> to vector<2x128xf32>
    %213 = vector.extract_strided_slice %194 {offsets = [12, 0], sizes = [2, 128], strides = [1, 1]} : vector<32x128xf32> to vector<2x128xf32>
    %214 = vector.extract_strided_slice %194 {offsets = [14, 0], sizes = [2, 128], strides = [1, 1]} : vector<32x128xf32> to vector<2x128xf32>
    %215 = arith.maximumf %211, %212 : vector<2x128xf32>
    %216 = arith.maximumf %213, %214 : vector<2x128xf32>
    %217 = arith.maximumf %215, %216 : vector<2x128xf32>
    %218 = vector.extract_strided_slice %194 {offsets = [20, 0], sizes = [2, 128], strides = [1, 1]} : vector<32x128xf32> to vector<2x128xf32>
    %219 = vector.extract_strided_slice %194 {offsets = [22, 0], sizes = [2, 128], strides = [1, 1]} : vector<32x128xf32> to vector<2x128xf32>
    %220 = vector.extract_strided_slice %194 {offsets = [28, 0], sizes = [2, 128], strides = [1, 1]} : vector<32x128xf32> to vector<2x128xf32>
    %221 = vector.extract_strided_slice %194 {offsets = [30, 0], sizes = [2, 128], strides = [1, 1]} : vector<32x128xf32> to vector<2x128xf32>
    %222 = arith.maximumf %218, %219 : vector<2x128xf32>
    %223 = arith.maximumf %220, %221 : vector<2x128xf32>
    %224 = arith.maximumf %222, %223 : vector<2x128xf32>
    %225 = tpu.concatenate %203, %210, %217, %224 in 1 : vector<2x128xf32>, vector<2x128xf32>, vector<2x128xf32>, vector<2x128xf32> -> vector<2x512xf32>
    %c0_56 = arith.constant 0 : index
    %c0_57 = arith.constant 0 : index
    %226 = vector.load %arg8[%c0_56, %c0_57] : memref<512x256xf32, #tpu.memory_space<vmem>>, vector<512x256xf32>
    %cst_58 = arith.constant dense<0.000000e+00> : vector<2x256xf32>
    %227 = tpu.matmul %225, %226, %cst_58 {dimension_numbers = #tpu.dot_dimension_numbers<[1], [0], [0], [1], [0, 0, 1, 1], [], []>} : vector<2x512xf32>, vector<512x256xf32>, vector<2x256xf32> -> vector<2x256xf32>
    %228 = vector.broadcast %195 : vector<1x256xf32> to vector<2x256xf32>
    %229 = arith.mulf %227, %228 : vector<2x256xf32>
    %230 = vector.broadcast %196 : vector<1x256xf32> to vector<2x256xf32>
    %231 = arith.addf %229, %230 : vector<2x256xf32>
    %232 = arith.negf %231 : vector<2x256xf32>
    %233 = math.exp %232 : vector<2x256xf32>
    %cst_59 = arith.constant 1.000000e+00 : f32
    %234 = vector.broadcast %cst_59 : f32 to vector<2x256xf32>
    %235 = arith.addf %234, %233 : vector<2x256xf32>
    %236 = arith.divf %234, %235 : vector<2x256xf32>
    %c0_60 = arith.constant 0 : index
    %c0_61 = arith.constant 0 : index
    %237 = vector.load %arg11[%c0_60, %c0_61] : memref<256x128xf32, #tpu.memory_space<vmem>>, vector<256x128xf32>
    %cst_62 = arith.constant dense<0.000000e+00> : vector<2x128xf32>
    %238 = tpu.matmul %236, %237, %cst_62 {dimension_numbers = #tpu.dot_dimension_numbers<[1], [0], [0], [1], [0, 0, 1, 1], [], []>} : vector<2x256xf32>, vector<256x128xf32>, vector<2x128xf32> -> vector<2x128xf32>
    %c0_63 = arith.constant 0 : index
    %c0_64 = arith.constant 0 : index
    %239 = vector.load %arg12[%c0_63, %c0_64] : memref<1x128xf32, #tpu.memory_space<vmem>>, vector<1x128xf32>
    %240 = vector.broadcast %239 : vector<1x128xf32> to vector<2x128xf32>
    %241 = arith.addf %238, %240 : vector<2x128xf32>
    %242 = math.tanh %241 : vector<2x128xf32>
    %c0_65 = arith.constant 0 : index
    %c0_66 = arith.constant 0 : index
    %243 = vector.load %arg13[%c0_65, %c0_66] : memref<2x128xf32, #tpu.memory_space<vmem>>, vector<2x128xf32>
    tpu.vector_store %arg13[%c0_65, %c0_66], %242 {strides = array<i32>} : memref<2x128xf32, #tpu.memory_space<vmem>>, vector<2x128xf32>,
    return
  }
  func.func @transform_0(%arg0: i32) -> (i32, i32) {
    %c0_i32 = arith.constant 0 : i32
    %c0_i32_0 = arith.constant 0 : i32
    %c0_i32_1 = arith.constant 0 : i32
    return %c0_i32, %c0_i32_0 : i32, i32
  }
  func.func @transform_1(%arg0: i32) -> (i32, i32) {
    %c0_i32 = arith.constant 0 : i32
    %c0_i32_0 = arith.constant 0 : i32
    %c0_i32_1 = arith.constant 0 : i32
    return %c0_i32, %c0_i32_0 : i32, i32
  }
  func.func @transform_2(%arg0: i32) -> (i32, i32) {
    %c0_i32 = arith.constant 0 : i32
    %c0_i32_0 = arith.constant 0 : i32
    %c0_i32_1 = arith.constant 0 : i32
    return %c0_i32, %c0_i32_0 : i32, i32
  }
  func.func @transform_3(%arg0: i32) -> (i32, i32) {
    %c0_i32 = arith.constant 0 : i32
    %c0_i32_0 = arith.constant 0 : i32
    %c0_i32_1 = arith.constant 0 : i32
    return %c0_i32, %c0_i32_0 : i32, i32
  }
  func.func @transform_4(%arg0: i32) -> (i32, i32) {
    %c0_i32 = arith.constant 0 : i32
    %c0_i32_0 = arith.constant 0 : i32
    %c0_i32_1 = arith.constant 0 : i32
    return %c0_i32, %c0_i32_0 : i32, i32
  }
  func.func @transform_5(%arg0: i32) -> (i32, i32) {
    %c0_i32 = arith.constant 0 : i32
    %c0_i32_0 = arith.constant 0 : i32
    %c0_i32_1 = arith.constant 0 : i32
    return %c0_i32, %c0_i32_0 : i32, i32
  }
  func.func @transform_6(%arg0: i32) -> (i32, i32) {
    %c0_i32 = arith.constant 0 : i32
    %c0_i32_0 = arith.constant 0 : i32
    %c0_i32_1 = arith.constant 0 : i32
    return %c0_i32, %c0_i32_0 : i32, i32
  }
  func.func @transform_7(%arg0: i32) -> (i32, i32) {
    %c0_i32 = arith.constant 0 : i32
    %c0_i32_0 = arith.constant 0 : i32
    %c0_i32_1 = arith.constant 0 : i32
    return %c0_i32, %c0_i32_0 : i32, i32
  }
  func.func @transform_8(%arg0: i32) -> (i32, i32) {
    %c0_i32 = arith.constant 0 : i32
    %c0_i32_0 = arith.constant 0 : i32
    %c0_i32_1 = arith.constant 0 : i32
    return %c0_i32, %c0_i32_0 : i32, i32
  }
  func.func @transform_9(%arg0: i32) -> (i32, i32) {
    %c0_i32 = arith.constant 0 : i32
    %c0_i32_0 = arith.constant 0 : i32
    %c0_i32_1 = arith.constant 0 : i32
    return %c0_i32, %c0_i32_0 : i32, i32
  }
  func.func @transform_10(%arg0: i32) -> (i32, i32) {
    %c0_i32 = arith.constant 0 : i32
    %c0_i32_0 = arith.constant 0 : i32
    %c0_i32_1 = arith.constant 0 : i32
    return %c0_i32, %c0_i32_0 : i32, i32
  }
  func.func @transform_11(%arg0: i32) -> (i32, i32) {
    %c0_i32 = arith.constant 0 : i32
    %c0_i32_0 = arith.constant 0 : i32
    %c0_i32_1 = arith.constant 0 : i32
    return %c0_i32, %c0_i32_0 : i32, i32
  }
  func.func @transform_12(%arg0: i32) -> (i32, i32) {
    %c0_i32 = arith.constant 0 : i32
    %c0_i32_0 = arith.constant 0 : i32
    %c0_i32_1 = arith.constant 0 : i32
    return %c0_i32, %c0_i32_0 : i32, i32
  }
}

</mosaic_0001>

<llo_original>
// kernel: codegen_forward.1
$region0: #{codegen_forward.1}
  #allocation0 [shape = 'u32[]', space=smem, size = 0x4, offset = 0x4, fixed_abs, tag = 'smem constant byte address 0x4 - core index']
  #allocation1 [shape = 'u32[144,128]{1,0:T(1,128)}', space=vmem, size = 0x12000, scoped, tag = 'internal scratch']
  #allocation2 [shape = 'f32[16,1024]{1,0:T(8,128)}', space=vmem, size = 0x10000, scoped, tag = 'scratch operand']
  %s0 = inlined_call_operand.vmem [shape: f32[128,512], index: 0, kind: input, shape index: {}]
  %s1 = inlined_call_operand.vmem [shape: f32[512,128], index: 1, kind: input, shape index: {}]
  %s2 = inlined_call_operand.vmem [shape: f32[1,128], index: 2, kind: input, shape index: {}]
  %s3 = inlined_call_operand.vmem [shape: f32[1,128], index: 3, kind: input, shape index: {}]
  %s4 = inlined_call_operand.vmem [shape: f32[3200,128], index: 4, kind: input, shape index: {}]
  %s5 = inlined_call_operand.vmem [shape: f32[1,128], index: 5, kind: input, shape index: {}]
  %s6 = inlined_call_operand.vmem [shape: f32[1,128], index: 6, kind: input, shape index: {}]
  %s7 = inlined_call_operand.vmem [shape: f32[512,256], index: 7, kind: input, shape index: {}]
  %s8 = inlined_call_operand.vmem [shape: f32[1,256], index: 8, kind: input, shape index: {}]
  %s9 = inlined_call_operand.vmem [shape: f32[1,256], index: 9, kind: input, shape index: {}]
  %s10 = inlined_call_operand.vmem [shape: f32[256,128], index: 10, kind: input, shape index: {}]
  %s11 = inlined_call_operand.vmem [shape: f32[1,128], index: 11, kind: input, shape index: {}]
  %s12 = inlined_call_operand.hbm [shape: f32[2,128], index: 12, kind: output, shape index: {}]
  %s13 = sld [smem:[#allocation0]]
  $region58: #{codegen_forward.1} parent=0
    _
  %s15 = ssub.s32 1, %s13
  %s16 = scalar_select 0, %s15, %s13
  $region1: #{codegen_forward.1} parent=0
    #allocation3 [shape = 'u8[1024]{0}', space=vmem, size = 0x400, scoped, tag = 'output window, operand 0, single buffered']
    #allocation4 [shape = 's32[1]{0}', space=sflag, size = 0x4, scoped, tag = 'scoped memory for codegen_forward.1']
    %17 = vsyncpa [#allocation4], 0
    // Predicated region
    $region2: #{codegen_forward.1} parent=1 // pred_check
      _
    $region3: #{codegen_forward.1} parent=1 // pred_check_branch
      %19 = sbr.rel (0) target = $region5
    $region4: #{codegen_forward.1} parent=1 // pred_region
      _
    $region5: #{codegen_forward.1} parent=1 // pred_fallthru
      _
    // Predicated region
    $region6: #{codegen_forward.1} parent=1 // pred_check
      _
    $region7: #{codegen_forward.1} parent=1 // pred_check_branch
      %21 = sbr.rel (0) target = $region9
    $region8: #{codegen_forward.1} parent=1 // pred_region
      _
    $region9: #{codegen_forward.1} parent=1 // pred_fallthru
      _
    // Predicated region
    $region10: #{codegen_forward.1} parent=1 // pred_check
      _
    $region11: #{codegen_forward.1} parent=1 // pred_check_branch
      %23 = sbr.rel (0) target = $region13
    $region12: #{codegen_forward.1} parent=1 // pred_region
      _
    $region13: #{codegen_forward.1} parent=1 // pred_fallthru
      _
    // Predicated region
    $region14: #{codegen_forward.1} parent=1 // pred_check
      _
    $region15: #{codegen_forward.1} parent=1 // pred_check_branch
      %25 = sbr.rel (0) target = $region17
    $region16: #{codegen_forward.1} parent=1 // pred_region
      _
    $region17: #{codegen_forward.1} parent=1 // pred_fallthru
      _
    // Predicated region
    $region18: #{codegen_forward.1} parent=1 // pred_check
      _
    $region19: #{codegen_forward.1} parent=1 // pred_check_branch
      %27 = sbr.rel (0) target = $region21
    $region20: #{codegen_forward.1} parent=1 // pred_region
      _
    $region21: #{codegen_forward.1} parent=1 // pred_fallthru
      _
    // Predicated region
    $region22: #{codegen_forward.1} parent=1 // pred_check
      _
    $region23: #{codegen_forward.1} parent=1 // pred_check_branch
      %29 = sbr.rel (0) target = $region25
    $region24: #{codegen_forward.1} parent=1 // pred_region
      _
    $region25: #{codegen_forward.1} parent=1 // pred_fallthru
      _
    // Predicated region
    $region26: #{codegen_forward.1} parent=1 // pred_check
      _
    $region27: #{codegen_forward.1} parent=1 // pred_check_branch
      %31 = sbr.rel (0) target = $region29
    $region28: #{codegen_forward.1} parent=1 // pred_region
      _
    $region29: #{codegen_forward.1} parent=1 // pred_fallthru
      _
    // Predicated region
    $region30: #{codegen_forward.1} parent=1 // pred_check
      _
    $region31: #{codegen_forward.1} parent=1 // pred_check_branch
      %33 = sbr.rel (0) target = $region33
    $region32: #{codegen_forward.1} parent=1 // pred_region
      _
    $region33: #{codegen_forward.1} parent=1 // pred_fallthru
      _
    // Predicated region
    $region34: #{codegen_forward.1} parent=1 // pred_check
      _
    $region35: #{codegen_forward.1} parent=1 // pred_check_branch
      %35 = sbr.rel (0) target = $region37
    $region36: #{codegen_forward.1} parent=1 // pred_region
      _
    $region37: #{codegen_forward.1} parent=1 // pred_fallthru
      _
    // Predicated region
    $region38: #{codegen_forward.1} parent=1 // pred_check
      _
    $region39: #{codegen_forward.1} parent=1 // pred_check_branch
      %37 = sbr.rel (0) target = $region41
    $region40: #{codegen_forward.1} parent=1 // pred_region
      _
    $region41: #{codegen_forward.1} parent=1 // pred_fallthru
      _
    // Predicated region
    $region42: #{codegen_forward.1} parent=1 // pred_check
      _
    $region43: #{codegen_forward.1} parent=1 // pred_check_branch
      %39 = sbr.rel (0) target = $region45
    $region44: #{codegen_forward.1} parent=1 // pred_region
      _
    $region45: #{codegen_forward.1} parent=1 // pred_fallthru
      _
    // Predicated region
    $region46: #{codegen_forward.1} parent=1 // pred_check
      _
    $region47: #{codegen_forward.1} parent=1 // pred_check_branch
      %41 = sbr.rel (0) target = $region49
    $region48: #{codegen_forward.1} parent=1 // pred_region
      _
    $region49: #{codegen_forward.1} parent=1 // pred_fallthru
      _
    %v42 = vld [vmem:[%s2] sm:$0x1]
    %v43 = vld [vmem:[%s3] sm:$0x1]
    %v44 = vld [vmem:[%s0] sm:$0xff]
    %v45 = vld [vmem:[%s0 + $0x8] sm:$0xff]
    %v46 = vld [vmem:[%s0 + $0x10] sm:$0xff]
    %v47 = vld [vmem:[%s0 + $0x18] sm:$0xff]
    %v48 = vld [vmem:[%s0 + $0x20] sm:$0xff]
    %v49 = vld [vmem:[%s0 + $0x28] sm:$0xff]
    %v50 = vld [vmem:[%s0 + $0x30] sm:$0xff]
    %v51 = vld [vmem:[%s0 + $0x38] sm:$0xff]
    %v52 = vld [vmem:[%s0 + $0x40] sm:$0xff]
    %v53 = vld [vmem:[%s0 + $0x48] sm:$0xff]
    %v54 = vld [vmem:[%s0 + $0x50] sm:$0xff]
    %v55 = vld [vmem:[%s0 + $0x58] sm:$0xff]
    %v56 = vld [vmem:[%s0 + $0x60] sm:$0xff]
    %v57 = vld [vmem:[%s0 + $0x68] sm:$0xff]
    %v58 = vld [vmem:[%s0 + $0x70] sm:$0xff]
    %v59 = vld [vmem:[%s0 + $0x78] sm:$0xff]
    %v60 = vld [vmem:[%s0 + $0x80] sm:$0xff]
    %v61 = vld [vmem:[%s0 + $0x88] sm:$0xff]
    %v62 = vld [vmem:[%s0 + $0x90] sm:$0xff]
    %v63 = vld [vmem:[%s0 + $0x98] sm:$0xff]
    %v64 = vld [vmem:[%s0 + $0xa0] sm:$0xff]
    %v65 = vld [vmem:[%s0 + $0xa8] sm:$0xff]
    %v66 = vld [vmem:[%s0 + $0xb0] sm:$0xff]
    %v67 = vld [vmem:[%s0 + $0xb8] sm:$0xff]
    %v68 = vld [vmem:[%s0 + $0xc0] sm:$0xff]
    %v69 = vld [vmem:[%s0 + $0xc8] sm:$0xff]
    %v70 = vld [vmem:[%s0 + $0xd0] sm:$0xff]
    %v71 = vld [vmem:[%s0 + $0xd8] sm:$0xff]
    %v72 = vld [vmem:[%s0 + $0xe0] sm:$0xff]
    %v73 = vld [vmem:[%s0 + $0xe8] sm:$0xff]
    %v74 = vld [vmem:[%s0 + $0xf0] sm:$0xff]
    %v75 = vld [vmem:[%s0 + $0xf8] sm:$0xff]
    %v76 = vld [vmem:[%s0 + $0x100] sm:$0xff]
    %v77 = vld [vmem:[%s0 + $0x108] sm:$0xff]
    %v78 = vld [vmem:[%s0 + $0x110] sm:$0xff]
    %v79 = vld [vmem:[%s0 + $0x118] sm:$0xff]
    %v80 = vld [vmem:[%s0 + $0x120] sm:$0xff]
    %v81 = vld [vmem:[%s0 + $0x128] sm:$0xff]
    %v82 = vld [vmem:[%s0 + $0x130] sm:$0xff]
    %v83 = vld [vmem:[%s0 + $0x138] sm:$0xff]
    %v84 = vld [vmem:[%s0 + $0x140] sm:$0xff]
    %v85 = vld [vmem:[%s0 + $0x148] sm:$0xff]
    %v86 = vld [vmem:[%s0 + $0x150] sm:$0xff]
    %v87 = vld [vmem:[%s0 + $0x158] sm:$0xff]
    %v88 = vld [vmem:[%s0 + $0x160] sm:$0xff]
    %v89 = vld [vmem:[%s0 + $0x168] sm:$0xff]
    %v90 = vld [vmem:[%s0 + $0x170] sm:$0xff]
    %v91 = vld [vmem:[%s0 + $0x178] sm:$0xff]
    %v92 = vld [vmem:[%s0 + $0x180] sm:$0xff]
    %v93 = vld [vmem:[%s0 + $0x188] sm:$0xff]
    %v94 = vld [vmem:[%s0 + $0x190] sm:$0xff]
    %v95 = vld [vmem:[%s0 + $0x198] sm:$0xff]
    %v96 = vld [vmem:[%s0 + $0x1a0] sm:$0xff]
    %v97 = vld [vmem:[%s0 + $0x1a8] sm:$0xff]
    %v98 = vld [vmem:[%s0 + $0x1b0] sm:$0xff]
    %v99 = vld [vmem:[%s0 + $0x1b8] sm:$0xff]
    %v100 = vld [vmem:[%s0 + $0x1c0] sm:$0xff]
    %v101 = vld [vmem:[%s0 + $0x1c8] sm:$0xff]
    %v102 = vld [vmem:[%s0 + $0x1d0] sm:$0xff]
    %v103 = vld [vmem:[%s0 + $0x1d8] sm:$0xff]
    %v104 = vld [vmem:[%s0 + $0x1e0] sm:$0xff]
    %v105 = vld [vmem:[%s0 + $0x1e8] sm:$0xff]
    %v106 = vld [vmem:[%s0 + $0x1f0] sm:$0xff]
    %v107 = vld [vmem:[%s0 + $0x1f8] sm:$0xff]
    %v108 = vld [vmem:[%s1] sm:$0xff]
    %v109 = vld [vmem:[%s1 + $0x8] sm:$0xff]
    %v110 = vld [vmem:[%s1 + $0x10] sm:$0xff]
    %v111 = vld [vmem:[%s1 + $0x18] sm:$0xff]
    %v112 = vld [vmem:[%s1 + $0x20] sm:$0xff]
    %v113 = vld [vmem:[%s1 + $0x28] sm:$0xff]
    %v114 = vld [vmem:[%s1 + $0x30] sm:$0xff]
    %v115 = vld [vmem:[%s1 + $0x38] sm:$0xff]
    %v116 = vld [vmem:[%s1 + $0x40] sm:$0xff]
    %v117 = vld [vmem:[%s1 + $0x48] sm:$0xff]
    %v118 = vld [vmem:[%s1 + $0x50] sm:$0xff]
    %v119 = vld [vmem:[%s1 + $0x58] sm:$0xff]
    %v120 = vld [vmem:[%s1 + $0x60] sm:$0xff]
    %v121 = vld [vmem:[%s1 + $0x68] sm:$0xff]
    %v122 = vld [vmem:[%s1 + $0x70] sm:$0xff]
    %v123 = vld [vmem:[%s1 + $0x78] sm:$0xff]
    %v124 = vld [vmem:[%s1 + $0x80] sm:$0xff]
    %v125 = vld [vmem:[%s1 + $0x88] sm:$0xff]
    %v126 = vld [vmem:[%s1 + $0x90] sm:$0xff]
    %v127 = vld [vmem:[%s1 + $0x98] sm:$0xff]
    %v128 = vld [vmem:[%s1 + $0xa0] sm:$0xff]
    %v129 = vld [vmem:[%s1 + $0xa8] sm:$0xff]
    %v130 = vld [vmem:[%s1 + $0xb0] sm:$0xff]
    %v131 = vld [vmem:[%s1 + $0xb8] sm:$0xff]
    %v132 = vld [vmem:[%s1 + $0xc0] sm:$0xff]
    %v133 = vld [vmem:[%s1 + $0xc8] sm:$0xff]
    %v134 = vld [vmem:[%s1 + $0xd0] sm:$0xff]
    %v135 = vld [vmem:[%s1 + $0xd8] sm:$0xff]
    %v136 = vld [vmem:[%s1 + $0xe0] sm:$0xff]
    %v137 = vld [vmem:[%s1 + $0xe8] sm:$0xff]
    %v138 = vld [vmem:[%s1 + $0xf0] sm:$0xff]
    %v139 = vld [vmem:[%s1 + $0xf8] sm:$0xff]
    %v140 = vld [vmem:[%s1 + $0x100] sm:$0xff]
    %v141 = vld [vmem:[%s1 + $0x108] sm:$0xff]
    %v142 = vld [vmem:[%s1 + $0x110] sm:$0xff]
    %v143 = vld [vmem:[%s1 + $0x118] sm:$0xff]
    %v144 = vld [vmem:[%s1 + $0x120] sm:$0xff]
    %v145 = vld [vmem:[%s1 + $0x128] sm:$0xff]
    %v146 = vld [vmem:[%s1 + $0x130] sm:$0xff]
    %v147 = vld [vmem:[%s1 + $0x138] sm:$0xff]
    %v148 = vld [vmem:[%s1 + $0x140] sm:$0xff]
    %v149 = vld [vmem:[%s1 + $0x148] sm:$0xff]
    %v150 = vld [vmem:[%s1 + $0x150] sm:$0xff]
    %v151 = vld [vmem:[%s1 + $0x158] sm:$0xff]
    %v152 = vld [vmem:[%s1 + $0x160] sm:$0xff]
    %v153 = vld [vmem:[%s1 + $0x168] sm:$0xff]
    %v154 = vld [vmem:[%s1 + $0x170] sm:$0xff]
    %v155 = vld [vmem:[%s1 + $0x178] sm:$0xff]
    %v156 = vld [vmem:[%s1 + $0x180] sm:$0xff]
    %v157 = vld [vmem:[%s1 + $0x188] sm:$0xff]
    %v158 = vld [vmem:[%s1 + $0x190] sm:$0xff]
    %v159 = vld [vmem:[%s1 + $0x198] sm:$0xff]
    %v160 = vld [vmem:[%s1 + $0x1a0] sm:$0xff]
    %v161 = vld [vmem:[%s1 + $0x1a8] sm:$0xff]
    %v162 = vld [vmem:[%s1 + $0x1b0] sm:$0xff]
    %v163 = vld [vmem:[%s1 + $0x1b8] sm:$0xff]
    %v164 = vld [vmem:[%s1 + $0x1c0] sm:$0xff]
    %v165 = vld [vmem:[%s1 + $0x1c8] sm:$0xff]
    %v166 = vld [vmem:[%s1 + $0x1d0] sm:$0xff]
    %v167 = vld [vmem:[%s1 + $0x1d8] sm:$0xff]
    %v168 = vld [vmem:[%s1 + $0x1e0] sm:$0xff]
    %v169 = vld [vmem:[%s1 + $0x1e8] sm:$0xff]
    %v170 = vld [vmem:[%s1 + $0x1f0] sm:$0xff]
    %v171 = vld [vmem:[%s1 + $0x1f8] sm:$0xff]
    %172 = vmatprep.subr.mxu0 0.0
    %173 = vmatpush1.msra.mxu0 %v108
    %174 = vmatprep.subr.mxu0 0.0
    %175 = vmatpush1.msra.mxu0 %v109
    %176 = vmatprep.subr.mxu0 0.0
    %177 = vmatpush1.msra.mxu0 %v110
    %178 = vmatprep.subr.mxu0 0.0
    %179 = vmatpush1.msra.mxu0 %v111
    %180 = vmatprep.subr.mxu0 0.0
    %181 = vmatpush1.msra.mxu0 %v112
    %182 = vmatprep.subr.mxu0 0.0
    %183 = vmatpush1.msra.mxu0 %v113
    %184 = vmatprep.subr.mxu0 0.0
    %185 = vmatpush1.msra.mxu0 %v114
    %186 = vmatprep.subr.mxu0 0.0
    %187 = vmatpush1.msra.mxu0 %v115
    %188 = vmatprep.subr.mxu0 0.0
    %189 = vmatpush1.msra.mxu0 %v116
    %190 = vmatprep.subr.mxu0 0.0
    %191 = vmatpush1.msra.mxu0 %v117
    %192 = vmatprep.subr.mxu0 0.0
    %193 = vmatpush1.msra.mxu0 %v118
    %194 = vmatprep.subr.mxu0 0.0
    %195 = vmatpush1.msra.mxu0 %v119
    %196 = vmatprep.subr.mxu0 0.0
    %197 = vmatpush1.msra.mxu0 %v120
    %198 = vmatprep.subr.mxu0 0.0
    %199 = vmatpush1.msra.mxu0 %v121
    %200 = vmatprep.subr.mxu0 0.0
    %201 = vmatpush1.msra.mxu0 %v122
    %202 = vmatprep.subr.mxu0 0.0
    %203 = vmatpush1.msra.mxu0 %v123
    %204 = vmatprep.subr.mxu0 0.0
    %205 = vmatpush1.msra.mxu0 %v124
    %206 = vmatprep.subr.mxu0 0.0
    %207 = vmatpush1.msra.mxu0 %v125
    %208 = vmatprep.subr.mxu0 0.0
    %209 = vmatpush1.msra.mxu0 %v126
    %210 = vmatprep.subr.mxu0 0.0
    %211 = vmatpush1.msra.mxu0 %v127
    %212 = vmatprep.subr.mxu0 0.0
    %213 = vmatpush1.msra.mxu0 %v128
    %214 = vmatprep.subr.mxu0 0.0
    %215 = vmatpush1.msra.mxu0 %v129
    %216 = vmatprep.subr.mxu0 0.0
    %217 = vmatpush1.msra.mxu0 %v130
    %218 = vmatprep.subr.mxu0 0.0
    %219 = vmatpush1.msra.mxu0 %v131
    %220 = vmatprep.subr.mxu0 0.0
    %221 = vmatpush1.msra.mxu0 %v132
    %222 = vmatprep.subr.mxu0 0.0
    %223 = vmatpush1.msra.mxu0 %v133
    %224 = vmatprep.subr.mxu0 0.0
    %225 = vmatpush1.msra.mxu0 %v134
    %226 = vmatprep.subr.mxu0 0.0
    %227 = vmatpush1.msra.mxu0 %v135
    %228 = vmatprep.subr.mxu0 0.0
    %229 = vmatpush1.msra.mxu0 %v136
    %230 = vmatprep.subr.mxu0 0.0
    %231 = vmatpush1.msra.mxu0 %v137
    %232 = vmatprep.subr.mxu0 0.0
    %233 = vmatpush1.msra.mxu0 %v138
    %234 = vmatprep.subr.mxu0 0.0
    %235 = vmatpush1.msra.mxu0 %v139
    %236 = vmatprep.mubr.f32.mxu0 %v45
    %237 = vmatmul.mubr.f32.gmra.mrb[0].mxu0 %v44
    %v238 = vpop.f32.mrb[0].mxu0
    %v239 = vadd.f32 0.0, %v238
    %v240 = vpop.f32.mrb[0].mxu0
    %241 = vmatprep.mubr.f32.mxu0 %v49
    %242 = vmatmul.mubr.f32.gmra.mrb[0].mxu0 %v48
    %v243 = vpop.f32.mrb[0].mxu0
    %v244 = vadd.f32 0.0, %v243
    %v245 = vpop.f32.mrb[0].mxu0
    %246 = vmatprep.mubr.f32.mxu0 %v53
    %247 = vmatmul.mubr.f32.gmra.mrb[0].mxu0 %v52
    %v248 = vpop.f32.mrb[0].mxu0
    %v249 = vadd.f32 0.0, %v248
    %v250 = vpop.f32.mrb[0].mxu0
    %251 = vmatprep.mubr.f32.mxu0 %v57
    %252 = vmatmul.mubr.f32.gmra.mrb[0].mxu0 %v56
    %v253 = vpop.f32.mrb[0].mxu0
    %v254 = vadd.f32 0.0, %v253
    %v255 = vpop.f32.mrb[0].mxu0
    %256 = vmatprep.mubr.f32.mxu0 %v61
    %257 = vmatmul.mubr.f32.gmra.mrb[0].mxu0 %v60
    %v258 = vpop.f32.mrb[0].mxu0
    %v259 = vadd.f32 0.0, %v258
    %v260 = vpop.f32.mrb[0].mxu0
    %261 = vmatprep.mubr.f32.mxu0 %v65
    %262 = vmatmul.mubr.f32.gmra.mrb[0].mxu0 %v64
    %v263 = vpop.f32.mrb[0].mxu0
    %v264 = vadd.f32 0.0, %v263
    %v265 = vpop.f32.mrb[0].mxu0
    %266 = vmatprep.mubr.f32.mxu0 %v69
    %267 = vmatmul.mubr.f32.gmra.mrb[0].mxu0 %v68
    %v268 = vpop.f32.mrb[0].mxu0
    %v269 = vadd.f32 0.0, %v268
    %v270 = vpop.f32.mrb[0].mxu0
    %271 = vmatprep.mubr.f32.mxu0 %v73
    %272 = vmatmul.mubr.f32.gmra.mrb[0].mxu0 %v72
    %v273 = vpop.f32.mrb[0].mxu0
    %v274 = vadd.f32 0.0, %v273
    %v275 = vpop.f32.mrb[0].mxu0
    %276 = vmatprep.mubr.f32.mxu0 %v77
    %277 = vmatmul.mubr.f32.gmra.mrb[0].mxu0 %v76
    %v278 = vpop.f32.mrb[0].mxu0
    %v279 = vadd.f32 0.0, %v278
    %v280 = vpop.f32.mrb[0].mxu0
    %281 = vmatprep.mubr.f32.mxu0 %v81
    %282 = vmatmul.mubr.f32.gmra.mrb[0].mxu0 %v80
    %v283 = vpop.f32.mrb[0].mxu0
    %v284 = vadd.f32 0.0, %v283
    %v285 = vpop.f32.mrb[0].mxu0
    %286 = vmatprep.mubr.f32.mxu0 %v85
    %287 = vmatmul.mubr.f32.gmra.mrb[0].mxu0 %v84
    %v288 = vpop.f32.mrb[0].mxu0
    %v289 = vadd.f32 0.0, %v288
    %v290 = vpop.f32.mrb[0].mxu0
    %291 = vmatprep.mubr.f32.mxu0 %v89
    %292 = vmatmul.mubr.f32.gmra.mrb[0].mxu0 %v88
    %v293 = vpop.f32.mrb[0].mxu0
    %v294 = vadd.f32 0.0, %v293
    %v295 = vpop.f32.mrb[0].mxu0
    %296 = vmatprep.mubr.f32.mxu0 %v93
    %297 = vmatmul.mubr.f32.gmra.mrb[0].mxu0 %v92
    %v298 = vpop.f32.mrb[0].mxu0
    %v299 = vadd.f32 0.0, %v298
    %v300 = vpop.f32.mrb[0].mxu0
    %301 = vmatprep.mubr.f32.mxu0 %v97
    %302 = vmatmul.mubr.f32.gmra.mrb[0].mxu0 %v96
    %v303 = vpop.f32.mrb[0].mxu0
    %v304 = vadd.f32 0.0, %v303
    %v305 = vpop.f32.mrb[0].mxu0
    %306 = vmatprep.mubr.f32.mxu0 %v101
    %307 = vmatmul.mubr.f32.gmra.mrb[0].mxu0 %v100
    %v308 = vpop.f32.mrb[0].mxu0
    %v309 = vadd.f32 0.0, %v308
    %v310 = vpop.f32.mrb[0].mxu0
    %311 = vmatprep.mubr.f32.mxu0 %v105
    %312 = vmatmul.mubr.f32.gmra.mrb[0].mxu0 %v104
    %v313 = vpop.f32.mrb[0].mxu0
    %v314 = vadd.f32 0.0, %v313
    %v315 = vpop.f32.mrb[0].mxu0
    %316 = vdwg.mxu0
    %317 = vmatprep.subr.mxu0 0.0
    %318 = vmatpush1.msra.mxu0 %v140
    %319 = vmatprep.subr.mxu0 0.0
    %320 = vmatpush1.msra.mxu0 %v141
    %321 = vmatprep.subr.mxu0 0.0
    %322 = vmatpush1.msra.mxu0 %v142
    %323 = vmatprep.subr.mxu0 0.0
    %324 = vmatpush1.msra.mxu0 %v143
    %325 = vmatprep.subr.mxu0 0.0
    %326 = vmatpush1.msra.mxu0 %v144
    %327 = vmatprep.subr.mxu0 0.0
    %328 = vmatpush1.msra.mxu0 %v145
    %329 = vmatprep.subr.mxu0 0.0
    %330 = vmatpush1.msra.mxu0 %v146
    %331 = vmatprep.subr.mxu0 0.0
    %332 = vmatpush1.msra.mxu0 %v147
    %333 = vmatprep.subr.mxu0 0.0
    %334 = vmatpush1.msra.mxu0 %v148
    %335 = vmatprep.subr.mxu0 0.0
    %336 = vmatpush1.msra.mxu0 %v149
    %337 = vmatprep.subr.mxu0 0.0
    %338 = vmatpush1.msra.mxu0 %v150
    %339 = vmatprep.subr.mxu0 0.0
    %340 = vmatpush1.msra.mxu0 %v151
    %341 = vmatprep.subr.mxu0 0.0
    %342 = vmatpush1.msra.mxu0 %v152
    %343 = vmatprep.subr.mxu0 0.0
    %344 = vmatpush1.msra.mxu0 %v153
    %345 = vmatprep.subr.mxu0 0.0
    %346 = vmatpush1.msra.mxu0 %v154
    %347 = vmatprep.subr.mxu0 0.0
    %348 = vmatpush1.msra.mxu0 %v155
    %349 = vmatprep.subr.mxu0 0.0
    %350 = vmatpush1.msra.mxu0 %v156
    %351 = vmatprep.subr.mxu0 0.0
    %352 = vmatpush1.msra.mxu0 %v157
    %353 = vmatprep.subr.mxu0 0.0
    %354 = vmatpush1.msra.mxu0 %v158
    %355 = vmatprep.subr.mxu0 0.0
    %356 = vmatpush1.msra.mxu0 %v159
    %357 = vmatprep.subr.mxu0 0.0
    %358 = vmatpush1.msra.mxu0 %v160
    %359 = vmatprep.subr.mxu0 0.0
    %360 = vmatpush1.msra.mxu0 %v161
    %361 = vmatprep.subr.mxu0 0.0
    %362 = vmatpush1.msra.mxu0 %v162
    %363 = vmatprep.subr.mxu0 0.0
    %364 = vmatpush1.msra.mxu0 %v163
    %365 = vmatprep.subr.mxu0 0.0
    %366 = vmatpush1.msra.mxu0 %v164
    %367 = vmatprep.subr.mxu0 0.0
    %368 = vmatpush1.msra.mxu0 %v165
    %369 = vmatprep.subr.mxu0 0.0
    %370 = vmatpush1.msra.mxu0 %v166
    %371 = vmatprep.subr.mxu0 0.0
    %372 = vmatpush1.msra.mxu0 %v167
    %373 = vmatprep.subr.mxu0 0.0
    %374 = vmatpush1.msra.mxu0 %v168
    %375 = vmatprep.subr.mxu0 0.0
    %376 = vmatpush1.msra.mxu0 %v169
    %377 = vmatprep.subr.mxu0 0.0
    %378 = vmatpush1.msra.mxu0 %v170
    %379 = vmatprep.subr.mxu0 0.0
    %380 = vmatpush1.msra.mxu0 %v171
    %381 = vmatprep.mubr.f32.mxu0 %v47
    %382 = vmatmul.mubr.f32.gmra.mrb[0].mxu0 %v46
    %v383 = vpop.f32.mrb[0].mxu0
    %v384 = vadd.f32 %v239, %v383
    %v385 = vpop.f32.mrb[0].mxu0
    %386 = vmatprep.mubr.f32.mxu0 %v51
    %387 = vmatmul.mubr.f32.gmra.mrb[0].mxu0 %v50
    %v388 = vpop.f32.mrb[0].mxu0
    %v389 = vadd.f32 %v244, %v388
    %v390 = vpop.f32.mrb[0].mxu0
    %391 = vmatprep.mubr.f32.mxu0 %v55
    %392 = vmatmul.mubr.f32.gmra.mrb[0].mxu0 %v54
    %v393 = vpop.f32.mrb[0].mxu0
    %v394 = vadd.f32 %v249, %v393
    %v395 = vpop.f32.mrb[0].mxu0
    %396 = vmatprep.mubr.f32.mxu0 %v59
    %397 = vmatmul.mubr.f32.gmra.mrb[0].mxu0 %v58
    %v398 = vpop.f32.mrb[0].mxu0
    %v399 = vadd.f32 %v254, %v398
    %v400 = vpop.f32.mrb[0].mxu0
    %401 = vmatprep.mubr.f32.mxu0 %v63
    %402 = vmatmul.mubr.f32.gmra.mrb[0].mxu0 %v62
    %v403 = vpop.f32.mrb[0].mxu0
    %v404 = vadd.f32 %v259, %v403
    %v405 = vpop.f32.mrb[0].mxu0
    %406 = vmatprep.mubr.f32.mxu0 %v67
    %407 = vmatmul.mubr.f32.gmra.mrb[0].mxu0 %v66
    %v408 = vpop.f32.mrb[0].mxu0
    %v409 = vadd.f32 %v264, %v408
    %v410 = vpop.f32.mrb[0].mxu0
    %411 = vmatprep.mubr.f32.mxu0 %v71
    %412 = vmatmul.mubr.f32.gmra.mrb[0].mxu0 %v70
    %v413 = vpop.f32.mrb[0].mxu0
    %v414 = vadd.f32 %v269, %v413
    %v415 = vpop.f32.mrb[0].mxu0
    %416 = vmatprep.mubr.f32.mxu0 %v75
    %417 = vmatmul.mubr.f32.gmra.mrb[0].mxu0 %v74
    %v418 = vpop.f32.mrb[0].mxu0
    %v419 = vadd.f32 %v274, %v418
    %v420 = vpop.f32.mrb[0].mxu0
    %421 = vmatprep.mubr.f32.mxu0 %v79
    %422 = vmatmul.mubr.f32.gmra.mrb[0].mxu0 %v78
    %v423 = vpop.f32.mrb[0].mxu0
    %v424 = vadd.f32 %v279, %v423
    %v425 = vpop.f32.mrb[0].mxu0
    %426 = vmatprep.mubr.f32.mxu0 %v83
    %427 = vmatmul.mubr.f32.gmra.mrb[0].mxu0 %v82
    %v428 = vpop.f32.mrb[0].mxu0
    %v429 = vadd.f32 %v284, %v428
    %v430 = vpop.f32.mrb[0].mxu0
    %431 = vmatprep.mubr.f32.mxu0 %v87
    %432 = vmatmul.mubr.f32.gmra.mrb[0].mxu0 %v86
    %v433 = vpop.f32.mrb[0].mxu0
    %v434 = vadd.f32 %v289, %v433
    %v435 = vpop.f32.mrb[0].mxu0
    %436 = vmatprep.mubr.f32.mxu0 %v91
    %437 = vmatmul.mubr.f32.gmra.mrb[0].mxu0 %v90
    %v438 = vpop.f32.mrb[0].mxu0
    %v439 = vadd.f32 %v294, %v438
    %v440 = vpop.f32.mrb[0].mxu0
    %441 = vmatprep.mubr.f32.mxu0 %v95
    %442 = vmatmul.mubr.f32.gmra.mrb[0].mxu0 %v94
    %v443 = vpop.f32.mrb[0].mxu0
    %v444 = vadd.f32 %v299, %v443
    %v445 = vpop.f32.mrb[0].mxu0
    %446 = vmatprep.mubr.f32.mxu0 %v99
    %447 = vmatmul.mubr.f32.gmra.mrb[0].mxu0 %v98
    %v448 = vpop.f32.mrb[0].mxu0
    %v449 = vadd.f32 %v304, %v448
    %v450 = vpop.f32.mrb[0].mxu0
    %451 = vmatprep.mubr.f32.mxu0 %v103
    %452 = vmatmul.mubr.f32.gmra.mrb[0].mxu0 %v102
    %v453 = vpop.f32.mrb[0].mxu0
    %v454 = vadd.f32 %v309, %v453
    %v455 = vpop.f32.mrb[0].mxu0
    %456 = vmatprep.mubr.f32.mxu0 %v107
    %457 = vmatmul.mubr.f32.gmra.mrb[0].mxu0 %v106
    %v458 = vpop.f32.mrb[0].mxu0
    %v459 = vadd.f32 %v314, %v458
    %v460 = vpop.f32.mrb[0].mxu0
    %461 = vdwg.mxu0
    %v463 = vlaneseq
    %v464 = vshrl.u32 %v463, 7
    %v465 = vsub.s32 0, %v464
    %v466 = vrot.slane %v42, %v465
    %v468 = vmul.f32 %v384, %v466
    %v469 = vmul.f32 %v389, %v466
    %v470 = vmul.f32 %v394, %v466
    %v471 = vmul.f32 %v399, %v466
    %v472 = vmul.f32 %v404, %v466
    %v473 = vmul.f32 %v409, %v466
    %v474 = vmul.f32 %v414, %v466
    %v475 = vmul.f32 %v419, %v466
    %v476 = vmul.f32 %v424, %v466
    %v477 = vmul.f32 %v429, %v466
    %v478 = vmul.f32 %v434, %v466
    %v479 = vmul.f32 %v439, %v466
    %v480 = vmul.f32 %v444, %v466
    %v481 = vmul.f32 %v449, %v466
    %v482 = vmul.f32 %v454, %v466
    %v483 = vmul.f32 %v459, %v466
    %v485 = vlaneseq
    %v486 = vshrl.u32 %v485, 7
    %v487 = vsub.s32 0, %v486
    %v488 = vrot.slane %v43, %v487
    %v490 = vadd.f32 %v468, %v488
    %v491 = vadd.f32 %v469, %v488
    %v492 = vadd.f32 %v470, %v488
    %v493 = vadd.f32 %v471, %v488
    %v494 = vadd.f32 %v472, %v488
    %v495 = vadd.f32 %v473, %v488
    %v496 = vadd.f32 %v474, %v488
    %v497 = vadd.f32 %v475, %v488
    %v498 = vadd.f32 %v476, %v488
    %v499 = vadd.f32 %v477, %v488
    %v500 = vadd.f32 %v478, %v488
    %v501 = vadd.f32 %v479, %v488
    %v502 = vadd.f32 %v480, %v488
    %v503 = vadd.f32 %v481, %v488
    %v504 = vadd.f32 %v482, %v488
    %v505 = vadd.f32 %v483, %v488
    %v506 = vmax.f32 %v490, 0.0
    %v507 = vmax.f32 %v491, 0.0
    %v508 = vmax.f32 %v492, 0.0
    %v509 = vmax.f32 %v493, 0.0
    %v510 = vmax.f32 %v494, 0.0
    %v511 = vmax.f32 %v495, 0.0
    %v512 = vmax.f32 %v496, 0.0
    %v513 = vmax.f32 %v497, 0.0
    %v514 = vmax.f32 %v498, 0.0
    %v515 = vmax.f32 %v499, 0.0
    %v516 = vmax.f32 %v500, 0.0
    %v517 = vmax.f32 %v501, 0.0
    %v518 = vmax.f32 %v502, 0.0
    %v519 = vmax.f32 %v503, 0.0
    %v520 = vmax.f32 %v504, 0.0
    %v521 = vmax.f32 %v505, 0.0
    %v522 = vmax.f32 %v506, %v510
    %v523 = vmax.f32 %v507, %v511
    %v524 = vmax.f32 %v508, %v512
    %v525 = vmax.f32 %v509, %v513
    %v526 = vmax.f32 %v514, %v518
    %v527 = vmax.f32 %v515, %v519
    %v528 = vmax.f32 %v516, %v520
    %v529 = vmax.f32 %v517, %v521
    %v530 = vmax.f32 %v522, %v526
    %v531 = vmax.f32 %v523, %v527
    %v532 = vmax.f32 %v524, %v528
    %v533 = vmax.f32 %v525, %v529
    %534 = vst [vmem:[#allocation2] sm:$0xff] 0.0
    %535 = vst [vmem:[#allocation2 + $0x8] sm:$0xff] 0.0
    %536 = vst [vmem:[#allocation2 + $0x10] sm:$0xff] 0.0
    %537 = vst [vmem:[#allocation2 + $0x18] sm:$0xff] 0.0
    %538 = vst [vmem:[#allocation2 + $0x20] sm:$0xff] 0.0
    %539 = vst [vmem:[#allocation2 + $0x28] sm:$0xff] 0.0
    %540 = vst [vmem:[#allocation2 + $0x30] sm:$0xff] 0.0
    %541 = vst [vmem:[#allocation2 + $0x38] sm:$0xff] 0.0
    %542 = vst [vmem:[#allocation2 + $0x40] sm:$0xff] 0.0
    %543 = vst [vmem:[#allocation2 + $0x48] sm:$0xff] 0.0
    %544 = vst [vmem:[#allocation2 + $0x50] sm:$0xff] 0.0
    %545 = vst [vmem:[#allocation2 + $0x58] sm:$0xff] 0.0
    %546 = vst [vmem:[#allocation2 + $0x60] sm:$0xff] 0.0
    %547 = vst [vmem:[#allocation2 + $0x68] sm:$0xff] 0.0
    %548 = vst [vmem:[#allocation2 + $0x70] sm:$0xff] 0.0
    %549 = vst [vmem:[#allocation2 + $0x78] sm:$0xff] 0.0
    %v551 = vrot.slane %v530, 4
    %553 = vst [vmem:[#allocation2 + $0x10] sm:$0x30] %v551
    %v554 = vrot.slane %v530, 6
    %556 = vst [vmem:[#allocation2 + $0x18] sm:$0x30] %v554
    %557 = vst [vmem:[#allocation2 + $0x20] sm:$0x30] %v530
    %v558 = vrot.slane %v530, 2
    %560 = vst [vmem:[#allocation2 + $0x28] sm:$0x30] %v558
    %v562 = vrot.slane %v531, 2
    %564 = vst [vmem:[#allocation2 + $0x10] sm:$0xc0] %v562
    %v565 = vrot.slane %v531, 4
    %567 = vst [vmem:[#allocation2 + $0x18] sm:$0xc0] %v565
    %v568 = vrot.slane %v531, 6
    %570 = vst [vmem:[#allocation2 + $0x20] sm:$0xc0] %v568
    %571 = vst [vmem:[#allocation2 + $0x28] sm:$0xc0] %v531
    %572 = vst [vmem:[#allocation2 + $0x50] sm:$0x3] %v532
    %v574 = vrot.slane %v532, 2
    %576 = vst [vmem:[#allocation2 + $0x58] sm:$0x3] %v574
    %v577 = vrot.slane %v532, 4
    %579 = vst [vmem:[#allocation2 + $0x60] sm:$0x3] %v577
    %v580 = vrot.slane %v532, 6
    %582 = vst [vmem:[#allocation2 + $0x68] sm:$0x3] %v580
    %v584 = vrot.slane %v533, 6
    %586 = vst [vmem:[#allocation2 + $0x50] sm:$0xc] %v584
    %587 = vst [vmem:[#allocation2 + $0x58] sm:$0xc] %v533
    %v588 = vrot.slane %v533, 2
    %590 = vst [vmem:[#allocation2 + $0x60] sm:$0xc] %v588
    %v591 = vrot.slane %v533, 4
    %593 = vst [vmem:[#allocation2 + $0x68] sm:$0xc] %v591
    %v594 = vld [vmem:[%s5] sm:$0x1]
    %v595 = vld [vmem:[%s6] sm:$0x1]
    %v596 = vld [vmem:[#allocation2] sm:$0xff]
    %v597 = vld [vmem:[#allocation2 + $0x8] sm:$0xff]
    %v598 = vld [vmem:[#allocation2 + $0x10] sm:$0xff]
    %v599 = vld [vmem:[#allocation2 + $0x18] sm:$0xff]
    %v600 = vld [vmem:[#allocation2 + $0x20] sm:$0xff]
    %v601 = vld [vmem:[#allocation2 + $0x28] sm:$0xff]
    %v602 = vld [vmem:[#allocation2 + $0x30] sm:$0xff]
    %v603 = vld [vmem:[#allocation2 + $0x38] sm:$0xff]
    %v604 = vld [vmem:[#allocation2] sm:$0xfc]
    %v605 = vld [vmem:[#allocation2 + $0x8] sm:$0xfc]
    %v606 = vld [vmem:[#allocation2 + $0x10] sm:$0xfc]
    %v607 = vld [vmem:[#allocation2 + $0x18] sm:$0xfc]
    %v608 = vld [vmem:[#allocation2 + $0x20] sm:$0xfc]
    %v609 = vld [vmem:[#allocation2 + $0x28] sm:$0xfc]
    %v610 = vld [vmem:[#allocation2 + $0x30] sm:$0xfc]
    %v611 = vld [vmem:[#allocation2 + $0x38] sm:$0xfc]
    %v612 = vld [vmem:[#allocation2 + $0x40] sm:$0x3]
    %v613 = vld [vmem:[#allocation2 + $0x48] sm:$0x3]
    %v614 = vld [vmem:[#allocation2 + $0x50] sm:$0x3]
    %v615 = vld [vmem:[#allocation2 + $0x58] sm:$0x3]
    %v616 = vld [vmem:[#allocation2 + $0x60] sm:$0x3]
    %v617 = vld [vmem:[#allocation2 + $0x68] sm:$0x3]
    %v618 = vld [vmem:[#allocation2 + $0x70] sm:$0x3]
    %v619 = vld [vmem:[#allocation2 + $0x78] sm:$0x3]
    %vm622 = vcmask 1045504
    %v623 = vrot.slane %v604, 2
    %v624 = vrot.slane %v612, 2
    %v625 = vsel %vm622, %v623, %v624
    %v629 = vrot.slane %v605, 2
    %v630 = vrot.slane %v613, 2
    %v631 = vsel %vm622, %v629, %v630
    %v635 = vrot.slane %v606, 2
    %v636 = vrot.slane %v614, 2
    %v637 = vsel %vm622, %v635, %v636
    %v641 = vrot.slane %v607, 2
    %v642 = vrot.slane %v615, 2
    %v643 = vsel %vm622, %v641, %v642
    %v647 = vrot.slane %v608, 2
    %v648 = vrot.slane %v616, 2
    %v649 = vsel %vm622, %v647, %v648
    %v653 = vrot.slane %v609, 2
    %v654 = vrot.slane %v617, 2
    %v655 = vsel %vm622, %v653, %v654
    %v659 = vrot.slane %v610, 2
    %v660 = vrot.slane %v618, 2
    %v661 = vsel %vm622, %v659, %v660
    %v665 = vrot.slane %v611, 2
    %v666 = vrot.slane %v619, 2
    %v667 = vsel %vm622, %v665, %v666
    %v669 = vld [vmem:[#allocation2] sm:$0xf0]
    %v670 = vld [vmem:[#allocation2 + $0x8] sm:$0xf0]
    %v671 = vld [vmem:[#allocation2 + $0x10] sm:$0xf0]
    %v672 = vld [vmem:[#allocation2 + $0x18] sm:$0xf0]
    %v673 = vld [vmem:[#allocation2 + $0x20] sm:$0xf0]
    %v674 = vld [vmem:[#allocation2 + $0x28] sm:$0xf0]
    %v675 = vld [vmem:[#allocation2 + $0x30] sm:$0xf0]
    %v676 = vld [vmem:[#allocation2 + $0x38] sm:$0xf0]
    %v677 = vld [vmem:[#allocation2 + $0x40] sm:$0xf]
    %v678 = vld [vmem:[#allocation2 + $0x48] sm:$0xf]
    %v679 = vld [vmem:[#allocation2 + $0x50] sm:$0xf]
    %v680 = vld [vmem:[#allocation2 + $0x58] sm:$0xf]
    %v681 = vld [vmem:[#allocation2 + $0x60] sm:$0xf]
    %v682 = vld [vmem:[#allocation2 + $0x68] sm:$0xf]
    %v683 = vld [vmem:[#allocation2 + $0x70] sm:$0xf]
    %v684 = vld [vmem:[#allocation2 + $0x78] sm:$0xf]
    %vm687 = vcmask 1043456
    %v688 = vrot.slane %v669, 4
    %v689 = vrot.slane %v677, 4
    %v690 = vsel %vm687, %v688, %v689
    %v694 = vrot.slane %v670, 4
    %v695 = vrot.slane %v678, 4
    %v696 = vsel %vm687, %v694, %v695
    %v700 = vrot.slane %v671, 4
    %v701 = vrot.slane %v679, 4
    %v702 = vsel %vm687, %v700, %v701
    %v706 = vrot.slane %v672, 4
    %v707 = vrot.slane %v680, 4
    %v708 = vsel %vm687, %v706, %v707
    %v712 = vrot.slane %v673, 4
    %v713 = vrot.slane %v681, 4
    %v714 = vsel %vm687, %v712, %v713
    %v718 = vrot.slane %v674, 4
    %v719 = vrot.slane %v682, 4
    %v720 = vsel %vm687, %v718, %v719
    %v724 = vrot.slane %v675, 4
    %v725 = vrot.slane %v683, 4
    %v726 = vsel %vm687, %v724, %v725
    %v730 = vrot.slane %v676, 4
    %v731 = vrot.slane %v684, 4
    %v732 = vsel %vm687, %v730, %v731
    %v734 = vld [vmem:[#allocation2] sm:$0xc0]
    %v735 = vld [vmem:[#allocation2 + $0x8] sm:$0xc0]
    %v736 = vld [vmem:[#allocation2 + $0x10] sm:$0xc0]
    %v737 = vld [vmem:[#allocation2 + $0x18] sm:$0xc0]
    %v738 = vld [vmem:[#allocation2 + $0x20] sm:$0xc0]
    %v739 = vld [vmem:[#allocation2 + $0x28] sm:$0xc0]
    %v740 = vld [vmem:[#allocation2 + $0x30] sm:$0xc0]
    %v741 = vld [vmem:[#allocation2 + $0x38] sm:$0xc0]
    %v742 = vld [vmem:[#allocation2 + $0x40] sm:$0x3f]
    %v743 = vld [vmem:[#allocation2 + $0x48] sm:$0x3f]
    %v744 = vld [vmem:[#allocation2 + $0x50] sm:$0x3f]
    %v745 = vld [vmem:[#allocation2 + $0x58] sm:$0x3f]
    %v746 = vld [vmem:[#allocation2 + $0x60] sm:$0x3f]
    %v747 = vld [vmem:[#allocation2 + $0x68] sm:$0x3f]
    %v748 = vld [vmem:[#allocation2 + $0x70] sm:$0x3f]
    %v749 = vld [vmem:[#allocation2 + $0x78] sm:$0x3f]
    %vm752 = vcmask 1041408
    %v753 = vrot.slane %v734, 6
    %v754 = vrot.slane %v742, 6
    %v755 = vsel %vm752, %v753, %v754
    %v759 = vrot.slane %v735, 6
    %v760 = vrot.slane %v743, 6
    %v761 = vsel %vm752, %v759, %v760
    %v765 = vrot.slane %v736, 6
    %v766 = vrot.slane %v744, 6
    %v767 = vsel %vm752, %v765, %v766
    %v771 = vrot.slane %v737, 6
    %v772 = vrot.slane %v745, 6
    %v773 = vsel %vm752, %v771, %v772
    %v777 = vrot.slane %v738, 6
    %v778 = vrot.slane %v746, 6
    %v779 = vsel %vm752, %v777, %v778
    %v783 = vrot.slane %v739, 6
    %v784 = vrot.slane %v747, 6
    %v785 = vsel %vm752, %v783, %v784
    %v789 = vrot.slane %v740, 6
    %v790 = vrot.slane %v748, 6
    %v791 = vsel %vm752, %v789, %v790
    %v795 = vrot.slane %v741, 6
    %v796 = vrot.slane %v749, 6
    %v797 = vsel %vm752, %v795, %v796
    %v799 = vld [vmem:[#allocation2 + $0x40] sm:$0xff]
    %v800 = vld [vmem:[#allocation2 + $0x48] sm:$0xff]
    %v801 = vld [vmem:[#allocation2 + $0x50] sm:$0xff]
    %v802 = vld [vmem:[#allocation2 + $0x58] sm:$0xff]
    %v803 = vld [vmem:[#allocation2 + $0x60] sm:$0xff]
    %v804 = vld [vmem:[#allocation2 + $0x68] sm:$0xff]
    %v805 = vld [vmem:[#allocation2 + $0x70] sm:$0xff]
    %v806 = vld [vmem:[#allocation2 + $0x78] sm:$0xff]
    %v807 = vld [vmem:[%s4] sm:$0xff]
    %v808 = vld [vmem:[%s4 + $0x8] sm:$0xff]
    %v809 = vld [vmem:[%s4 + $0x10] sm:$0xff]
    %v810 = vld [vmem:[%s4 + $0x18] sm:$0xff]
    %v811 = vld [vmem:[%s4 + $0x20] sm:$0xff]
    %v812 = vld [vmem:[%s4 + $0x28] sm:$0xff]
    %v813 = vld [vmem:[%s4 + $0x30] sm:$0xff]
    %v814 = vld [vmem:[%s4 + $0x38] sm:$0xff]
    %v815 = vld [vmem:[%s4 + $0x40] sm:$0xff]
    %v816 = vld [vmem:[%s4 + $0x48] sm:$0xff]
    %v817 = vld [vmem:[%s4 + $0x50] sm:$0xff]
    %v818 = vld [vmem:[%s4 + $0x58] sm:$0xff]
    %v819 = vld [vmem:[%s4 + $0x60] sm:$0xff]
    %v820 = vld [vmem:[%s4 + $0x68] sm:$0xff]
    %v821 = vld [vmem:[%s4 + $0x70] sm:$0xff]
    %v822 = vld [vmem:[%s4 + $0x78] sm:$0xff]
    %v823 = vld [vmem:[%s4 + $0x80] sm:$0xff]
    %v824 = vld [vmem:[%s4 + $0x88] sm:$0xff]
    %v825 = vld [vmem:[%s4 + $0x90] sm:$0xff]
    %v826 = vld [vmem:[%s4 + $0x98] sm:$0xff]
    %v827 = vld [vmem:[%s4 + $0xa0] sm:$0xff]
    %v828 = vld [vmem:[%s4 + $0xa8] sm:$0xff]
    %v829 = vld [vmem:[%s4 + $0xb0] sm:$0xff]
    %v830 = vld [vmem:[%s4 + $0xb8] sm:$0xff]
    %v831 = vld [vmem:[%s4 + $0xc0] sm:$0xff]
    %v832 = vld [vmem:[%s4 + $0xc8] sm:$0xff]
    %v833 = vld [vmem:[%s4 + $0xd0] sm:$0xff]
    %v834 = vld [vmem:[%s4 + $0xd8] sm:$0xff]
    %v835 = vld [vmem:[%s4 + $0xe0] sm:$0xff]
    %v836 = vld [vmem:[%s4 + $0xe8] sm:$0xff]
    %v837 = vld [vmem:[%s4 + $0xf0] sm:$0xff]
    %v838 = vld [vmem:[%s4 + $0xf8] sm:$0xff]
    %v839 = vld [vmem:[%s4 + $0x100] sm:$0xff]
    %v840 = vld [vmem:[%s4 + $0x108] sm:$0xff]
    %v841 = vld [vmem:[%s4 + $0x110] sm:$0xff]
    %v842 = vld [vmem:[%s4 + $0x118] sm:$0xff]
    %v843 = vld [vmem:[%s4 + $0x120] sm:$0xff]
    %v844 = vld [vmem:[%s4 + $0x128] sm:$0xff]
    %v845 = vld [vmem:[%s4 + $0x130] sm:$0xff]
    %v846 = vld [vmem:[%s4 + $0x138] sm:$0xff]
    %v847 = vld [vmem:[%s4 + $0x140] sm:$0xff]
    %v848 = vld [vmem:[%s4 + $0x148] sm:$0xff]
    %v849 = vld [vmem:[%s4 + $0x150] sm:$0xff]
    %v850 = vld [vmem:[%s4 + $0x158] sm:$0xff]
    %v851 = vld [vmem:[%s4 + $0x160] sm:$0xff]
    %v852 = vld [vmem:[%s4 + $0x168] sm:$0xff]
    %v853 = vld [vmem:[%s4 + $0x170] sm:$0xff]
    %v854 = vld [vmem:[%s4 + $0x178] sm:$0xff]
    %v855 = vld [vmem:[%s4 + $0x180] sm:$0xff]
    %v856 = vld [vmem:[%s4 + $0x188] sm:$0xff]
    %v857 = vld [vmem:[%s4 + $0x190] sm:$0xff]
    %v858 = vld [vmem:[%s4 + $0x198] sm:$0xff]
    %v859 = vld [vmem:[%s4 + $0x1a0] sm:$0xff]
    %v860 = vld [vmem:[%s4 + $0x1a8] sm:$0xff]
    %v861 = vld [vmem:[%s4 + $0x1b0] sm:$0xff]
    %v862 = vld [vmem:[%s4 + $0x1b8] sm:$0xff]
    %v863 = vld [vmem:[%s4 + $0x1c0] sm:$0xff]
    %v864 = vld [vmem:[%s4 + $0x1c8] sm:$0xff]
    %v865 = vld [vmem:[%s4 + $0x1d0] sm:$0xff]
    %v866 = vld [vmem:[%s4 + $0x1d8] sm:$0xff]
    %v867 = vld [vmem:[%s4 + $0x1e0] sm:$0xff]
    %v868 = vld [vmem:[%s4 + $0x1e8] sm:$0xff]
    %v869 = vld [vmem:[%s4 + $0x1f0] sm:$0xff]
    %v870 = vld [vmem:[%s4 + $0x1f8] sm:$0xff]
    %v871 = vld [vmem:[%s4 + $0x200] sm:$0xff]
    %v872 = vld [vmem:[%s4 + $0x208] sm:$0xff]
    %v873 = vld [vmem:[%s4 + $0x210] sm:$0xff]
    %v874 = vld [vmem:[%s4 + $0x218] sm:$0xff]
    %v875 = vld [vmem:[%s4 + $0x220] sm:$0xff]
    %v876 = vld [vmem:[%s4 + $0x228] sm:$0xff]
    %v877 = vld [vmem:[%s4 + $0x230] sm:$0xff]
    %v878 = vld [vmem:[%s4 + $0x238] sm:$0xff]
    %v879 = vld [vmem:[%s4 + $0x240] sm:$0xff]
    %v880 = vld [vmem:[%s4 + $0x248] sm:$0xff]
    %v881 = vld [vmem:[%s4 + $0x250] sm:$0xff]
    %v882 = vld [vmem:[%s4 + $0x258] sm:$0xff]
    %v883 = vld [vmem:[%s4 + $0x260] sm:$0xff]
    %v884 = vld [vmem:[%s4 + $0x268] sm:$0xff]
    %v885 = vld [vmem:[%s4 + $0x270] sm:$0xff]
    %v886 = vld [vmem:[%s4 + $0x278] sm:$0xff]
    %v887 = vld [vmem:[%s4 + $0x280] sm:$0xff]
    %v888 = vld [vmem:[%s4 + $0x288] sm:$0xff]
    %v889 = vld [vmem:[%s4 + $0x290] sm:$0xff]
    %v890 = vld [vmem:[%s4 + $0x298] sm:$0xff]
    %v891 = vld [vmem:[%s4 + $0x2a0] sm:$0xff]
    %v892 = vld [vmem:[%s4 + $0x2a8] sm:$0xff]
    %v893 = vld [vmem:[%s4 + $0x2b0] sm:$0xff]
    %v894 = vld [vmem:[%s4 + $0x2b8] sm:$0xff]
    %v895 = vld [vmem:[%s4 + $0x2c0] sm:$0xff]
    %v896 = vld [vmem:[%s4 + $0x2c8] sm:$0xff]
    %v897 = vld [vmem:[%s4 + $0x2d0] sm:$0xff]
    %v898 = vld [vmem:[%s4 + $0x2d8] sm:$0xff]
    %v899 = vld [vmem:[%s4 + $0x2e0] sm:$0xff]
    %v900 = vld [vmem:[%s4 + $0x2e8] sm:$0xff]
    %v901 = vld [vmem:[%s4 + $0x2f0] sm:$0xff]
    %v902 = vld [vmem:[%s4 + $0x2f8] sm:$0xff]
    %v903 = vld [vmem:[%s4 + $0x300] sm:$0xff]
    %v904 = vld [vmem:[%s4 + $0x308] sm:$0xff]
    %v905 = vld [vmem:[%s4 + $0x310] sm:$0xff]
    %v906 = vld [vmem:[%s4 + $0x318] sm:$0xff]
    %v907 = vld [vmem:[%s4 + $0x320] sm:$0xff]
    %v908 = vld [vmem:[%s4 + $0x328] sm:$0xff]
    %v909 = vld [vmem:[%s4 + $0x330] sm:$0xff]
    %v910 = vld [vmem:[%s4 + $0x338] sm:$0xff]
    %v911 = vld [vmem:[%s4 + $0x340] sm:$0xff]
    %v912 = vld [vmem:[%s4 + $0x348] sm:$0xff]
    %v913 = vld [vmem:[%s4 + $0x350] sm:$0xff]
    %v914 = vld [vmem:[%s4 + $0x358] sm:$0xff]
    %v915 = vld [vmem:[%s4 + $0x360] sm:$0xff]
    %v916 = vld [vmem:[%s4 + $0x368] sm:$0xff]
    %v917 = vld [vmem:[%s4 + $0x370] sm:$0xff]
    %v918 = vld [vmem:[%s4 + $0x378] sm:$0xff]
    %v919 = vld [vmem:[%s4 + $0x380] sm:$0xff]
    %v920 = vld [vmem:[%s4 + $0x388] sm:$0xff]
    %v921 = vld [vmem:[%s4 + $0x390] sm:$0xff]
    %v922 = vld [vmem:[%s4 + $0x398] sm:$0xff]
    %v923 = vld [vmem:[%s4 + $0x3a0] sm:$0xff]
    %v924 = vld [vmem:[%s4 + $0x3a8] sm:$0xff]
    %v925 = vld [vmem:[%s4 + $0x3b0] sm:$0xff]
    %v926 = vld [vmem:[%s4 + $0x3b8] sm:$0xff]
    %v927 = vld [vmem:[%s4 + $0x3c0] sm:$0xff]
    %v928 = vld [vmem:[%s4 + $0x3c8] sm:$0xff]
    %v929 = vld [vmem:[%s4 + $0x3d0] sm:$0xff]
    %v930 = vld [vmem:[%s4 + $0x3d8] sm:$0xff]
    %v931 = vld [vmem:[%s4 + $0x3e0] sm:$0xff]
    %v932 = vld [vmem:[%s4 + $0x3e8] sm:$0xff]
    %v933 = vld [vmem:[%s4 + $0x3f0] sm:$0xff]
    %v934 = vld [vmem:[%s4 + $0x3f8] sm:$0xff]
    %v935 = vld [vmem:[%s4 + $0x400] sm:$0xff]
    %v936 = vld [vmem:[%s4 + $0x408] sm:$0xff]
    %v937 = vld [vmem:[%s4 + $0x410] sm:$0xff]
    %v938 = vld [vmem:[%s4 + $0x418] sm:$0xff]
    %v939 = vld [vmem:[%s4 + $0x420] sm:$0xff]
    %v940 = vld [vmem:[%s4 + $0x428] sm:$0xff]
    %v941 = vld [vmem:[%s4 + $0x430] sm:$0xff]
    %v942 = vld [vmem:[%s4 + $0x438] sm:$0xff]
    %v943 = vld [vmem:[%s4 + $0x440] sm:$0xff]
    %v944 = vld [vmem:[%s4 + $0x448] sm:$0xff]
    %v945 = vld [vmem:[%s4 + $0x450] sm:$0xff]
    %v946 = vld [vmem:[%s4 + $0x458] sm:$0xff]
    %v947 = vld [vmem:[%s4 + $0x460] sm:$0xff]
    %v948 = vld [vmem:[%s4 + $0x468] sm:$0xff]
    %v949 = vld [vmem:[%s4 + $0x470] sm:$0xff]
    %v950 = vld [vmem:[%s4 + $0x478] sm:$0xff]
    %v951 = vld [vmem:[%s4 + $0x480] sm:$0xff]
    %v952 = vld [vmem:[%s4 + $0x488] sm:$0xff]
    %v953 = vld [vmem:[%s4 + $0x490] sm:$0xff]
    %v954 = vld [vmem:[%s4 + $0x498] sm:$0xff]
    %v955 = vld [vmem:[%s4 + $0x4a0] sm:$0xff]
    %v956 = vld [vmem:[%s4 + $0x4a8] sm:$0xff]
    %v957 = vld [vmem:[%s4 + $0x4b0] sm:$0xff]
    %v958 = vld [vmem:[%s4 + $0x4b8] sm:$0xff]
    %v959 = vld [vmem:[%s4 + $0x4c0] sm:$0xff]
    %v960 = vld [vmem:[%s4 + $0x4c8] sm:$0xff]
    %v961 = vld [vmem:[%s4 + $0x4d0] sm:$0xff]
    %v962 = vld [vmem:[%s4 + $0x4d8] sm:$0xff]
    %v963 = vld [vmem:[%s4 + $0x4e0] sm:$0xff]
    %v964 = vld [vmem:[%s4 + $0x4e8] sm:$0xff]
    %v965 = vld [vmem:[%s4 + $0x4f0] sm:$0xff]
    %v966 = vld [vmem:[%s4 + $0x4f8] sm:$0xff]
    %v967 = vld [vmem:[%s4 + $0x500] sm:$0xff]
    %v968 = vld [vmem:[%s4 + $0x508] sm:$0xff]
    %v969 = vld [vmem:[%s4 + $0x510] sm:$0xff]
    %v970 = vld [vmem:[%s4 + $0x518] sm:$0xff]
    %v971 = vld [vmem:[%s4 + $0x520] sm:$0xff]
    %v972 = vld [vmem:[%s4 + $0x528] sm:$0xff]
    %v973 = vld [vmem:[%s4 + $0x530] sm:$0xff]
    %v974 = vld [vmem:[%s4 + $0x538] sm:$0xff]
    %v975 = vld [vmem:[%s4 + $0x540] sm:$0xff]
    %v976 = vld [vmem:[%s4 + $0x548] sm:$0xff]
    %v977 = vld [vmem:[%s4 + $0x550] sm:$0xff]
    %v978 = vld [vmem:[%s4 + $0x558] sm:$0xff]
    %v979 = vld [vmem:[%s4 + $0x560] sm:$0xff]
    %v980 = vld [vmem:[%s4 + $0x568] sm:$0xff]
    %v981 = vld [vmem:[%s4 + $0x570] sm:$0xff]
    %v982 = vld [vmem:[%s4 + $0x578] sm:$0xff]
    %v983 = vld [vmem:[%s4 + $0x580] sm:$0xff]
    %v984 = vld [vmem:[%s4 + $0x588] sm:$0xff]
    %v985 = vld [vmem:[%s4 + $0x590] sm:$0xff]
    %v986 = vld [vmem:[%s4 + $0x598] sm:$0xff]
    %v987 = vld [vmem:[%s4 + $0x5a0] sm:$0xff]
    %v988 = vld [vmem:[%s4 + $0x5a8] sm:$0xff]
    %v989 = vld [vmem:[%s4 + $0x5b0] sm:$0xff]
    %v990 = vld [vmem:[%s4 + $0x5b8] sm:$0xff]
    %v991 = vld [vmem:[%s4 + $0x5c0] sm:$0xff]
    %v992 = vld [vmem:[%s4 + $0x5c8] sm:$0xff]
    %v993 = vld [vmem:[%s4 + $0x5d0] sm:$0xff]
    %v994 = vld [vmem:[%s4 + $0x5d8] sm:$0xff]
    %v995 = vld [vmem:[%s4 + $0x5e0] sm:$0xff]
    %v996 = vld [vmem:[%s4 + $0x5e8] sm:$0xff]
    %v997 = vld [vmem:[%s4 + $0x5f0] sm:$0xff]
    %v998 = vld [vmem:[%s4 + $0x5f8] sm:$0xff]
    %v999 = vld [vmem:[%s4 + $0x600] sm:$0xff]
    %v1000 = vld [vmem:[%s4 + $0x608] sm:$0xff]
    %v1001 = vld [vmem:[%s4 + $0x610] sm:$0xff]
    %v1002 = vld [vmem:[%s4 + $0x618] sm:$0xff]
    %v1003 = vld [vmem:[%s4 + $0x620] sm:$0xff]
    %v1004 = vld [vmem:[%s4 + $0x628] sm:$0xff]
    %v1005 = vld [vmem:[%s4 + $0x630] sm:$0xff]
    %v1006 = vld [vmem:[%s4 + $0x638] sm:$0xff]
    %v1007 = vld [vmem:[%s4 + $0x640] sm:$0xff]
    %v1008 = vld [vmem:[%s4 + $0x648] sm:$0xff]
    %v1009 = vld [vmem:[%s4 + $0x650] sm:$0xff]
    %v1010 = vld [vmem:[%s4 + $0x658] sm:$0xff]
    %v1011 = vld [vmem:[%s4 + $0x660] sm:$0xff]
    %v1012 = vld [vmem:[%s4 + $0x668] sm:$0xff]
    %v1013 = vld [vmem:[%s4 + $0x670] sm:$0xff]
    %v1014 = vld [vmem:[%s4 + $0x678] sm:$0xff]
    %v1015 = vld [vmem:[%s4 + $0x680] sm:$0xff]
    %v1016 = vld [vmem:[%s4 + $0x688] sm:$0xff]
    %v1017 = vld [vmem:[%s4 + $0x690] sm:$0xff]
    %v1018 = vld [vmem:[%s4 + $0x698] sm:$0xff]
    %v1019 = vld [vmem:[%s4 + $0x6a0] sm:$0xff]
    %v1020 = vld [vmem:[%s4 + $0x6a8] sm:$0xff]
    %v1021 = vld [vmem:[%s4 + $0x6b0] sm:$0xff]
    %v1022 = vld [vmem:[%s4 + $0x6b8] sm:$0xff]
    %v1023 = vld [vmem:[%s4 + $0x6c0] sm:$0xff]
    %v1024 = vld [vmem:[%s4 + $0x6c8] sm:$0xff]
    %v1025 = vld [vmem:[%s4 + $0x6d0] sm:$0xff]
    %v1026 = vld [vmem:[%s4 + $0x6d8] sm:$0xff]
    %v1027 = vld [vmem:[%s4 + $0x6e0] sm:$0xff]
    %v1028 = vld [vmem:[%s4 + $0x6e8] sm:$0xff]
    %v1029 = vld [vmem:[%s4 + $0x6f0] sm:$0xff]
    %v1030 = vld [vmem:[%s4 + $0x6f8] sm:$0xff]
    %v1031 = vld [vmem:[%s4 + $0x700] sm:$0xff]
    %v1032 = vld [vmem:[%s4 + $0x708] sm:$0xff]
    %v1033 = vld [vmem:[%s4 + $0x710] sm:$0xff]
    %v1034 = vld [vmem:[%s4 + $0x718] sm:$0xff]
    %v1035 = vld [vmem:[%s4 + $0x720] sm:$0xff]
    %v1036 = vld [vmem:[%s4 + $0x728] sm:$0xff]
    %v1037 = vld [vmem:[%s4 + $0x730] sm:$0xff]
    %v1038 = vld [vmem:[%s4 + $0x738] sm:$0xff]
    %v1039 = vld [vmem:[%s4 + $0x740] sm:$0xff]
    %v1040 = vld [vmem:[%s4 + $0x748] sm:$0xff]
    %v1041 = vld [vmem:[%s4 + $0x750] sm:$0xff]
    %v1042 = vld [vmem:[%s4 + $0x758] sm:$0xff]
    %v1043 = vld [vmem:[%s4 + $0x760] sm:$0xff]
    %v1044 = vld [vmem:[%s4 + $0x768] sm:$0xff]
    %v1045 = vld [vmem:[%s4 + $0x770] sm:$0xff]
    %v1046 = vld [vmem:[%s4 + $0x778] sm:$0xff]
    %v1047 = vld [vmem:[%s4 + $0x780] sm:$0xff]
    %v1048 = vld [vmem:[%s4 + $0x788] sm:$0xff]
    %v1049 = vld [vmem:[%s4 + $0x790] sm:$0xff]
    %v1050 = vld [vmem:[%s4 + $0x798] sm:$0xff]
    %v1051 = vld [vmem:[%s4 + $0x7a0] sm:$0xff]
    %v1052 = vld [vmem:[%s4 + $0x7a8] sm:$0xff]
    %v1053 = vld [vmem:[%s4 + $0x7b0] sm:$0xff]
    %v1054 = vld [vmem:[%s4 + $0x7b8] sm:$0xff]
    %v1055 = vld [vmem:[%s4 + $0x7c0] sm:$0xff]
    %v1056 = vld [vmem:[%s4 + $0x7c8] sm:$0xff]
    %v1057 = vld [vmem:[%s4 + $0x7d0] sm:$0xff]
    %v1058 = vld [vmem:[%s4 + $0x7d8] sm:$0xff]
    %v1059 = vld [vmem:[%s4 + $0x7e0] sm:$0xff]
    %v1060 = vld [vmem:[%s4 + $0x7e8] sm:$0xff]
    %v1061 = vld [vmem:[%s4 + $0x7f0] sm:$0xff]
    %v1062 = vld [vmem:[%s4 + $0x7f8] sm:$0xff]
    %v1063 = vld [vmem:[%s4 + $0x800] sm:$0xff]
    %v1064 = vld [vmem:[%s4 + $0x808] sm:$0xff]
    %v1065 = vld [vmem:[%s4 + $0x810] sm:$0xff]
    %v1066 = vld [vmem:[%s4 + $0x818] sm:$0xff]
    %v1067 = vld [vmem:[%s4 + $0x820] sm:$0xff]
    %v1068 = vld [vmem:[%s4 + $0x828] sm:$0xff]
    %v1069 = vld [vmem:[%s4 + $0x830] sm:$0xff]
    %v1070 = vld [vmem:[%s4 + $0x838] sm:$0xff]
    %v1071 = vld [vmem:[%s4 + $0x840] sm:$0xff]
    %v1072 = vld [vmem:[%s4 + $0x848] sm:$0xff]
    %v1073 = vld [vmem:[%s4 + $0x850] sm:$0xff]
    %v1074 = vld [vmem:[%s4 + $0x858] sm:$0xff]
    %v1075 = vld [vmem:[%s4 + $0x860] sm:$0xff]
    %v1076 = vld [vmem:[%s4 + $0x868] sm:$0xff]
    %v1077 = vld [vmem:[%s4 + $0x870] sm:$0xff]
    %v1078 = vld [vmem:[%s4 + $0x878] sm:$0xff]
    %v1079 = vld [vmem:[%s4 + $0x880] sm:$0xff]
    %v1080 = vld [vmem:[%s4 + $0x888] sm:$0xff]
    %v1081 = vld [vmem:[%s4 + $0x890] sm:$0xff]
    %v1082 = vld [vmem:[%s4 + $0x898] sm:$0xff]
    %v1083 = vld [vmem:[%s4 + $0x8a0] sm:$0xff]
    %v1084 = vld [vmem:[%s4 + $0x8a8] sm:$0xff]
    %v1085 = vld [vmem:[%s4 + $0x8b0] sm:$0xff]
    %v1086 = vld [vmem:[%s4 + $0x8b8] sm:$0xff]
    %v1087 = vld [vmem:[%s4 + $0x8c0] sm:$0xff]
    %v1088 = vld [vmem:[%s4 + $0x8c8] sm:$0xff]
    %v1089 = vld [vmem:[%s4 + $0x8d0] sm:$0xff]
    %v1090 = vld [vmem:[%s4 + $0x8d8] sm:$0xff]
    %v1091 = vld [vmem:[%s4 + $0x8e0] sm:$0xff]
    %v1092 = vld [vmem:[%s4 + $0x8e8] sm:$0xff]
    %v1093 = vld [vmem:[%s4 + $0x8f0] sm:$0xff]
    %v1094 = vld [vmem:[%s4 + $0x8f8] sm:$0xff]
    %v1095 = vld [vmem:[%s4 + $0x900] sm:$0xff]
    %v1096 = vld [vmem:[%s4 + $0x908] sm:$0xff]
    %v1097 = vld [vmem:[%s4 + $0x910] sm:$0xff]
    %v1098 = vld [vmem:[%s4 + $0x918] sm:$0xff]
    %v1099 = vld [vmem:[%s4 + $0x920] sm:$0xff]
    %v1100 = vld [vmem:[%s4 + $0x928] sm:$0xff]
    %v1101 = vld [vmem:[%s4 + $0x930] sm:$0xff]
    %v1102 = vld [vmem:[%s4 + $0x938] sm:$0xff]
    %v1103 = vld [vmem:[%s4 + $0x940] sm:$0xff]
    %v1104 = vld [vmem:[%s4 + $0x948] sm:$0xff]
    %v1105 = vld [vmem:[%s4 + $0x950] sm:$0xff]
    %v1106 = vld [vmem:[%s4 + $0x958] sm:$0xff]
    %v1107 = vld [vmem:[%s4 + $0x960] sm:$0xff]
    %v1108 = vld [vmem:[%s4 + $0x968] sm:$0xff]
    %v1109 = vld [vmem:[%s4 + $0x970] sm:$0xff]
    %v1110 = vld [vmem:[%s4 + $0x978] sm:$0xff]
    %v1111 = vld [vmem:[%s4 + $0x980] sm:$0xff]
    %v1112 = vld [vmem:[%s4 + $0x988] sm:$0xff]
    %v1113 = vld [vmem:[%s4 + $0x990] sm:$0xff]
    %v1114 = vld [vmem:[%s4 + $0x998] sm:$0xff]
    %v1115 = vld [vmem:[%s4 + $0x9a0] sm:$0xff]
    %v1116 = vld [vmem:[%s4 + $0x9a8] sm:$0xff]
    %v1117 = vld [vmem:[%s4 + $0x9b0] sm:$0xff]
    %v1118 = vld [vmem:[%s4 + $0x9b8] sm:$0xff]
    %v1119 = vld [vmem:[%s4 + $0x9c0] sm:$0xff]
    %v1120 = vld [vmem:[%s4 + $0x9c8] sm:$0xff]
    %v1121 = vld [vmem:[%s4 + $0x9d0] sm:$0xff]
    %v1122 = vld [vmem:[%s4 + $0x9d8] sm:$0xff]
    %v1123 = vld [vmem:[%s4 + $0x9e0] sm:$0xff]
    %v1124 = vld [vmem:[%s4 + $0x9e8] sm:$0xff]
    %v1125 = vld [vmem:[%s4 + $0x9f0] sm:$0xff]
    %v1126 = vld [vmem:[%s4 + $0x9f8] sm:$0xff]
    %v1127 = vld [vmem:[%s4 + $0xa00] sm:$0xff]
    %v1128 = vld [vmem:[%s4 + $0xa08] sm:$0xff]
    %v1129 = vld [vmem:[%s4 + $0xa10] sm:$0xff]
    %v1130 = vld [vmem:[%s4 + $0xa18] sm:$0xff]
    %v1131 = vld [vmem:[%s4 + $0xa20] sm:$0xff]
    %v1132 = vld [vmem:[%s4 + $0xa28] sm:$0xff]
    %v1133 = vld [vmem:[%s4 + $0xa30] sm:$0xff]
    %v1134 = vld [vmem:[%s4 + $0xa38] sm:$0xff]
    %v1135 = vld [vmem:[%s4 + $0xa40] sm:$0xff]
    %v1136 = vld [vmem:[%s4 + $0xa48] sm:$0xff]
    %v1137 = vld [vmem:[%s4 + $0xa50] sm:$0xff]
    %v1138 = vld [vmem:[%s4 + $0xa58] sm:$0xff]
    %v1139 = vld [vmem:[%s4 + $0xa60] sm:$0xff]
    %v1140 = vld [vmem:[%s4 + $0xa68] sm:$0xff]
    %v1141 = vld [vmem:[%s4 + $0xa70] sm:$0xff]
    %v1142 = vld [vmem:[%s4 + $0xa78] sm:$0xff]
    %v1143 = vld [vmem:[%s4 + $0xa80] sm:$0xff]
    %v1144 = vld [vmem:[%s4 + $0xa88] sm:$0xff]
    %v1145 = vld [vmem:[%s4 + $0xa90] sm:$0xff]
    %v1146 = vld [vmem:[%s4 + $0xa98] sm:$0xff]
    %v1147 = vld [vmem:[%s4 + $0xaa0] sm:$0xff]
    %v1148 = vld [vmem:[%s4 + $0xaa8] sm:$0xff]
    %v1149 = vld [vmem:[%s4 + $0xab0] sm:$0xff]
    %v1150 = vld [vmem:[%s4 + $0xab8] sm:$0xff]
    %v1151 = vld [vmem:[%s4 + $0xac0] sm:$0xff]
    %v1152 = vld [vmem:[%s4 + $0xac8] sm:$0xff]
    %v1153 = vld [vmem:[%s4 + $0xad0] sm:$0xff]
    %v1154 = vld [vmem:[%s4 + $0xad8] sm:$0xff]
    %v1155 = vld [vmem:[%s4 + $0xae0] sm:$0xff]
    %v1156 = vld [vmem:[%s4 + $0xae8] sm:$0xff]
    %v1157 = vld [vmem:[%s4 + $0xaf0] sm:$0xff]
    %v1158 = vld [vmem:[%s4 + $0xaf8] sm:$0xff]
    %v1159 = vld [vmem:[%s4 + $0xb00] sm:$0xff]
    %v1160 = vld [vmem:[%s4 + $0xb08] sm:$0xff]
    %v1161 = vld [vmem:[%s4 + $0xb10] sm:$0xff]
    %v1162 = vld [vmem:[%s4 + $0xb18] sm:$0xff]
    %v1163 = vld [vmem:[%s4 + $0xb20] sm:$0xff]
    %v1164 = vld [vmem:[%s4 + $0xb28] sm:$0xff]
    %v1165 = vld [vmem:[%s4 + $0xb30] sm:$0xff]
    %v1166 = vld [vmem:[%s4 + $0xb38] sm:$0xff]
    %v1167 = vld [vmem:[%s4 + $0xb40] sm:$0xff]
    %v1168 = vld [vmem:[%s4 + $0xb48] sm:$0xff]
    %v1169 = vld [vmem:[%s4 + $0xb50] sm:$0xff]
    %v1170 = vld [vmem:[%s4 + $0xb58] sm:$0xff]
    %v1171 = vld [vmem:[%s4 + $0xb60] sm:$0xff]
    %v1172 = vld [vmem:[%s4 + $0xb68] sm:$0xff]
    %v1173 = vld [vmem:[%s4 + $0xb70] sm:$0xff]
    %v1174 = vld [vmem:[%s4 + $0xb78] sm:$0xff]
    %v1175 = vld [vmem:[%s4 + $0xb80] sm:$0xff]
    %v1176 = vld [vmem:[%s4 + $0xb88] sm:$0xff]
    %v1177 = vld [vmem:[%s4 + $0xb90] sm:$0xff]
    %v1178 = vld [vmem:[%s4 + $0xb98] sm:$0xff]
    %v1179 = vld [vmem:[%s4 + $0xba0] sm:$0xff]
    %v1180 = vld [vmem:[%s4 + $0xba8] sm:$0xff]
    %v1181 = vld [vmem:[%s4 + $0xbb0] sm:$0xff]
    %v1182 = vld [vmem:[%s4 + $0xbb8] sm:$0xff]
    %v1183 = vld [vmem:[%s4 + $0xbc0] sm:$0xff]
    %v1184 = vld [vmem:[%s4 + $0xbc8] sm:$0xff]
    %v1185 = vld [vmem:[%s4 + $0xbd0] sm:$0xff]
    %v1186 = vld [vmem:[%s4 + $0xbd8] sm:$0xff]
    %v1187 = vld [vmem:[%s4 + $0xbe0] sm:$0xff]
    %v1188 = vld [vmem:[%s4 + $0xbe8] sm:$0xff]
    %v1189 = vld [vmem:[%s4 + $0xbf0] sm:$0xff]
    %v1190 = vld [vmem:[%s4 + $0xbf8] sm:$0xff]
    %v1191 = vld [vmem:[%s4 + $0xc00] sm:$0xff]
    %v1192 = vld [vmem:[%s4 + $0xc08] sm:$0xff]
    %v1193 = vld [vmem:[%s4 + $0xc10] sm:$0xff]
    %v1194 = vld [vmem:[%s4 + $0xc18] sm:$0xff]
    %v1195 = vld [vmem:[%s4 + $0xc20] sm:$0xff]
    %v1196 = vld [vmem:[%s4 + $0xc28] sm:$0xff]
    %v1197 = vld [vmem:[%s4 + $0xc30] sm:$0xff]
    %v1198 = vld [vmem:[%s4 + $0xc38] sm:$0xff]
    %v1199 = vld [vmem:[%s4 + $0xc40] sm:$0xff]
    %v1200 = vld [vmem:[%s4 + $0xc48] sm:$0xff]
    %v1201 = vld [vmem:[%s4 + $0xc50] sm:$0xff]
    %v1202 = vld [vmem:[%s4 + $0xc58] sm:$0xff]
    %v1203 = vld [vmem:[%s4 + $0xc60] sm:$0xff]
    %v1204 = vld [vmem:[%s4 + $0xc68] sm:$0xff]
    %v1205 = vld [vmem:[%s4 + $0xc70] sm:$0xff]
    %v1206 = vld [vmem:[%s4 + $0xc78] sm:$0xff]
    %1207 = vmatprep.subr.mxu0 0.0
    %1208 = vmatpush1.msra.mxu0 %v807
    %1209 = vmatprep.subr.mxu0 0.0
    %1210 = vmatpush1.msra.mxu0 %v808
    %1211 = vmatprep.subr.mxu0 0.0
    %1212 = vmatpush1.msra.mxu0 %v809
    %1213 = vmatprep.subr.mxu0 0.0
    %1214 = vmatpush1.msra.mxu0 %v810
    %1215 = vmatprep.subr.mxu0 0.0
    %1216 = vmatpush1.msra.mxu0 %v811
    %1217 = vmatprep.subr.mxu0 0.0
    %1218 = vmatpush1.msra.mxu0 %v812
    %1219 = vmatprep.subr.mxu0 0.0
    %1220 = vmatpush1.msra.mxu0 %v813
    %1221 = vmatprep.subr.mxu0 0.0
    %1222 = vmatpush1.msra.mxu0 %v814
    %1223 = vmatprep.subr.mxu0 0.0
    %1224 = vmatpush1.msra.mxu0 %v815
    %1225 = vmatprep.subr.mxu0 0.0
    %1226 = vmatpush1.msra.mxu0 %v816
    %1227 = vmatprep.subr.mxu0 0.0
    %1228 = vmatpush1.msra.mxu0 %v817
    %1229 = vmatprep.subr.mxu0 0.0
    %1230 = vmatpush1.msra.mxu0 %v818
    %1231 = vmatprep.subr.mxu0 0.0
    %1232 = vmatpush1.msra.mxu0 %v819
    %1233 = vmatprep.subr.mxu0 0.0
    %1234 = vmatpush1.msra.mxu0 %v820
    %1235 = vmatprep.subr.mxu0 0.0
    %1236 = vmatpush1.msra.mxu0 %v821
    %1237 = vmatprep.subr.mxu0 0.0
    %1238 = vmatpush1.msra.mxu0 %v822
    %1239 = vmatprep.subr.mxu0 0.0
    %1240 = vmatpush1.msra.mxu0 %v823
    %1241 = vmatprep.subr.mxu0 0.0
    %1242 = vmatpush1.msra.mxu0 %v824
    %1243 = vmatprep.subr.mxu0 0.0
    %1244 = vmatpush1.msra.mxu0 %v825
    %1245 = vmatprep.subr.mxu0 0.0
    %1246 = vmatpush1.msra.mxu0 %v826
    %1247 = vmatprep.subr.mxu0 0.0
    %1248 = vmatpush1.msra.mxu0 %v827
    %1249 = vmatprep.subr.mxu0 0.0
    %1250 = vmatpush1.msra.mxu0 %v828
    %1251 = vmatprep.subr.mxu0 0.0
    %1252 = vmatpush1.msra.mxu0 %v829
    %1253 = vmatprep.subr.mxu0 0.0
    %1254 = vmatpush1.msra.mxu0 %v830
    %1255 = vmatprep.subr.mxu0 0.0
    %1256 = vmatpush1.msra.mxu0 %v831
    %1257 = vmatprep.subr.mxu0 0.0
    %1258 = vmatpush1.msra.mxu0 %v832
    %1259 = vmatprep.subr.mxu0 0.0
    %1260 = vmatpush1.msra.mxu0 %v833
    %1261 = vmatprep.subr.mxu0 0.0
    %1262 = vmatpush1.msra.mxu0 %v834
    %1263 = vmatprep.subr.mxu0 0.0
    %1264 = vmatpush1.msra.mxu0 %v835
    %1265 = vmatprep.subr.mxu0 0.0
    %1266 = vmatpush1.msra.mxu0 %v836
    %1267 = vmatprep.subr.mxu0 0.0
    %1268 = vmatpush1.msra.mxu0 %v837
    %1269 = vmatprep.subr.mxu0 0.0
    %1270 = vmatpush1.msra.mxu0 %v838
    %1271 = vmatprep.mubr.f32.mxu0 %v597
    %1272 = vmatmul.mubr.f32.gmra.mrb[0].mxu0 %v596
    %v1273 = vpop.f32.mrb[0].mxu0
    %v1274 = vadd.f32 0.0, %v1273
    %v1275 = vpop.f32.mrb[0].mxu0
    %1276 = vmatprep.mubr.f32.mxu0 %v598
    %1277 = vmatmul.mubr.f32.gmra.mrb[0].mxu0 %v597
    %v1278 = vpop.f32.mrb[0].mxu0
    %v1279 = vadd.f32 0.0, %v1278
    %v1280 = vpop.f32.mrb[0].mxu0
    %1281 = vmatprep.mubr.f32.mxu0 %v599
    %1282 = vmatmul.mubr.f32.gmra.mrb[0].mxu0 %v598
    %v1283 = vpop.f32.mrb[0].mxu0
    %v1284 = vadd.f32 0.0, %v1283
    %v1285 = vpop.f32.mrb[0].mxu0
    %1286 = vmatprep.mubr.f32.mxu0 %v600
    %1287 = vmatmul.mubr.f32.gmra.mrb[0].mxu0 %v599
    %v1288 = vpop.f32.mrb[0].mxu0
    %v1289 = vadd.f32 0.0, %v1288
    %v1290 = vpop.f32.mrb[0].mxu0
    %1291 = vdwg.mxu0
    %1292 = vmatprep.subr.mxu0 0.0
    %1293 = vmatpush1.msra.mxu0 %v839
    %1294 = vmatprep.subr.mxu0 0.0
    %1295 = vmatpush1.msra.mxu0 %v840
    %1296 = vmatprep.subr.mxu0 0.0
    %1297 = vmatpush1.msra.mxu0 %v841
    %1298 = vmatprep.subr.mxu0 0.0
    %1299 = vmatpush1.msra.mxu0 %v842
    %1300 = vmatprep.subr.mxu0 0.0
    %1301 = vmatpush1.msra.mxu0 %v843
    %1302 = vmatprep.subr.mxu0 0.0
    %1303 = vmatpush1.msra.mxu0 %v844
    %1304 = vmatprep.subr.mxu0 0.0
    %1305 = vmatpush1.msra.mxu0 %v845
    %1306 = vmatprep.subr.mxu0 0.0
    %1307 = vmatpush1.msra.mxu0 %v846
    %1308 = vmatprep.subr.mxu0 0.0
    %1309 = vmatpush1.msra.mxu0 %v847
    %1310 = vmatprep.subr.mxu0 0.0
    %1311 = vmatpush1.msra.mxu0 %v848
    %1312 = vmatprep.subr.mxu0 0.0
    %1313 = vmatpush1.msra.mxu0 %v849
    %1314 = vmatprep.subr.mxu0 0.0
    %1315 = vmatpush1.msra.mxu0 %v850
    %1316 = vmatprep.subr.mxu0 0.0
    %1317 = vmatpush1.msra.mxu0 %v851
    %1318 = vmatprep.subr.mxu0 0.0
    %1319 = vmatpush1.msra.mxu0 %v852
    %1320 = vmatprep.subr.mxu0 0.0
    %1321 = vmatpush1.msra.mxu0 %v853
    %1322 = vmatprep.subr.mxu0 0.0
    %1323 = vmatpush1.msra.mxu0 %v854
    %1324 = vmatprep.subr.mxu0 0.0
    %1325 = vmatpush1.msra.mxu0 %v855
    %1326 = vmatprep.subr.mxu0 0.0
    %1327 = vmatpush1.msra.mxu0 %v856
    %1328 = vmatprep.subr.mxu0 0.0
    %1329 = vmatpush1.msra.mxu0 %v857
    %1330 = vmatprep.subr.mxu0 0.0
    %1331 = vmatpush1.msra.mxu0 %v858
    %1332 = vmatprep.subr.mxu0 0.0
    %1333 = vmatpush1.msra.mxu0 %v859
    %1334 = vmatprep.subr.mxu0 0.0
    %1335 = vmatpush1.msra.mxu0 %v860
    %1336 = vmatprep.subr.mxu0 0.0
    %1337 = vmatpush1.msra.mxu0 %v861
    %1338 = vmatprep.subr.mxu0 0.0
    %1339 = vmatpush1.msra.mxu0 %v862
    %1340 = vmatprep.subr.mxu0 0.0
    %1341 = vmatpush1.msra.mxu0 %v863
    %1342 = vmatprep.subr.mxu0 0.0
    %1343 = vmatpush1.msra.mxu0 %v864
    %1344 = vmatprep.subr.mxu0 0.0
    %1345 = vmatpush1.msra.mxu0 %v865
    %1346 = vmatprep.subr.mxu0 0.0
    %1347 = vmatpush1.msra.mxu0 %v866
    %1348 = vmatprep.subr.mxu0 0.0
    %1349 = vmatpush1.msra.mxu0 %v867
    %1350 = vmatprep.subr.mxu0 0.0
    %1351 = vmatpush1.msra.mxu0 %v868
    %1352 = vmatprep.subr.mxu0 0.0
    %1353 = vmatpush1.msra.mxu0 %v869
    %1354 = vmatprep.subr.mxu0 0.0
    %1355 = vmatpush1.msra.mxu0 %v870
    %1356 = vmatprep.mubr.f32.mxu0 %v599
    %1357 = vmatmul.mubr.f32.gmra.mrb[0].mxu0 %v598
    %v1358 = vpop.f32.mrb[0].mxu0
    %v1359 = vadd.f32 %v1274, %v1358
    %v1360 = vpop.f32.mrb[0].mxu0
    %1361 = vmatprep.mubr.f32.mxu0 %v600
    %1362 = vmatmul.mubr.f32.gmra.mrb[0].mxu0 %v599
    %v1363 = vpop.f32.mrb[0].mxu0
    %v1364 = vadd.f32 %v1279, %v1363
    %v1365 = vpop.f32.mrb[0].mxu0
    %1366 = vmatprep.mubr.f32.mxu0 %v601
    %1367 = vmatmul.mubr.f32.gmra.mrb[0].mxu0 %v600
    %v1368 = vpop.f32.mrb[0].mxu0
    %v1369 = vadd.f32 %v1284, %v1368
    %v1370 = vpop.f32.mrb[0].mxu0
    %1371 = vmatprep.mubr.f32.mxu0 %v602
    %1372 = vmatmul.mubr.f32.gmra.mrb[0].mxu0 %v601
    %v1373 = vpop.f32.mrb[0].mxu0
    %v1374 = vadd.f32 %v1289, %v1373
    %v1375 = vpop.f32.mrb[0].mxu0
    %1376 = vdwg.mxu0
    %1377 = vmatprep.subr.mxu0 0.0
    %1378 = vmatpush1.msra.mxu0 %v871
    %1379 = vmatprep.subr.mxu0 0.0
    %1380 = vmatpush1.msra.mxu0 %v872
    %1381 = vmatprep.subr.mxu0 0.0
    %1382 = vmatpush1.msra.mxu0 %v873
    %1383 = vmatprep.subr.mxu0 0.0
    %1384 = vmatpush1.msra.mxu0 %v874
    %1385 = vmatprep.subr.mxu0 0.0
    %1386 = vmatpush1.msra.mxu0 %v875
    %1387 = vmatprep.subr.mxu0 0.0
    %1388 = vmatpush1.msra.mxu0 %v876
    %1389 = vmatprep.subr.mxu0 0.0
    %1390 = vmatpush1.msra.mxu0 %v877
    %1391 = vmatprep.subr.mxu0 0.0
    %1392 = vmatpush1.msra.mxu0 %v878
    %1393 = vmatprep.subr.mxu0 0.0
    %1394 = vmatpush1.msra.mxu0 %v879
    %1395 = vmatprep.subr.mxu0 0.0
    %1396 = vmatpush1.msra.mxu0 %v880
    %1397 = vmatprep.subr.mxu0 0.0
    %1398 = vmatpush1.msra.mxu0 %v881
    %1399 = vmatprep.subr.mxu0 0.0
    %1400 = vmatpush1.msra.mxu0 %v882
    %1401 = vmatprep.subr.mxu0 0.0
    %1402 = vmatpush1.msra.mxu0 %v883
    %1403 = vmatprep.subr.mxu0 0.0
    %1404 = vmatpush1.msra.mxu0 %v884
    %1405 = vmatprep.subr.mxu0 0.0
    %1406 = vmatpush1.msra.mxu0 %v885
    %1407 = vmatprep.subr.mxu0 0.0
    %1408 = vmatpush1.msra.mxu0 %v886
    %1409 = vmatprep.subr.mxu0 0.0
    %1410 = vmatpush1.msra.mxu0 %v887
    %1411 = vmatprep.subr.mxu0 0.0
    %1412 = vmatpush1.msra.mxu0 %v888
    %1413 = vmatprep.subr.mxu0 0.0
    %1414 = vmatpush1.msra.mxu0 %v889
    %1415 = vmatprep.subr.mxu0 0.0
    %1416 = vmatpush1.msra.mxu0 %v890
    %1417 = vmatprep.subr.mxu0 0.0
    %1418 = vmatpush1.msra.mxu0 %v891
    %1419 = vmatprep.subr.mxu0 0.0
    %1420 = vmatpush1.msra.mxu0 %v892
    %1421 = vmatprep.subr.mxu0 0.0
    %1422 = vmatpush1.msra.mxu0 %v893
    %1423 = vmatprep.subr.mxu0 0.0
    %1424 = vmatpush1.msra.mxu0 %v894
    %1425 = vmatprep.subr.mxu0 0.0
    %1426 = vmatpush1.msra.mxu0 %v895
    %1427 = vmatprep.subr.mxu0 0.0
    %1428 = vmatpush1.msra.mxu0 %v896
    %1429 = vmatprep.subr.mxu0 0.0
    %1430 = vmatpush1.msra.mxu0 %v897
    %1431 = vmatprep.subr.mxu0 0.0
    %1432 = vmatpush1.msra.mxu0 %v898
    %1433 = vmatprep.subr.mxu0 0.0
    %1434 = vmatpush1.msra.mxu0 %v899
    %1435 = vmatprep.subr.mxu0 0.0
    %1436 = vmatpush1.msra.mxu0 %v900
    %1437 = vmatprep.subr.mxu0 0.0
    %1438 = vmatpush1.msra.mxu0 %v901
    %1439 = vmatprep.subr.mxu0 0.0
    %1440 = vmatpush1.msra.mxu0 %v902
    %1441 = vmatprep.mubr.f32.mxu0 %v625
    %1442 = vmatmul.mubr.f32.gmra.mrb[0].mxu0 %v600
    %v1443 = vpop.f32.mrb[0].mxu0
    %v1444 = vadd.f32 %v1359, %v1443
    %v1445 = vpop.f32.mrb[0].mxu0
    %1446 = vmatprep.mubr.f32.mxu0 %v631
    %1447 = vmatmul.mubr.f32.gmra.mrb[0].mxu0 %v601
    %v1448 = vpop.f32.mrb[0].mxu0
    %v1449 = vadd.f32 %v1364, %v1448
    %v1450 = vpop.f32.mrb[0].mxu0
    %1451 = vmatprep.mubr.f32.mxu0 %v637
    %1452 = vmatmul.mubr.f32.gmra.mrb[0].mxu0 %v602
    %v1453 = vpop.f32.mrb[0].mxu0
    %v1454 = vadd.f32 %v1369, %v1453
    %v1455 = vpop.f32.mrb[0].mxu0
    %1456 = vmatprep.mubr.f32.mxu0 %v643
    %1457 = vmatmul.mubr.f32.gmra.mrb[0].mxu0 %v603
    %v1458 = vpop.f32.mrb[0].mxu0
    %v1459 = vadd.f32 %v1374, %v1458
    %v1460 = vpop.f32.mrb[0].mxu0
    %1461 = vdwg.mxu0
    %1462 = vmatprep.subr.mxu0 0.0
    %1463 = vmatpush1.msra.mxu0 %v903
    %1464 = vmatprep.subr.mxu0 0.0
    %1465 = vmatpush1.msra.mxu0 %v904
    %1466 = vmatprep.subr.mxu0 0.0
    %1467 = vmatpush1.msra.mxu0 %v905
    %1468 = vmatprep.subr.mxu0 0.0
    %1469 = vmatpush1.msra.mxu0 %v906
    %1470 = vmatprep.subr.mxu0 0.0
    %1471 = vmatpush1.msra.mxu0 %v907
    %1472 = vmatprep.subr.mxu0 0.0
    %1473 = vmatpush1.msra.mxu0 %v908
    %1474 = vmatprep.subr.mxu0 0.0
    %1475 = vmatpush1.msra.mxu0 %v909
    %1476 = vmatprep.subr.mxu0 0.0
    %1477 = vmatpush1.msra.mxu0 %v910
    %1478 = vmatprep.subr.mxu0 0.0
    %1479 = vmatpush1.msra.mxu0 %v911
    %1480 = vmatprep.subr.mxu0 0.0
    %1481 = vmatpush1.msra.mxu0 %v912
    %1482 = vmatprep.subr.mxu0 0.0
    %1483 = vmatpush1.msra.mxu0 %v913
    %1484 = vmatprep.subr.mxu0 0.0
    %1485 = vmatpush1.msra.mxu0 %v914
    %1486 = vmatprep.subr.mxu0 0.0
    %1487 = vmatpush1.msra.mxu0 %v915
    %1488 = vmatprep.subr.mxu0 0.0
    %1489 = vmatpush1.msra.mxu0 %v916
    %1490 = vmatprep.subr.mxu0 0.0
    %1491 = vmatpush1.msra.mxu0 %v917
    %1492 = vmatprep.subr.mxu0 0.0
    %1493 = vmatpush1.msra.mxu0 %v918
    %1494 = vmatprep.subr.mxu0 0.0
    %1495 = vmatpush1.msra.mxu0 %v919
    %1496 = vmatprep.subr.mxu0 0.0
    %1497 = vmatpush1.msra.mxu0 %v920
    %1498 = vmatprep.subr.mxu0 0.0
    %1499 = vmatpush1.msra.mxu0 %v921
    %1500 = vmatprep.subr.mxu0 0.0
    %1501 = vmatpush1.msra.mxu0 %v922
    %1502 = vmatprep.subr.mxu0 0.0
    %1503 = vmatpush1.msra.mxu0 %v923
    %1504 = vmatprep.subr.mxu0 0.0
    %1505 = vmatpush1.msra.mxu0 %v924
    %1506 = vmatprep.subr.mxu0 0.0
    %1507 = vmatpush1.msra.mxu0 %v925
    %1508 = vmatprep.subr.mxu0 0.0
    %1509 = vmatpush1.msra.mxu0 %v926
    %1510 = vmatprep.subr.mxu0 0.0
    %1511 = vmatpush1.msra.mxu0 %v927
    %1512 = vmatprep.subr.mxu0 0.0
    %1513 = vmatpush1.msra.mxu0 %v928
    %1514 = vmatprep.subr.mxu0 0.0
    %1515 = vmatpush1.msra.mxu0 %v929
    %1516 = vmatprep.subr.mxu0 0.0
    %1517 = vmatpush1.msra.mxu0 %v930
    %1518 = vmatprep.subr.mxu0 0.0
    %1519 = vmatpush1.msra.mxu0 %v931
    %1520 = vmatprep.subr.mxu0 0.0
    %1521 = vmatpush1.msra.mxu0 %v932
    %1522 = vmatprep.subr.mxu0 0.0
    %1523 = vmatpush1.msra.mxu0 %v933
    %1524 = vmatprep.subr.mxu0 0.0
    %1525 = vmatpush1.msra.mxu0 %v934
    %1526 = vmatprep.mubr.f32.mxu0 %v637
    %1527 = vmatmul.mubr.f32.gmra.mrb[0].mxu0 %v631
    %v1528 = vpop.f32.mrb[0].mxu0
    %v1529 = vadd.f32 %v1444, %v1528
    %v1530 = vpop.f32.mrb[0].mxu0
    %1531 = vmatprep.mubr.f32.mxu0 %v643
    %1532 = vmatmul.mubr.f32.gmra.mrb[0].mxu0 %v637
    %v1533 = vpop.f32.mrb[0].mxu0
    %v1534 = vadd.f32 %v1449, %v1533
    %v1535 = vpop.f32.mrb[0].mxu0
    %1536 = vmatprep.mubr.f32.mxu0 %v649
    %1537 = vmatmul.mubr.f32.gmra.mrb[0].mxu0 %v643
    %v1538 = vpop.f32.mrb[0].mxu0
    %v1539 = vadd.f32 %v1454, %v1538
    %v1540 = vpop.f32.mrb[0].mxu0
    %1541 = vmatprep.mubr.f32.mxu0 %v655
    %1542 = vmatmul.mubr.f32.gmra.mrb[0].mxu0 %v649
    %v1543 = vpop.f32.mrb[0].mxu0
    %v1544 = vadd.f32 %v1459, %v1543
    %v1545 = vpop.f32.mrb[0].mxu0
    %1546 = vdwg.mxu0
    %1547 = vmatprep.subr.mxu0 0.0
    %1548 = vmatpush1.msra.mxu0 %v935
    %1549 = vmatprep.subr.mxu0 0.0
    %1550 = vmatpush1.msra.mxu0 %v936
    %1551 = vmatprep.subr.mxu0 0.0
    %1552 = vmatpush1.msra.mxu0 %v937
    %1553 = vmatprep.subr.mxu0 0.0
    %1554 = vmatpush1.msra.mxu0 %v938
    %1555 = vmatprep.subr.mxu0 0.0
    %1556 = vmatpush1.msra.mxu0 %v939
    %1557 = vmatprep.subr.mxu0 0.0
    %1558 = vmatpush1.msra.mxu0 %v940
    %1559 = vmatprep.subr.mxu0 0.0
    %1560 = vmatpush1.msra.mxu0 %v941
    %1561 = vmatprep.subr.mxu0 0.0
    %1562 = vmatpush1.msra.mxu0 %v942
    %1563 = vmatprep.subr.mxu0 0.0
    %1564 = vmatpush1.msra.mxu0 %v943
    %1565 = vmatprep.subr.mxu0 0.0
    %1566 = vmatpush1.msra.mxu0 %v944
    %1567 = vmatprep.subr.mxu0 0.0
    %1568 = vmatpush1.msra.mxu0 %v945
    %1569 = vmatprep.subr.mxu0 0.0
    %1570 = vmatpush1.msra.mxu0 %v946
    %1571 = vmatprep.subr.mxu0 0.0
    %1572 = vmatpush1.msra.mxu0 %v947
    %1573 = vmatprep.subr.mxu0 0.0
    %1574 = vmatpush1.msra.mxu0 %v948
    %1575 = vmatprep.subr.mxu0 0.0
    %1576 = vmatpush1.msra.mxu0 %v949
    %1577 = vmatprep.subr.mxu0 0.0
    %1578 = vmatpush1.msra.mxu0 %v950
    %1579 = vmatprep.subr.mxu0 0.0
    %1580 = vmatpush1.msra.mxu0 %v951
    %1581 = vmatprep.subr.mxu0 0.0
    %1582 = vmatpush1.msra.mxu0 %v952
    %1583 = vmatprep.subr.mxu0 0.0
    %1584 = vmatpush1.msra.mxu0 %v953
    %1585 = vmatprep.subr.mxu0 0.0
    %1586 = vmatpush1.msra.mxu0 %v954
    %1587 = vmatprep.subr.mxu0 0.0
    %1588 = vmatpush1.msra.mxu0 %v955
    %1589 = vmatprep.subr.mxu0 0.0
    %1590 = vmatpush1.msra.mxu0 %v956
    %1591 = vmatprep.subr.mxu0 0.0
    %1592 = vmatpush1.msra.mxu0 %v957
    %1593 = vmatprep.subr.mxu0 0.0
    %1594 = vmatpush1.msra.mxu0 %v958
    %1595 = vmatprep.subr.mxu0 0.0
    %1596 = vmatpush1.msra.mxu0 %v959
    %1597 = vmatprep.subr.mxu0 0.0
    %1598 = vmatpush1.msra.mxu0 %v960
    %1599 = vmatprep.subr.mxu0 0.0
    %1600 = vmatpush1.msra.mxu0 %v961
    %1601 = vmatprep.subr.mxu0 0.0
    %1602 = vmatpush1.msra.mxu0 %v962
    %1603 = vmatprep.subr.mxu0 0.0
    %1604 = vmatpush1.msra.mxu0 %v963
    %1605 = vmatprep.subr.mxu0 0.0
    %1606 = vmatpush1.msra.mxu0 %v964
    %1607 = vmatprep.subr.mxu0 0.0
    %1608 = vmatpush1.msra.mxu0 %v965
    %1609 = vmatprep.subr.mxu0 0.0
    %1610 = vmatpush1.msra.mxu0 %v966
    %1611 = vmatprep.mubr.f32.mxu0 %v649
    %1612 = vmatmul.mubr.f32.gmra.mrb[0].mxu0 %v643
    %v1613 = vpop.f32.mrb[0].mxu0
    %v1614 = vadd.f32 %v1529, %v1613
    %v1615 = vpop.f32.mrb[0].mxu0
    %1616 = vmatprep.mubr.f32.mxu0 %v655
    %1617 = vmatmul.mubr.f32.gmra.mrb[0].mxu0 %v649
    %v1618 = vpop.f32.mrb[0].mxu0
    %v1619 = vadd.f32 %v1534, %v1618
    %v1620 = vpop.f32.mrb[0].mxu0
    %1621 = vmatprep.mubr.f32.mxu0 %v661
    %1622 = vmatmul.mubr.f32.gmra.mrb[0].mxu0 %v655
    %v1623 = vpop.f32.mrb[0].mxu0
    %v1624 = vadd.f32 %v1539, %v1623
    %v1625 = vpop.f32.mrb[0].mxu0
    %1626 = vmatprep.mubr.f32.mxu0 %v667
    %1627 = vmatmul.mubr.f32.gmra.mrb[0].mxu0 %v661
    %v1628 = vpop.f32.mrb[0].mxu0
    %v1629 = vadd.f32 %v1544, %v1628
    %v1630 = vpop.f32.mrb[0].mxu0
    %1631 = vdwg.mxu0
    %1632 = vmatprep.subr.mxu0 0.0
    %1633 = vmatpush1.msra.mxu0 %v967
    %1634 = vmatprep.subr.mxu0 0.0
    %1635 = vmatpush1.msra.mxu0 %v968
    %1636 = vmatprep.subr.mxu0 0.0
    %1637 = vmatpush1.msra.mxu0 %v969
    %1638 = vmatprep.subr.mxu0 0.0
    %1639 = vmatpush1.msra.mxu0 %v970
    %1640 = vmatprep.subr.mxu0 0.0
    %1641 = vmatpush1.msra.mxu0 %v971
    %1642 = vmatprep.subr.mxu0 0.0
    %1643 = vmatpush1.msra.mxu0 %v972
    %1644 = vmatprep.subr.mxu0 0.0
    %1645 = vmatpush1.msra.mxu0 %v973
    %1646 = vmatprep.subr.mxu0 0.0
    %1647 = vmatpush1.msra.mxu0 %v974
    %1648 = vmatprep.subr.mxu0 0.0
    %1649 = vmatpush1.msra.mxu0 %v975
    %1650 = vmatprep.subr.mxu0 0.0
    %1651 = vmatpush1.msra.mxu0 %v976
    %1652 = vmatprep.subr.mxu0 0.0
    %1653 = vmatpush1.msra.mxu0 %v977
    %1654 = vmatprep.subr.mxu0 0.0
    %1655 = vmatpush1.msra.mxu0 %v978
    %1656 = vmatprep.subr.mxu0 0.0
    %1657 = vmatpush1.msra.mxu0 %v979
    %1658 = vmatprep.subr.mxu0 0.0
    %1659 = vmatpush1.msra.mxu0 %v980
    %1660 = vmatprep.subr.mxu0 0.0
    %1661 = vmatpush1.msra.mxu0 %v981
    %1662 = vmatprep.subr.mxu0 0.0
    %1663 = vmatpush1.msra.mxu0 %v982
    %1664 = vmatprep.subr.mxu0 0.0
    %1665 = vmatpush1.msra.mxu0 %v983
    %1666 = vmatprep.subr.mxu0 0.0
    %1667 = vmatpush1.msra.mxu0 %v984
    %1668 = vmatprep.subr.mxu0 0.0
    %1669 = vmatpush1.msra.mxu0 %v985
    %1670 = vmatprep.subr.mxu0 0.0
    %1671 = vmatpush1.msra.mxu0 %v986
    %1672 = vmatprep.subr.mxu0 0.0
    %1673 = vmatpush1.msra.mxu0 %v987
    %1674 = vmatprep.subr.mxu0 0.0
    %1675 = vmatpush1.msra.mxu0 %v988
    %1676 = vmatprep.subr.mxu0 0.0
    %1677 = vmatpush1.msra.mxu0 %v989
    %1678 = vmatprep.subr.mxu0 0.0
    %1679 = vmatpush1.msra.mxu0 %v990
    %1680 = vmatprep.subr.mxu0 0.0
    %1681 = vmatpush1.msra.mxu0 %v991
    %1682 = vmatprep.subr.mxu0 0.0
    %1683 = vmatpush1.msra.mxu0 %v992
    %1684 = vmatprep.subr.mxu0 0.0
    %1685 = vmatpush1.msra.mxu0 %v993
    %1686 = vmatprep.subr.mxu0 0.0
    %1687 = vmatpush1.msra.mxu0 %v994
    %1688 = vmatprep.subr.mxu0 0.0
    %1689 = vmatpush1.msra.mxu0 %v995
    %1690 = vmatprep.subr.mxu0 0.0
    %1691 = vmatpush1.msra.mxu0 %v996
    %1692 = vmatprep.subr.mxu0 0.0
    %1693 = vmatpush1.msra.mxu0 %v997
    %1694 = vmatprep.subr.mxu0 0.0
    %1695 = vmatpush1.msra.mxu0 %v998
    %1696 = vmatprep.mubr.f32.mxu0 %v696
    %1697 = vmatmul.mubr.f32.gmra.mrb[0].mxu0 %v690
    %v1698 = vpop.f32.mrb[0].mxu0
    %v1699 = vadd.f32 %v1614, %v1698
    %v1700 = vpop.f32.mrb[0].mxu0
    %1701 = vmatprep.mubr.f32.mxu0 %v702
    %1702 = vmatmul.mubr.f32.gmra.mrb[0].mxu0 %v696
    %v1703 = vpop.f32.mrb[0].mxu0
    %v1704 = vadd.f32 %v1619, %v1703
    %v1705 = vpop.f32.mrb[0].mxu0
    %1706 = vmatprep.mubr.f32.mxu0 %v708
    %1707 = vmatmul.mubr.f32.gmra.mrb[0].mxu0 %v702
    %v1708 = vpop.f32.mrb[0].mxu0
    %v1709 = vadd.f32 %v1624, %v1708
    %v1710 = vpop.f32.mrb[0].mxu0
    %1711 = vmatprep.mubr.f32.mxu0 %v714
    %1712 = vmatmul.mubr.f32.gmra.mrb[0].mxu0 %v708
    %v1713 = vpop.f32.mrb[0].mxu0
    %v1714 = vadd.f32 %v1629, %v1713
    %v1715 = vpop.f32.mrb[0].mxu0
    %1716 = vdwg.mxu0
    %1717 = vmatprep.subr.mxu0 0.0
    %1718 = vmatpush1.msra.mxu0 %v999
    %1719 = vmatprep.subr.mxu0 0.0
    %1720 = vmatpush1.msra.mxu0 %v1000
    %1721 = vmatprep.subr.mxu0 0.0
    %1722 = vmatpush1.msra.mxu0 %v1001
    %1723 = vmatprep.subr.mxu0 0.0
    %1724 = vmatpush1.msra.mxu0 %v1002
    %1725 = vmatprep.subr.mxu0 0.0
    %1726 = vmatpush1.msra.mxu0 %v1003
    %1727 = vmatprep.subr.mxu0 0.0
    %1728 = vmatpush1.msra.mxu0 %v1004
    %1729 = vmatprep.subr.mxu0 0.0
    %1730 = vmatpush1.msra.mxu0 %v1005
    %1731 = vmatprep.subr.mxu0 0.0
    %1732 = vmatpush1.msra.mxu0 %v1006
    %1733 = vmatprep.subr.mxu0 0.0
    %1734 = vmatpush1.msra.mxu0 %v1007
    %1735 = vmatprep.subr.mxu0 0.0
    %1736 = vmatpush1.msra.mxu0 %v1008
    %1737 = vmatprep.subr.mxu0 0.0
    %1738 = vmatpush1.msra.mxu0 %v1009
    %1739 = vmatprep.subr.mxu0 0.0
    %1740 = vmatpush1.msra.mxu0 %v1010
    %1741 = vmatprep.subr.mxu0 0.0
    %1742 = vmatpush1.msra.mxu0 %v1011
    %1743 = vmatprep.subr.mxu0 0.0
    %1744 = vmatpush1.msra.mxu0 %v1012
    %1745 = vmatprep.subr.mxu0 0.0
    %1746 = vmatpush1.msra.mxu0 %v1013
    %1747 = vmatprep.subr.mxu0 0.0
    %1748 = vmatpush1.msra.mxu0 %v1014
    %1749 = vmatprep.subr.mxu0 0.0
    %1750 = vmatpush1.msra.mxu0 %v1015
    %1751 = vmatprep.subr.mxu0 0.0
    %1752 = vmatpush1.msra.mxu0 %v1016
    %1753 = vmatprep.subr.mxu0 0.0
    %1754 = vmatpush1.msra.mxu0 %v1017
    %1755 = vmatprep.subr.mxu0 0.0
    %1756 = vmatpush1.msra.mxu0 %v1018
    %1757 = vmatprep.subr.mxu0 0.0
    %1758 = vmatpush1.msra.mxu0 %v1019
    %1759 = vmatprep.subr.mxu0 0.0
    %1760 = vmatpush1.msra.mxu0 %v1020
    %1761 = vmatprep.subr.mxu0 0.0
    %1762 = vmatpush1.msra.mxu0 %v1021
    %1763 = vmatprep.subr.mxu0 0.0
    %1764 = vmatpush1.msra.mxu0 %v1022
    %1765 = vmatprep.subr.mxu0 0.0
    %1766 = vmatpush1.msra.mxu0 %v1023
    %1767 = vmatprep.subr.mxu0 0.0
    %1768 = vmatpush1.msra.mxu0 %v1024
    %1769 = vmatprep.subr.mxu0 0.0
    %1770 = vmatpush1.msra.mxu0 %v1025
    %1771 = vmatprep.subr.mxu0 0.0
    %1772 = vmatpush1.msra.mxu0 %v1026
    %1773 = vmatprep.subr.mxu0 0.0
    %1774 = vmatpush1.msra.mxu0 %v1027
    %1775 = vmatprep.subr.mxu0 0.0
    %1776 = vmatpush1.msra.mxu0 %v1028
    %1777 = vmatprep.subr.mxu0 0.0
    %1778 = vmatpush1.msra.mxu0 %v1029
    %1779 = vmatprep.subr.mxu0 0.0
    %1780 = vmatpush1.msra.mxu0 %v1030
    %1781 = vmatprep.mubr.f32.mxu0 %v708
    %1782 = vmatmul.mubr.f32.gmra.mrb[0].mxu0 %v702
    %v1783 = vpop.f32.mrb[0].mxu0
    %v1784 = vadd.f32 %v1699, %v1783
    %v1785 = vpop.f32.mrb[0].mxu0
    %1786 = vmatprep.mubr.f32.mxu0 %v714
    %1787 = vmatmul.mubr.f32.gmra.mrb[0].mxu0 %v708
    %v1788 = vpop.f32.mrb[0].mxu0
    %v1789 = vadd.f32 %v1704, %v1788
    %v1790 = vpop.f32.mrb[0].mxu0
    %1791 = vmatprep.mubr.f32.mxu0 %v720
    %1792 = vmatmul.mubr.f32.gmra.mrb[0].mxu0 %v714
    %v1793 = vpop.f32.mrb[0].mxu0
    %v1794 = vadd.f32 %v1709, %v1793
    %v1795 = vpop.f32.mrb[0].mxu0
    %1796 = vmatprep.mubr.f32.mxu0 %v726
    %1797 = vmatmul.mubr.f32.gmra.mrb[0].mxu0 %v720
    %v1798 = vpop.f32.mrb[0].mxu0
    %v1799 = vadd.f32 %v1714, %v1798
    %v1800 = vpop.f32.mrb[0].mxu0
    %1801 = vdwg.mxu0
    %1802 = vmatprep.subr.mxu0 0.0
    %1803 = vmatpush1.msra.mxu0 %v1031
    %1804 = vmatprep.subr.mxu0 0.0
    %1805 = vmatpush1.msra.mxu0 %v1032
    %1806 = vmatprep.subr.mxu0 0.0
    %1807 = vmatpush1.msra.mxu0 %v1033
    %1808 = vmatprep.subr.mxu0 0.0
    %1809 = vmatpush1.msra.mxu0 %v1034
    %1810 = vmatprep.subr.mxu0 0.0
    %1811 = vmatpush1.msra.mxu0 %v1035
    %1812 = vmatprep.subr.mxu0 0.0
    %1813 = vmatpush1.msra.mxu0 %v1036
    %1814 = vmatprep.subr.mxu0 0.0
    %1815 = vmatpush1.msra.mxu0 %v1037
    %1816 = vmatprep.subr.mxu0 0.0
    %1817 = vmatpush1.msra.mxu0 %v1038
    %1818 = vmatprep.subr.mxu0 0.0
    %1819 = vmatpush1.msra.mxu0 %v1039
    %1820 = vmatprep.subr.mxu0 0.0
    %1821 = vmatpush1.msra.mxu0 %v1040
    %1822 = vmatprep.subr.mxu0 0.0
    %1823 = vmatpush1.msra.mxu0 %v1041
    %1824 = vmatprep.subr.mxu0 0.0
    %1825 = vmatpush1.msra.mxu0 %v1042
    %1826 = vmatprep.subr.mxu0 0.0
    %1827 = vmatpush1.msra.mxu0 %v1043
    %1828 = vmatprep.subr.mxu0 0.0
    %1829 = vmatpush1.msra.mxu0 %v1044
    %1830 = vmatprep.subr.mxu0 0.0
    %1831 = vmatpush1.msra.mxu0 %v1045
    %1832 = vmatprep.subr.mxu0 0.0
    %1833 = vmatpush1.msra.mxu0 %v1046
    %1834 = vmatprep.subr.mxu0 0.0
    %1835 = vmatpush1.msra.mxu0 %v1047
    %1836 = vmatprep.subr.mxu0 0.0
    %1837 = vmatpush1.msra.mxu0 %v1048
    %1838 = vmatprep.subr.mxu0 0.0
    %1839 = vmatpush1.msra.mxu0 %v1049
    %1840 = vmatprep.subr.mxu0 0.0
    %1841 = vmatpush1.msra.mxu0 %v1050
    %1842 = vmatprep.subr.mxu0 0.0
    %1843 = vmatpush1.msra.mxu0 %v1051
    %1844 = vmatprep.subr.mxu0 0.0
    %1845 = vmatpush1.msra.mxu0 %v1052
    %1846 = vmatprep.subr.mxu0 0.0
    %1847 = vmatpush1.msra.mxu0 %v1053
    %1848 = vmatprep.subr.mxu0 0.0
    %1849 = vmatpush1.msra.mxu0 %v1054
    %1850 = vmatprep.subr.mxu0 0.0
    %1851 = vmatpush1.msra.mxu0 %v1055
    %1852 = vmatprep.subr.mxu0 0.0
    %1853 = vmatpush1.msra.mxu0 %v1056
    %1854 = vmatprep.subr.mxu0 0.0
    %1855 = vmatpush1.msra.mxu0 %v1057
    %1856 = vmatprep.subr.mxu0 0.0
    %1857 = vmatpush1.msra.mxu0 %v1058
    %1858 = vmatprep.subr.mxu0 0.0
    %1859 = vmatpush1.msra.mxu0 %v1059
    %1860 = vmatprep.subr.mxu0 0.0
    %1861 = vmatpush1.msra.mxu0 %v1060
    %1862 = vmatprep.subr.mxu0 0.0
    %1863 = vmatpush1.msra.mxu0 %v1061
    %1864 = vmatprep.subr.mxu0 0.0
    %1865 = vmatpush1.msra.mxu0 %v1062
    %1866 = vmatprep.mubr.f32.mxu0 %v755
    %1867 = vmatmul.mubr.f32.gmra.mrb[0].mxu0 %v714
    %v1868 = vpop.f32.mrb[0].mxu0
    %v1869 = vadd.f32 %v1784, %v1868
    %v1870 = vpop.f32.mrb[0].mxu0
    %1871 = vmatprep.mubr.f32.mxu0 %v761
    %1872 = vmatmul.mubr.f32.gmra.mrb[0].mxu0 %v720
    %v1873 = vpop.f32.mrb[0].mxu0
    %v1874 = vadd.f32 %v1789, %v1873
    %v1875 = vpop.f32.mrb[0].mxu0
    %1876 = vmatprep.mubr.f32.mxu0 %v767
    %1877 = vmatmul.mubr.f32.gmra.mrb[0].mxu0 %v726
    %v1878 = vpop.f32.mrb[0].mxu0
    %v1879 = vadd.f32 %v1794, %v1878
    %v1880 = vpop.f32.mrb[0].mxu0
    %1881 = vmatprep.mubr.f32.mxu0 %v773
    %1882 = vmatmul.mubr.f32.gmra.mrb[0].mxu0 %v732
    %v1883 = vpop.f32.mrb[0].mxu0
    %v1884 = vadd.f32 %v1799, %v1883
    %v1885 = vpop.f32.mrb[0].mxu0
    %1886 = vdwg.mxu0
    %1887 = vmatprep.subr.mxu0 0.0
    %1888 = vmatpush1.msra.mxu0 %v1063
    %1889 = vmatprep.subr.mxu0 0.0
    %1890 = vmatpush1.msra.mxu0 %v1064
    %1891 = vmatprep.subr.mxu0 0.0
    %1892 = vmatpush1.msra.mxu0 %v1065
    %1893 = vmatprep.subr.mxu0 0.0
    %1894 = vmatpush1.msra.mxu0 %v1066
    %1895 = vmatprep.subr.mxu0 0.0
    %1896 = vmatpush1.msra.mxu0 %v1067
    %1897 = vmatprep.subr.mxu0 0.0
    %1898 = vmatpush1.msra.mxu0 %v1068
    %1899 = vmatprep.subr.mxu0 0.0
    %1900 = vmatpush1.msra.mxu0 %v1069
    %1901 = vmatprep.subr.mxu0 0.0
    %1902 = vmatpush1.msra.mxu0 %v1070
    %1903 = vmatprep.subr.mxu0 0.0
    %1904 = vmatpush1.msra.mxu0 %v1071
    %1905 = vmatprep.subr.mxu0 0.0
    %1906 = vmatpush1.msra.mxu0 %v1072
    %1907 = vmatprep.subr.mxu0 0.0
    %1908 = vmatpush1.msra.mxu0 %v1073
    %1909 = vmatprep.subr.mxu0 0.0
    %1910 = vmatpush1.msra.mxu0 %v1074
    %1911 = vmatprep.subr.mxu0 0.0
    %1912 = vmatpush1.msra.mxu0 %v1075
    %1913 = vmatprep.subr.mxu0 0.0
    %1914 = vmatpush1.msra.mxu0 %v1076
    %1915 = vmatprep.subr.mxu0 0.0
    %1916 = vmatpush1.msra.mxu0 %v1077
    %1917 = vmatprep.subr.mxu0 0.0
    %1918 = vmatpush1.msra.mxu0 %v1078
    %1919 = vmatprep.subr.mxu0 0.0
    %1920 = vmatpush1.msra.mxu0 %v1079
    %1921 = vmatprep.subr.mxu0 0.0
    %1922 = vmatpush1.msra.mxu0 %v1080
    %1923 = vmatprep.subr.mxu0 0.0
    %1924 = vmatpush1.msra.mxu0 %v1081
    %1925 = vmatprep.subr.mxu0 0.0
    %1926 = vmatpush1.msra.mxu0 %v1082
    %1927 = vmatprep.subr.mxu0 0.0
    %1928 = vmatpush1.msra.mxu0 %v1083
    %1929 = vmatprep.subr.mxu0 0.0
    %1930 = vmatpush1.msra.mxu0 %v1084
    %1931 = vmatprep.subr.mxu0 0.0
    %1932 = vmatpush1.msra.mxu0 %v1085
    %1933 = vmatprep.subr.mxu0 0.0
    %1934 = vmatpush1.msra.mxu0 %v1086
    %1935 = vmatprep.subr.mxu0 0.0
    %1936 = vmatpush1.msra.mxu0 %v1087
    %1937 = vmatprep.subr.mxu0 0.0
    %1938 = vmatpush1.msra.mxu0 %v1088
    %1939 = vmatprep.subr.mxu0 0.0
    %1940 = vmatpush1.msra.mxu0 %v1089
    %1941 = vmatprep.subr.mxu0 0.0
    %1942 = vmatpush1.msra.mxu0 %v1090
    %1943 = vmatprep.subr.mxu0 0.0
    %1944 = vmatpush1.msra.mxu0 %v1091
    %1945 = vmatprep.subr.mxu0 0.0
    %1946 = vmatpush1.msra.mxu0 %v1092
    %1947 = vmatprep.subr.mxu0 0.0
    %1948 = vmatpush1.msra.mxu0 %v1093
    %1949 = vmatprep.subr.mxu0 0.0
    %1950 = vmatpush1.msra.mxu0 %v1094
    %1951 = vmatprep.mubr.f32.mxu0 %v767
    %1952 = vmatmul.mubr.f32.gmra.mrb[0].mxu0 %v761
    %v1953 = vpop.f32.mrb[0].mxu0
    %v1954 = vadd.f32 %v1869, %v1953
    %v1955 = vpop.f32.mrb[0].mxu0
    %1956 = vmatprep.mubr.f32.mxu0 %v773
    %1957 = vmatmul.mubr.f32.gmra.mrb[0].mxu0 %v767
    %v1958 = vpop.f32.mrb[0].mxu0
    %v1959 = vadd.f32 %v1874, %v1958
    %v1960 = vpop.f32.mrb[0].mxu0
    %1961 = vmatprep.mubr.f32.mxu0 %v779
    %1962 = vmatmul.mubr.f32.gmra.mrb[0].mxu0 %v773
    %v1963 = vpop.f32.mrb[0].mxu0
    %v1964 = vadd.f32 %v1879, %v1963
    %v1965 = vpop.f32.mrb[0].mxu0
    %1966 = vmatprep.mubr.f32.mxu0 %v785
    %1967 = vmatmul.mubr.f32.gmra.mrb[0].mxu0 %v779
    %v1968 = vpop.f32.mrb[0].mxu0
    %v1969 = vadd.f32 %v1884, %v1968
    %v1970 = vpop.f32.mrb[0].mxu0
    %1971 = vdwg.mxu0
    %1972 = vmatprep.subr.mxu0 0.0
    %1973 = vmatpush1.msra.mxu0 %v1095
    %1974 = vmatprep.subr.mxu0 0.0
    %1975 = vmatpush1.msra.mxu0 %v1096
    %1976 = vmatprep.subr.mxu0 0.0
    %1977 = vmatpush1.msra.mxu0 %v1097
    %1978 = vmatprep.subr.mxu0 0.0
    %1979 = vmatpush1.msra.mxu0 %v1098
    %1980 = vmatprep.subr.mxu0 0.0
    %1981 = vmatpush1.msra.mxu0 %v1099
    %1982 = vmatprep.subr.mxu0 0.0
    %1983 = vmatpush1.msra.mxu0 %v1100
    %1984 = vmatprep.subr.mxu0 0.0
    %1985 = vmatpush1.msra.mxu0 %v1101
    %1986 = vmatprep.subr.mxu0 0.0
    %1987 = vmatpush1.msra.mxu0 %v1102
    %1988 = vmatprep.subr.mxu0 0.0
    %1989 = vmatpush1.msra.mxu0 %v1103
    %1990 = vmatprep.subr.mxu0 0.0
    %1991 = vmatpush1.msra.mxu0 %v1104
    %1992 = vmatprep.subr.mxu0 0.0
    %1993 = vmatpush1.msra.mxu0 %v1105
    %1994 = vmatprep.subr.mxu0 0.0
    %1995 = vmatpush1.msra.mxu0 %v1106
    %1996 = vmatprep.subr.mxu0 0.0
    %1997 = vmatpush1.msra.mxu0 %v1107
    %1998 = vmatprep.subr.mxu0 0.0
    %1999 = vmatpush1.msra.mxu0 %v1108
    %2000 = vmatprep.subr.mxu0 0.0
    %2001 = vmatpush1.msra.mxu0 %v1109
    %2002 = vmatprep.subr.mxu0 0.0
    %2003 = vmatpush1.msra.mxu0 %v1110
    %2004 = vmatprep.subr.mxu0 0.0
    %2005 = vmatpush1.msra.mxu0 %v1111
    %2006 = vmatprep.subr.mxu0 0.0
    %2007 = vmatpush1.msra.mxu0 %v1112
    %2008 = vmatprep.subr.mxu0 0.0
    %2009 = vmatpush1.msra.mxu0 %v1113
    %2010 = vmatprep.subr.mxu0 0.0
    %2011 = vmatpush1.msra.mxu0 %v1114
    %2012 = vmatprep.subr.mxu0 0.0
    %2013 = vmatpush1.msra.mxu0 %v1115
    %2014 = vmatprep.subr.mxu0 0.0
    %2015 = vmatpush1.msra.mxu0 %v1116
    %2016 = vmatprep.subr.mxu0 0.0
    %2017 = vmatpush1.msra.mxu0 %v1117
    %2018 = vmatprep.subr.mxu0 0.0
    %2019 = vmatpush1.msra.mxu0 %v1118
    %2020 = vmatprep.subr.mxu0 0.0
    %2021 = vmatpush1.msra.mxu0 %v1119
    %2022 = vmatprep.subr.mxu0 0.0
    %2023 = vmatpush1.msra.mxu0 %v1120
    %2024 = vmatprep.subr.mxu0 0.0
    %2025 = vmatpush1.msra.mxu0 %v1121
    %2026 = vmatprep.subr.mxu0 0.0
    %2027 = vmatpush1.msra.mxu0 %v1122
    %2028 = vmatprep.subr.mxu0 0.0
    %2029 = vmatpush1.msra.mxu0 %v1123
    %2030 = vmatprep.subr.mxu0 0.0
    %2031 = vmatpush1.msra.mxu0 %v1124
    %2032 = vmatprep.subr.mxu0 0.0
    %2033 = vmatpush1.msra.mxu0 %v1125
    %2034 = vmatprep.subr.mxu0 0.0
    %2035 = vmatpush1.msra.mxu0 %v1126
    %2036 = vmatprep.mubr.f32.mxu0 %v779
    %2037 = vmatmul.mubr.f32.gmra.mrb[0].mxu0 %v773
    %v2038 = vpop.f32.mrb[0].mxu0
    %v2039 = vadd.f32 %v1954, %v2038
    %v2040 = vpop.f32.mrb[0].mxu0
    %2041 = vmatprep.mubr.f32.mxu0 %v785
    %2042 = vmatmul.mubr.f32.gmra.mrb[0].mxu0 %v779
    %v2043 = vpop.f32.mrb[0].mxu0
    %v2044 = vadd.f32 %v1959, %v2043
    %v2045 = vpop.f32.mrb[0].mxu0
    %2046 = vmatprep.mubr.f32.mxu0 %v791
    %2047 = vmatmul.mubr.f32.gmra.mrb[0].mxu0 %v785
    %v2048 = vpop.f32.mrb[0].mxu0
    %v2049 = vadd.f32 %v1964, %v2048
    %v2050 = vpop.f32.mrb[0].mxu0
    %2051 = vmatprep.mubr.f32.mxu0 %v797
    %2052 = vmatmul.mubr.f32.gmra.mrb[0].mxu0 %v791
    %v2053 = vpop.f32.mrb[0].mxu0
    %v2054 = vadd.f32 %v1969, %v2053
    %v2055 = vpop.f32.mrb[0].mxu0
    %2056 = vdwg.mxu0
    %2057 = vmatprep.subr.mxu0 0.0
    %2058 = vmatpush1.msra.mxu0 %v1127
    %2059 = vmatprep.subr.mxu0 0.0
    %2060 = vmatpush1.msra.mxu0 %v1128
    %2061 = vmatprep.subr.mxu0 0.0
    %2062 = vmatpush1.msra.mxu0 %v1129
    %2063 = vmatprep.subr.mxu0 0.0
    %2064 = vmatpush1.msra.mxu0 %v1130
    %2065 = vmatprep.subr.mxu0 0.0
    %2066 = vmatpush1.msra.mxu0 %v1131
    %2067 = vmatprep.subr.mxu0 0.0
    %2068 = vmatpush1.msra.mxu0 %v1132
    %2069 = vmatprep.subr.mxu0 0.0
    %2070 = vmatpush1.msra.mxu0 %v1133
    %2071 = vmatprep.subr.mxu0 0.0
    %2072 = vmatpush1.msra.mxu0 %v1134
    %2073 = vmatprep.subr.mxu0 0.0
    %2074 = vmatpush1.msra.mxu0 %v1135
    %2075 = vmatprep.subr.mxu0 0.0
    %2076 = vmatpush1.msra.mxu0 %v1136
    %2077 = vmatprep.subr.mxu0 0.0
    %2078 = vmatpush1.msra.mxu0 %v1137
    %2079 = vmatprep.subr.mxu0 0.0
    %2080 = vmatpush1.msra.mxu0 %v1138
    %2081 = vmatprep.subr.mxu0 0.0
    %2082 = vmatpush1.msra.mxu0 %v1139
    %2083 = vmatprep.subr.mxu0 0.0
    %2084 = vmatpush1.msra.mxu0 %v1140
    %2085 = vmatprep.subr.mxu0 0.0
    %2086 = vmatpush1.msra.mxu0 %v1141
    %2087 = vmatprep.subr.mxu0 0.0
    %2088 = vmatpush1.msra.mxu0 %v1142
    %2089 = vmatprep.subr.mxu0 0.0
    %2090 = vmatpush1.msra.mxu0 %v1143
    %2091 = vmatprep.subr.mxu0 0.0
    %2092 = vmatpush1.msra.mxu0 %v1144
    %2093 = vmatprep.subr.mxu0 0.0
    %2094 = vmatpush1.msra.mxu0 %v1145
    %2095 = vmatprep.subr.mxu0 0.0
    %2096 = vmatpush1.msra.mxu0 %v1146
    %2097 = vmatprep.subr.mxu0 0.0
    %2098 = vmatpush1.msra.mxu0 %v1147
    %2099 = vmatprep.subr.mxu0 0.0
    %2100 = vmatpush1.msra.mxu0 %v1148
    %2101 = vmatprep.subr.mxu0 0.0
    %2102 = vmatpush1.msra.mxu0 %v1149
    %2103 = vmatprep.subr.mxu0 0.0
    %2104 = vmatpush1.msra.mxu0 %v1150
    %2105 = vmatprep.subr.mxu0 0.0
    %2106 = vmatpush1.msra.mxu0 %v1151
    %2107 = vmatprep.subr.mxu0 0.0
    %2108 = vmatpush1.msra.mxu0 %v1152
    %2109 = vmatprep.subr.mxu0 0.0
    %2110 = vmatpush1.msra.mxu0 %v1153
    %2111 = vmatprep.subr.mxu0 0.0
    %2112 = vmatpush1.msra.mxu0 %v1154
    %2113 = vmatprep.subr.mxu0 0.0
    %2114 = vmatpush1.msra.mxu0 %v1155
    %2115 = vmatprep.subr.mxu0 0.0
    %2116 = vmatpush1.msra.mxu0 %v1156
    %2117 = vmatprep.subr.mxu0 0.0
    %2118 = vmatpush1.msra.mxu0 %v1157
    %2119 = vmatprep.subr.mxu0 0.0
    %2120 = vmatpush1.msra.mxu0 %v1158
    %2121 = vmatprep.mubr.f32.mxu0 %v800
    %2122 = vmatmul.mubr.f32.gmra.mrb[0].mxu0 %v799
    %v2123 = vpop.f32.mrb[0].mxu0
    %v2124 = vadd.f32 %v2039, %v2123
    %v2125 = vpop.f32.mrb[0].mxu0
    %2126 = vmatprep.mubr.f32.mxu0 %v801
    %2127 = vmatmul.mubr.f32.gmra.mrb[0].mxu0 %v800
    %v2128 = vpop.f32.mrb[0].mxu0
    %v2129 = vadd.f32 %v2044, %v2128
    %v2130 = vpop.f32.mrb[0].mxu0
    %2131 = vmatprep.mubr.f32.mxu0 %v802
    %2132 = vmatmul.mubr.f32.gmra.mrb[0].mxu0 %v801
    %v2133 = vpop.f32.mrb[0].mxu0
    %v2134 = vadd.f32 %v2049, %v2133
    %v2135 = vpop.f32.mrb[0].mxu0
    %2136 = vmatprep.mubr.f32.mxu0 %v803
    %2137 = vmatmul.mubr.f32.gmra.mrb[0].mxu0 %v802
    %v2138 = vpop.f32.mrb[0].mxu0
    %v2139 = vadd.f32 %v2054, %v2138
    %v2140 = vpop.f32.mrb[0].mxu0
    %2141 = vdwg.mxu0
    %2142 = vmatprep.subr.mxu0 0.0
    %2143 = vmatpush1.msra.mxu0 %v1159
    %2144 = vmatprep.subr.mxu0 0.0
    %2145 = vmatpush1.msra.mxu0 %v1160
    %2146 = vmatprep.subr.mxu0 0.0
    %2147 = vmatpush1.msra.mxu0 %v1161
    %2148 = vmatprep.subr.mxu0 0.0
    %2149 = vmatpush1.msra.mxu0 %v1162
    %2150 = vmatprep.subr.mxu0 0.0
    %2151 = vmatpush1.msra.mxu0 %v1163
    %2152 = vmatprep.subr.mxu0 0.0
    %2153 = vmatpush1.msra.mxu0 %v1164
    %2154 = vmatprep.subr.mxu0 0.0
    %2155 = vmatpush1.msra.mxu0 %v1165
    %2156 = vmatprep.subr.mxu0 0.0
    %2157 = vmatpush1.msra.mxu0 %v1166
    %2158 = vmatprep.subr.mxu0 0.0
    %2159 = vmatpush1.msra.mxu0 %v1167
    %2160 = vmatprep.subr.mxu0 0.0
    %2161 = vmatpush1.msra.mxu0 %v1168
    %2162 = vmatprep.subr.mxu0 0.0
    %2163 = vmatpush1.msra.mxu0 %v1169
    %2164 = vmatprep.subr.mxu0 0.0
    %2165 = vmatpush1.msra.mxu0 %v1170
    %2166 = vmatprep.subr.mxu0 0.0
    %2167 = vmatpush1.msra.mxu0 %v1171
    %2168 = vmatprep.subr.mxu0 0.0
    %2169 = vmatpush1.msra.mxu0 %v1172
    %2170 = vmatprep.subr.mxu0 0.0
    %2171 = vmatpush1.msra.mxu0 %v1173
    %2172 = vmatprep.subr.mxu0 0.0
    %2173 = vmatpush1.msra.mxu0 %v1174
    %2174 = vmatprep.subr.mxu0 0.0
    %2175 = vmatpush1.msra.mxu0 %v1175
    %2176 = vmatprep.subr.mxu0 0.0
    %2177 = vmatpush1.msra.mxu0 %v1176
    %2178 = vmatprep.subr.mxu0 0.0
    %2179 = vmatpush1.msra.mxu0 %v1177
    %2180 = vmatprep.subr.mxu0 0.0
    %2181 = vmatpush1.msra.mxu0 %v1178
    %2182 = vmatprep.subr.mxu0 0.0
    %2183 = vmatpush1.msra.mxu0 %v1179
    %2184 = vmatprep.subr.mxu0 0.0
    %2185 = vmatpush1.msra.mxu0 %v1180
    %2186 = vmatprep.subr.mxu0 0.0
    %2187 = vmatpush1.msra.mxu0 %v1181
    %2188 = vmatprep.subr.mxu0 0.0
    %2189 = vmatpush1.msra.mxu0 %v1182
    %2190 = vmatprep.subr.mxu0 0.0
    %2191 = vmatpush1.msra.mxu0 %v1183
    %2192 = vmatprep.subr.mxu0 0.0
    %2193 = vmatpush1.msra.mxu0 %v1184
    %2194 = vmatprep.subr.mxu0 0.0
    %2195 = vmatpush1.msra.mxu0 %v1185
    %2196 = vmatprep.subr.mxu0 0.0
    %2197 = vmatpush1.msra.mxu0 %v1186
    %2198 = vmatprep.subr.mxu0 0.0
    %2199 = vmatpush1.msra.mxu0 %v1187
    %2200 = vmatprep.subr.mxu0 0.0
    %2201 = vmatpush1.msra.mxu0 %v1188
    %2202 = vmatprep.subr.mxu0 0.0
    %2203 = vmatpush1.msra.mxu0 %v1189
    %2204 = vmatprep.subr.mxu0 0.0
    %2205 = vmatpush1.msra.mxu0 %v1190
    %2206 = vmatprep.mubr.f32.mxu0 %v802
    %2207 = vmatmul.mubr.f32.gmra.mrb[0].mxu0 %v801
    %v2208 = vpop.f32.mrb[0].mxu0
    %v2209 = vadd.f32 %v2124, %v2208
    %v2210 = vpop.f32.mrb[0].mxu0
    %2211 = vmatprep.mubr.f32.mxu0 %v803
    %2212 = vmatmul.mubr.f32.gmra.mrb[0].mxu0 %v802
    %v2213 = vpop.f32.mrb[0].mxu0
    %v2214 = vadd.f32 %v2129, %v2213
    %v2215 = vpop.f32.mrb[0].mxu0
    %2216 = vmatprep.mubr.f32.mxu0 %v804
    %2217 = vmatmul.mubr.f32.gmra.mrb[0].mxu0 %v803
    %v2218 = vpop.f32.mrb[0].mxu0
    %v2219 = vadd.f32 %v2134, %v2218
    %v2220 = vpop.f32.mrb[0].mxu0
    %2221 = vmatprep.mubr.f32.mxu0 %v805
    %2222 = vmatmul.mubr.f32.gmra.mrb[0].mxu0 %v804
    %v2223 = vpop.f32.mrb[0].mxu0
    %v2224 = vadd.f32 %v2139, %v2223
    %v2225 = vpop.f32.mrb[0].mxu0
    %2226 = vdwg.mxu0
    %2227 = vmatprep.subr.mxu0 0.0
    %2228 = vmatpush1.msra.mxu0 %v1191
    %2229 = vmatprep.subr.mxu0 0.0
    %2230 = vmatpush1.msra.mxu0 %v1192
    %2231 = vmatprep.subr.mxu0 0.0
    %2232 = vmatpush1.msra.mxu0 %v1193
    %2233 = vmatprep.subr.mxu0 0.0
    %2234 = vmatpush1.msra.mxu0 %v1194
    %2235 = vmatprep.subr.mxu0 0.0
    %2236 = vmatpush1.msra.mxu0 %v1195
    %2237 = vmatprep.subr.mxu0 0.0
    %2238 = vmatpush1.msra.mxu0 %v1196
    %2239 = vmatprep.subr.mxu0 0.0
    %2240 = vmatpush1.msra.mxu0 %v1197
    %2241 = vmatprep.subr.mxu0 0.0
    %2242 = vmatpush1.msra.mxu0 %v1198
    %2243 = vmatprep.subr.mxu0 0.0
    %2244 = vmatpush1.msra.mxu0 %v1199
    %2245 = vmatprep.subr.mxu0 0.0
    %2246 = vmatpush1.msra.mxu0 %v1200
    %2247 = vmatprep.subr.mxu0 0.0
    %2248 = vmatpush1.msra.mxu0 %v1201
    %2249 = vmatprep.subr.mxu0 0.0
    %2250 = vmatpush1.msra.mxu0 %v1202
    %2251 = vmatprep.subr.mxu0 0.0
    %2252 = vmatpush1.msra.mxu0 %v1203
    %2253 = vmatprep.subr.mxu0 0.0
    %2254 = vmatpush1.msra.mxu0 %v1204
    %2255 = vmatprep.subr.mxu0 0.0
    %2256 = vmatpush1.msra.mxu0 %v1205
    %2257 = vmatprep.subr.mxu0 0.0
    %2258 = vmatpush1.msra.mxu0 %v1206
    %2259 = vmatprep.subr.mxu0 0.0
    %2260 = vmatpush1.msra.mxu0 0.0
    %2261 = vmatprep.subr.mxu0 0.0
    %2262 = vmatpush1.msra.mxu0 0.0
    %2263 = vmatprep.subr.mxu0 0.0
    %2264 = vmatpush1.msra.mxu0 0.0
    %2265 = vmatprep.subr.mxu0 0.0
    %2266 = vmatpush1.msra.mxu0 0.0
    %2267 = vmatprep.subr.mxu0 0.0
    %2268 = vmatpush1.msra.mxu0 0.0
    %2269 = vmatprep.subr.mxu0 0.0
    %2270 = vmatpush1.msra.mxu0 0.0
    %2271 = vmatprep.subr.mxu0 0.0
    %2272 = vmatpush1.msra.mxu0 0.0
    %2273 = vmatprep.subr.mxu0 0.0
    %2274 = vmatpush1.msra.mxu0 0.0
    %2275 = vmatprep.subr.mxu0 0.0
    %2276 = vmatpush1.msra.mxu0 0.0
    %2277 = vmatprep.subr.mxu0 0.0
    %2278 = vmatpush1.msra.mxu0 0.0
    %2279 = vmatprep.subr.mxu0 0.0
    %2280 = vmatpush1.msra.mxu0 0.0
    %2281 = vmatprep.subr.mxu0 0.0
    %2282 = vmatpush1.msra.mxu0 0.0
    %2283 = vmatprep.subr.mxu0 0.0
    %2284 = vmatpush1.msra.mxu0 0.0
    %2285 = vmatprep.subr.mxu0 0.0
    %2286 = vmatpush1.msra.mxu0 0.0
    %2287 = vmatprep.subr.mxu0 0.0
    %2288 = vmatpush1.msra.mxu0 0.0
    %2289 = vmatprep.subr.mxu0 0.0
    %2290 = vmatpush1.msra.mxu0 0.0
    %2291 = vmatprep.mubr.f32.mxu0 0.0
    %2292 = vmatmul.mubr.f32.gmra.mrb[0].mxu0 %v803
    %v2293 = vpop.f32.mrb[0].mxu0
    %v2294 = vadd.f32 %v2209, %v2293
    %v2295 = vpop.f32.mrb[0].mxu0
    %2296 = vmatprep.mubr.f32.mxu0 0.0
    %2297 = vmatmul.mubr.f32.gmra.mrb[0].mxu0 %v804
    %v2298 = vpop.f32.mrb[0].mxu0
    %v2299 = vadd.f32 %v2214, %v2298
    %v2300 = vpop.f32.mrb[0].mxu0
    %2301 = vmatprep.mubr.f32.mxu0 0.0
    %2302 = vmatmul.mubr.f32.gmra.mrb[0].mxu0 %v805
    %v2303 = vpop.f32.mrb[0].mxu0
    %v2304 = vadd.f32 %v2219, %v2303
    %v2305 = vpop.f32.mrb[0].mxu0
    %2306 = vmatprep.mubr.f32.mxu0 0.0
    %2307 = vmatmul.mubr.f32.gmra.mrb[0].mxu0 %v806
    %v2308 = vpop.f32.mrb[0].mxu0
    %v2309 = vadd.f32 %v2224, %v2308
    %v2310 = vpop.f32.mrb[0].mxu0
    %2311 = vdwg.mxu0
    %v2313 = vlaneseq
    %v2314 = vshrl.u32 %v2313, 7
    %v2315 = vsub.s32 0, %v2314
    %v2316 = vrot.slane %v594, %v2315
    %v2318 = vmul.f32 %v2294, %v2316
    %v2319 = vmul.f32 %v2299, %v2316
    %v2320 = vmul.f32 %v2304, %v2316
    %v2321 = vmul.f32 %v2309, %v2316
    %v2323 = vlaneseq
    %v2324 = vshrl.u32 %v2323, 7
    %v2325 = vsub.s32 0, %v2324
    %v2326 = vrot.slane %v595, %v2325
    %v2328 = vadd.f32 %v2318, %v2326
    %v2329 = vadd.f32 %v2319, %v2326
    %v2330 = vadd.f32 %v2320, %v2326
    %v2331 = vadd.f32 %v2321, %v2326
    %v2332 = vmax.f32 %v2328, 0.0
    %v2333 = vmax.f32 %v2329, 0.0
    %v2334 = vmax.f32 %v2330, 0.0
    %v2335 = vmax.f32 %v2331, 0.0
    %v2336 = vld [vmem:[%s8] sm:$0x3]
    %v2337 = vld [vmem:[%s9] sm:$0x3]
    %v2339 = vrot.slane %v2332, 2
    %v2341 = vmax.f32 %v2332, %v2339
    %v2343 = vrot.slane %v2333, 2
    %v2345 = vmax.f32 %v2333, %v2343
    %v2346 = vmax.f32 %v2341, %v2345
    %v2348 = vrot.slane %v2334, 2
    %v2350 = vmax.f32 %v2334, %v2348
    %v2352 = vrot.slane %v2335, 2
    %v2354 = vmax.f32 %v2335, %v2352
    %v2355 = vmax.f32 %v2350, %v2354
    %v2357 = vrot.slane %v2346, 4
    %v2360 = vrot.slane %v2355, 4
    %v2362 = vld [vmem:[%s7] sm:$0xff]
    %v2363 = vld [vmem:[%s7 + $0x8] sm:$0xff]
    %v2364 = vld [vmem:[%s7 + $0x10] sm:$0xff]
    %v2365 = vld [vmem:[%s7 + $0x18] sm:$0xff]
    %v2366 = vld [vmem:[%s7 + $0x20] sm:$0xff]
    %v2367 = vld [vmem:[%s7 + $0x28] sm:$0xff]
    %v2368 = vld [vmem:[%s7 + $0x30] sm:$0xff]
    %v2369 = vld [vmem:[%s7 + $0x38] sm:$0xff]
    %v2370 = vld [vmem:[%s7 + $0x40] sm:$0xff]
    %v2371 = vld [vmem:[%s7 + $0x48] sm:$0xff]
    %v2372 = vld [vmem:[%s7 + $0x50] sm:$0xff]
    %v2373 = vld [vmem:[%s7 + $0x58] sm:$0xff]
    %v2374 = vld [vmem:[%s7 + $0x60] sm:$0xff]
    %v2375 = vld [vmem:[%s7 + $0x68] sm:$0xff]
    %v2376 = vld [vmem:[%s7 + $0x70] sm:$0xff]
    %v2377 = vld [vmem:[%s7 + $0x78] sm:$0xff]
    %v2378 = vld [vmem:[%s7 + $0x80] sm:$0xff]
    %v2379 = vld [vmem:[%s7 + $0x88] sm:$0xff]
    %v2380 = vld [vmem:[%s7 + $0x90] sm:$0xff]
    %v2381 = vld [vmem:[%s7 + $0x98] sm:$0xff]
    %v2382 = vld [vmem:[%s7 + $0xa0] sm:$0xff]
    %v2383 = vld [vmem:[%s7 + $0xa8] sm:$0xff]
    %v2384 = vld [vmem:[%s7 + $0xb0] sm:$0xff]
    %v2385 = vld [vmem:[%s7 + $0xb8] sm:$0xff]
    %v2386 = vld [vmem:[%s7 + $0xc0] sm:$0xff]
    %v2387 = vld [vmem:[%s7 + $0xc8] sm:$0xff]
    %v2388 = vld [vmem:[%s7 + $0xd0] sm:$0xff]
    %v2389 = vld [vmem:[%s7 + $0xd8] sm:$0xff]
    %v2390 = vld [vmem:[%s7 + $0xe0] sm:$0xff]
    %v2391 = vld [vmem:[%s7 + $0xe8] sm:$0xff]
    %v2392 = vld [vmem:[%s7 + $0xf0] sm:$0xff]
    %v2393 = vld [vmem:[%s7 + $0xf8] sm:$0xff]
    %v2394 = vld [vmem:[%s7 + $0x100] sm:$0xff]
    %v2395 = vld [vmem:[%s7 + $0x108] sm:$0xff]
    %v2396 = vld [vmem:[%s7 + $0x110] sm:$0xff]
    %v2397 = vld [vmem:[%s7 + $0x118] sm:$0xff]
    %v2398 = vld [vmem:[%s7 + $0x120] sm:$0xff]
    %v2399 = vld [vmem:[%s7 + $0x128] sm:$0xff]
    %v2400 = vld [vmem:[%s7 + $0x130] sm:$0xff]
    %v2401 = vld [vmem:[%s7 + $0x138] sm:$0xff]
    %v2402 = vld [vmem:[%s7 + $0x140] sm:$0xff]
    %v2403 = vld [vmem:[%s7 + $0x148] sm:$0xff]
    %v2404 = vld [vmem:[%s7 + $0x150] sm:$0xff]
    %v2405 = vld [vmem:[%s7 + $0x158] sm:$0xff]
    %v2406 = vld [vmem:[%s7 + $0x160] sm:$0xff]
    %v2407 = vld [vmem:[%s7 + $0x168] sm:$0xff]
    %v2408 = vld [vmem:[%s7 + $0x170] sm:$0xff]
    %v2409 = vld [vmem:[%s7 + $0x178] sm:$0xff]
    %v2410 = vld [vmem:[%s7 + $0x180] sm:$0xff]
    %v2411 = vld [vmem:[%s7 + $0x188] sm:$0xff]
    %v2412 = vld [vmem:[%s7 + $0x190] sm:$0xff]
    %v2413 = vld [vmem:[%s7 + $0x198] sm:$0xff]
    %v2414 = vld [vmem:[%s7 + $0x1a0] sm:$0xff]
    %v2415 = vld [vmem:[%s7 + $0x1a8] sm:$0xff]
    %v2416 = vld [vmem:[%s7 + $0x1b0] sm:$0xff]
    %v2417 = vld [vmem:[%s7 + $0x1b8] sm:$0xff]
    %v2418 = vld [vmem:[%s7 + $0x1c0] sm:$0xff]
    %v2419 = vld [vmem:[%s7 + $0x1c8] sm:$0xff]
    %v2420 = vld [vmem:[%s7 + $0x1d0] sm:$0xff]
    %v2421 = vld [vmem:[%s7 + $0x1d8] sm:$0xff]
    %v2422 = vld [vmem:[%s7 + $0x1e0] sm:$0xff]
    %v2423 = vld [vmem:[%s7 + $0x1e8] sm:$0xff]
    %v2424 = vld [vmem:[%s7 + $0x1f0] sm:$0xff]
    %v2425 = vld [vmem:[%s7 + $0x1f8] sm:$0xff]
    %v2426 = vld [vmem:[%s7 + $0x200] sm:$0xff]
    %v2427 = vld [vmem:[%s7 + $0x208] sm:$0xff]
    %v2428 = vld [vmem:[%s7 + $0x210] sm:$0xff]
    %v2429 = vld [vmem:[%s7 + $0x218] sm:$0xff]
    %v2430 = vld [vmem:[%s7 + $0x220] sm:$0xff]
    %v2431 = vld [vmem:[%s7 + $0x228] sm:$0xff]
    %v2432 = vld [vmem:[%s7 + $0x230] sm:$0xff]
    %v2433 = vld [vmem:[%s7 + $0x238] sm:$0xff]
    %v2434 = vld [vmem:[%s7 + $0x240] sm:$0xff]
    %v2435 = vld [vmem:[%s7 + $0x248] sm:$0xff]
    %v2436 = vld [vmem:[%s7 + $0x250] sm:$0xff]
    %v2437 = vld [vmem:[%s7 + $0x258] sm:$0xff]
    %v2438 = vld [vmem:[%s7 + $0x260] sm:$0xff]
    %v2439 = vld [vmem:[%s7 + $0x268] sm:$0xff]
    %v2440 = vld [vmem:[%s7 + $0x270] sm:$0xff]
    %v2441 = vld [vmem:[%s7 + $0x278] sm:$0xff]
    %v2442 = vld [vmem:[%s7 + $0x280] sm:$0xff]
    %v2443 = vld [vmem:[%s7 + $0x288] sm:$0xff]
    %v2444 = vld [vmem:[%s7 + $0x290] sm:$0xff]
    %v2445 = vld [vmem:[%s7 + $0x298] sm:$0xff]
    %v2446 = vld [vmem:[%s7 + $0x2a0] sm:$0xff]
    %v2447 = vld [vmem:[%s7 + $0x2a8] sm:$0xff]
    %v2448 = vld [vmem:[%s7 + $0x2b0] sm:$0xff]
    %v2449 = vld [vmem:[%s7 + $0x2b8] sm:$0xff]
    %v2450 = vld [vmem:[%s7 + $0x2c0] sm:$0xff]
    %v2451 = vld [vmem:[%s7 + $0x2c8] sm:$0xff]
    %v2452 = vld [vmem:[%s7 + $0x2d0] sm:$0xff]
    %v2453 = vld [vmem:[%s7 + $0x2d8] sm:$0xff]
    %v2454 = vld [vmem:[%s7 + $0x2e0] sm:$0xff]
    %v2455 = vld [vmem:[%s7 + $0x2e8] sm:$0xff]
    %v2456 = vld [vmem:[%s7 + $0x2f0] sm:$0xff]
    %v2457 = vld [vmem:[%s7 + $0x2f8] sm:$0xff]
    %v2458 = vld [vmem:[%s7 + $0x300] sm:$0xff]
    %v2459 = vld [vmem:[%s7 + $0x308] sm:$0xff]
    %v2460 = vld [vmem:[%s7 + $0x310] sm:$0xff]
    %v2461 = vld [vmem:[%s7 + $0x318] sm:$0xff]
    %v2462 = vld [vmem:[%s7 + $0x320] sm:$0xff]
    %v2463 = vld [vmem:[%s7 + $0x328] sm:$0xff]
    %v2464 = vld [vmem:[%s7 + $0x330] sm:$0xff]
    %v2465 = vld [vmem:[%s7 + $0x338] sm:$0xff]
    %v2466 = vld [vmem:[%s7 + $0x340] sm:$0xff]
    %v2467 = vld [vmem:[%s7 + $0x348] sm:$0xff]
    %v2468 = vld [vmem:[%s7 + $0x350] sm:$0xff]
    %v2469 = vld [vmem:[%s7 + $0x358] sm:$0xff]
    %v2470 = vld [vmem:[%s7 + $0x360] sm:$0xff]
    %v2471 = vld [vmem:[%s7 + $0x368] sm:$0xff]
    %v2472 = vld [vmem:[%s7 + $0x370] sm:$0xff]
    %v2473 = vld [vmem:[%s7 + $0x378] sm:$0xff]
    %v2474 = vld [vmem:[%s7 + $0x380] sm:$0xff]
    %v2475 = vld [vmem:[%s7 + $0x388] sm:$0xff]
    %v2476 = vld [vmem:[%s7 + $0x390] sm:$0xff]
    %v2477 = vld [vmem:[%s7 + $0x398] sm:$0xff]
    %v2478 = vld [vmem:[%s7 + $0x3a0] sm:$0xff]
    %v2479 = vld [vmem:[%s7 + $0x3a8] sm:$0xff]
    %v2480 = vld [vmem:[%s7 + $0x3b0] sm:$0xff]
    %v2481 = vld [vmem:[%s7 + $0x3b8] sm:$0xff]
    %v2482 = vld [vmem:[%s7 + $0x3c0] sm:$0xff]
    %v2483 = vld [vmem:[%s7 + $0x3c8] sm:$0xff]
    %v2484 = vld [vmem:[%s7 + $0x3d0] sm:$0xff]
    %v2485 = vld [vmem:[%s7 + $0x3d8] sm:$0xff]
    %v2486 = vld [vmem:[%s7 + $0x3e0] sm:$0xff]
    %v2487 = vld [vmem:[%s7 + $0x3e8] sm:$0xff]
    %v2488 = vld [vmem:[%s7 + $0x3f0] sm:$0xff]
    %v2489 = vld [vmem:[%s7 + $0x3f8] sm:$0xff]
    %2490 = vmatprep.subr.mxu0 %v2363
    %2491 = vmatpush1.msra.mxu0 %v2362
    %2492 = vmatprep.subr.mxu0 %v2365
    %2493 = vmatpush1.msra.mxu0 %v2364
    %2494 = vmatprep.subr.mxu0 %v2367
    %2495 = vmatpush1.msra.mxu0 %v2366
    %2496 = vmatprep.subr.mxu0 %v2369
    %2497 = vmatpush1.msra.mxu0 %v2368
    %2498 = vmatprep.subr.mxu0 %v2371
    %2499 = vmatpush1.msra.mxu0 %v2370
    %2500 = vmatprep.subr.mxu0 %v2373
    %2501 = vmatpush1.msra.mxu0 %v2372
    %2502 = vmatprep.subr.mxu0 %v2375
    %2503 = vmatpush1.msra.mxu0 %v2374
    %2504 = vmatprep.subr.mxu0 %v2377
    %2505 = vmatpush1.msra.mxu0 %v2376
    %2506 = vmatprep.subr.mxu0 %v2379
    %2507 = vmatpush1.msra.mxu0 %v2378
    %2508 = vmatprep.subr.mxu0 %v2381
    %2509 = vmatpush1.msra.mxu0 %v2380
    %2510 = vmatprep.subr.mxu0 %v2383
    %2511 = vmatpush1.msra.mxu0 %v2382
    %2512 = vmatprep.subr.mxu0 %v2385
    %2513 = vmatpush1.msra.mxu0 %v2384
    %2514 = vmatprep.subr.mxu0 %v2387
    %2515 = vmatpush1.msra.mxu0 %v2386
    %2516 = vmatprep.subr.mxu0 %v2389
    %2517 = vmatpush1.msra.mxu0 %v2388
    %2518 = vmatprep.subr.mxu0 %v2391
    %2519 = vmatpush1.msra.mxu0 %v2390
    %2520 = vmatprep.subr.mxu0 %v2393
    %2521 = vmatpush1.msra.mxu0 %v2392
    %2522 = vmatprep.subr.mxu0 %v2395
    %2523 = vmatpush1.msra.mxu0 %v2394
    %2524 = vmatprep.subr.mxu0 %v2397
    %2525 = vmatpush1.msra.mxu0 %v2396
    %2526 = vmatprep.subr.mxu0 %v2399
    %2527 = vmatpush1.msra.mxu0 %v2398
    %2528 = vmatprep.subr.mxu0 %v2401
    %2529 = vmatpush1.msra.mxu0 %v2400
    %2530 = vmatprep.subr.mxu0 %v2403
    %2531 = vmatpush1.msra.mxu0 %v2402
    %2532 = vmatprep.subr.mxu0 %v2405
    %2533 = vmatpush1.msra.mxu0 %v2404
    %2534 = vmatprep.subr.mxu0 %v2407
    %2535 = vmatpush1.msra.mxu0 %v2406
    %2536 = vmatprep.subr.mxu0 %v2409
    %2537 = vmatpush1.msra.mxu0 %v2408
    %2538 = vmatprep.subr.mxu0 %v2411
    %2539 = vmatpush1.msra.mxu0 %v2410
    %2540 = vmatprep.subr.mxu0 %v2413
    %2541 = vmatpush1.msra.mxu0 %v2412
    %2542 = vmatprep.subr.mxu0 %v2415
    %2543 = vmatpush1.msra.mxu0 %v2414
    %2544 = vmatprep.subr.mxu0 %v2417
    %2545 = vmatpush1.msra.mxu0 %v2416
    %2546 = vmatprep.subr.mxu0 %v2419
    %2547 = vmatpush1.msra.mxu0 %v2418
    %2548 = vmatprep.subr.mxu0 %v2421
    %2549 = vmatpush1.msra.mxu0 %v2420
    %2550 = vmatprep.subr.mxu0 %v2423
    %2551 = vmatpush1.msra.mxu0 %v2422
    %2552 = vmatprep.subr.mxu0 %v2425
    %2553 = vmatpush1.msra.mxu0 %v2424
    %2554 = vmatprep.mubr.f32.mxu0 %v2355
    %2555 = vmatmul.mubr.f32.gmra.mrb[0].mxu0 %v2346
    %v2556 = vpop.f32.mrb[0].mxu0
    %v2557 = vadd.f32 0.0, %v2556
    %v2558 = vpop.f32.mrb[0].mxu0
    %v2559 = vadd.f32 0.0, %v2558
    %2560 = vdwg.mxu0
    %2561 = vmatprep.subr.mxu0 %v2427
    %2562 = vmatpush1.msra.mxu0 %v2426
    %2563 = vmatprep.subr.mxu0 %v2429
    %2564 = vmatpush1.msra.mxu0 %v2428
    %2565 = vmatprep.subr.mxu0 %v2431
    %2566 = vmatpush1.msra.mxu0 %v2430
    %2567 = vmatprep.subr.mxu0 %v2433
    %2568 = vmatpush1.msra.mxu0 %v2432
    %2569 = vmatprep.subr.mxu0 %v2435
    %2570 = vmatpush1.msra.mxu0 %v2434
    %2571 = vmatprep.subr.mxu0 %v2437
    %2572 = vmatpush1.msra.mxu0 %v2436
    %2573 = vmatprep.subr.mxu0 %v2439
    %2574 = vmatpush1.msra.mxu0 %v2438
    %2575 = vmatprep.subr.mxu0 %v2441
    %2576 = vmatpush1.msra.mxu0 %v2440
    %2577 = vmatprep.subr.mxu0 %v2443
    %2578 = vmatpush1.msra.mxu0 %v2442
    %2579 = vmatprep.subr.mxu0 %v2445
    %2580 = vmatpush1.msra.mxu0 %v2444
    %2581 = vmatprep.subr.mxu0 %v2447
    %2582 = vmatpush1.msra.mxu0 %v2446
    %2583 = vmatprep.subr.mxu0 %v2449
    %2584 = vmatpush1.msra.mxu0 %v2448
    %2585 = vmatprep.subr.mxu0 %v2451
    %2586 = vmatpush1.msra.mxu0 %v2450
    %2587 = vmatprep.subr.mxu0 %v2453
    %2588 = vmatpush1.msra.mxu0 %v2452
    %2589 = vmatprep.subr.mxu0 %v2455
    %2590 = vmatpush1.msra.mxu0 %v2454
    %2591 = vmatprep.subr.mxu0 %v2457
    %2592 = vmatpush1.msra.mxu0 %v2456
    %2593 = vmatprep.subr.mxu0 %v2459
    %2594 = vmatpush1.msra.mxu0 %v2458
    %2595 = vmatprep.subr.mxu0 %v2461
    %2596 = vmatpush1.msra.mxu0 %v2460
    %2597 = vmatprep.subr.mxu0 %v2463
    %2598 = vmatpush1.msra.mxu0 %v2462
    %2599 = vmatprep.subr.mxu0 %v2465
    %2600 = vmatpush1.msra.mxu0 %v2464
    %2601 = vmatprep.subr.mxu0 %v2467
    %2602 = vmatpush1.msra.mxu0 %v2466
    %2603 = vmatprep.subr.mxu0 %v2469
    %2604 = vmatpush1.msra.mxu0 %v2468
    %2605 = vmatprep.subr.mxu0 %v2471
    %2606 = vmatpush1.msra.mxu0 %v2470
    %2607 = vmatprep.subr.mxu0 %v2473
    %2608 = vmatpush1.msra.mxu0 %v2472
    %2609 = vmatprep.subr.mxu0 %v2475
    %2610 = vmatpush1.msra.mxu0 %v2474
    %2611 = vmatprep.subr.mxu0 %v2477
    %2612 = vmatpush1.msra.mxu0 %v2476
    %2613 = vmatprep.subr.mxu0 %v2479
    %2614 = vmatpush1.msra.mxu0 %v2478
    %2615 = vmatprep.subr.mxu0 %v2481
    %2616 = vmatpush1.msra.mxu0 %v2480
    %2617 = vmatprep.subr.mxu0 %v2483
    %2618 = vmatpush1.msra.mxu0 %v2482
    %2619 = vmatprep.subr.mxu0 %v2485
    %2620 = vmatpush1.msra.mxu0 %v2484
    %2621 = vmatprep.subr.mxu0 %v2487
    %2622 = vmatpush1.msra.mxu0 %v2486
    %2623 = vmatprep.subr.mxu0 %v2489
    %2624 = vmatpush1.msra.mxu0 %v2488
    %2625 = vmatprep.mubr.f32.mxu0 %v2360
    %2626 = vmatmul.mubr.f32.gmra.mrb[0].mxu0 %v2357
    %v2627 = vpop.f32.mrb[0].mxu0
    %v2628 = vadd.f32 %v2557, %v2627
    %v2629 = vpop.f32.mrb[0].mxu0
    %v2630 = vadd.f32 %v2559, %v2629
    %2631 = vdwg.mxu0
    %v2633 = vlaneseq
    %v2634 = vshrl.u32 %v2633, 7
    %v2635 = vsub.s32 0, %v2634
    %v2636 = vrot.slane %v2336, %v2635
    %v2637 = vlaneseq
    %v2638 = vshrl.u32 %v2637, 7
    %v2639 = vsub.s32 1, %v2638
    %v2640 = vrot.slane %v2336, %v2639
    %v2643 = vmul.f32 %v2628, %v2636
    %v2644 = vmul.f32 %v2630, %v2640
    %v2646 = vlaneseq
    %v2647 = vshrl.u32 %v2646, 7
    %v2648 = vsub.s32 0, %v2647
    %v2649 = vrot.slane %v2337, %v2648
    %v2650 = vlaneseq
    %v2651 = vshrl.u32 %v2650, 7
    %v2652 = vsub.s32 1, %v2651
    %v2653 = vrot.slane %v2337, %v2652
    %v2656 = vadd.f32 %v2643, %v2649
    %v2657 = vadd.f32 %v2644, %v2653
    %v2658 = vxor.u32 %v2656, 2147483648
    %v2659 = vxor.u32 %v2657, 2147483648
    %v2660 = vmul.f32 %v2658, 1.442695
    %v2661 = vpow.pop %v2660
    %v2662 = vmul.f32 %v2659, 1.442695
    %v2663 = vpow.pop %v2662
    %v2664 = vadd.f32 %v2661, 1.0
    %v2665 = vadd.f32 %v2663, 1.0
    %v2666 = vrcp.pop %v2664
    %v2667 = vmul.f32 1.0, %v2666
    %v2668 = vrcp.pop %v2665
    %v2669 = vmul.f32 1.0, %v2668
    %v2670 = vld [vmem:[%s10] sm:$0xff]
    %v2671 = vld [vmem:[%s10 + $0x8] sm:$0xff]
    %v2672 = vld [vmem:[%s10 + $0x10] sm:$0xff]
    %v2673 = vld [vmem:[%s10 + $0x18] sm:$0xff]
    %v2674 = vld [vmem:[%s10 + $0x20] sm:$0xff]
    %v2675 = vld [vmem:[%s10 + $0x28] sm:$0xff]
    %v2676 = vld [vmem:[%s10 + $0x30] sm:$0xff]
    %v2677 = vld [vmem:[%s10 + $0x38] sm:$0xff]
    %v2678 = vld [vmem:[%s10 + $0x40] sm:$0xff]
    %v2679 = vld [vmem:[%s10 + $0x48] sm:$0xff]
    %v2680 = vld [vmem:[%s10 + $0x50] sm:$0xff]
    %v2681 = vld [vmem:[%s10 + $0x58] sm:$0xff]
    %v2682 = vld [vmem:[%s10 + $0x60] sm:$0xff]
    %v2683 = vld [vmem:[%s10 + $0x68] sm:$0xff]
    %v2684 = vld [vmem:[%s10 + $0x70] sm:$0xff]
    %v2685 = vld [vmem:[%s10 + $0x78] sm:$0xff]
    %v2686 = vld [vmem:[%s10 + $0x80] sm:$0xff]
    %v2687 = vld [vmem:[%s10 + $0x88] sm:$0xff]
    %v2688 = vld [vmem:[%s10 + $0x90] sm:$0xff]
    %v2689 = vld [vmem:[%s10 + $0x98] sm:$0xff]
    %v2690 = vld [vmem:[%s10 + $0xa0] sm:$0xff]
    %v2691 = vld [vmem:[%s10 + $0xa8] sm:$0xff]
    %v2692 = vld [vmem:[%s10 + $0xb0] sm:$0xff]
    %v2693 = vld [vmem:[%s10 + $0xb8] sm:$0xff]
    %v2694 = vld [vmem:[%s10 + $0xc0] sm:$0xff]
    %v2695 = vld [vmem:[%s10 + $0xc8] sm:$0xff]
    %v2696 = vld [vmem:[%s10 + $0xd0] sm:$0xff]
    %v2697 = vld [vmem:[%s10 + $0xd8] sm:$0xff]
    %v2698 = vld [vmem:[%s10 + $0xe0] sm:$0xff]
    %v2699 = vld [vmem:[%s10 + $0xe8] sm:$0xff]
    %v2700 = vld [vmem:[%s10 + $0xf0] sm:$0xff]
    %v2701 = vld [vmem:[%s10 + $0xf8] sm:$0xff]
    %v2702 = vld [vmem:[%s11] sm:$0x1]
    %v2704 = vlaneseq
    %v2705 = vshrl.u32 %v2704, 7
    %v2706 = vsub.s32 0, %v2705
    %v2707 = vrot.slane %v2702, %v2706
    %2709 = vmatprep.subr.mxu0 0.0
    %2710 = vmatpush1.msra.mxu0 %v2670
    %2711 = vmatprep.subr.mxu0 0.0
    %2712 = vmatpush1.msra.mxu0 %v2671
    %2713 = vmatprep.subr.mxu0 0.0
    %2714 = vmatpush1.msra.mxu0 %v2672
    %2715 = vmatprep.subr.mxu0 0.0
    %2716 = vmatpush1.msra.mxu0 %v2673
    %2717 = vmatprep.subr.mxu0 0.0
    %2718 = vmatpush1.msra.mxu0 %v2674
    %2719 = vmatprep.subr.mxu0 0.0
    %2720 = vmatpush1.msra.mxu0 %v2675
    %2721 = vmatprep.subr.mxu0 0.0
    %2722 = vmatpush1.msra.mxu0 %v2676
    %2723 = vmatprep.subr.mxu0 0.0
    %2724 = vmatpush1.msra.mxu0 %v2677
    %2725 = vmatprep.subr.mxu0 0.0
    %2726 = vmatpush1.msra.mxu0 %v2678
    %2727 = vmatprep.subr.mxu0 0.0
    %2728 = vmatpush1.msra.mxu0 %v2679
    %2729 = vmatprep.subr.mxu0 0.0
    %2730 = vmatpush1.msra.mxu0 %v2680
    %2731 = vmatprep.subr.mxu0 0.0
    %2732 = vmatpush1.msra.mxu0 %v2681
    %2733 = vmatprep.subr.mxu0 0.0
    %2734 = vmatpush1.msra.mxu0 %v2682
    %2735 = vmatprep.subr.mxu0 0.0
    %2736 = vmatpush1.msra.mxu0 %v2683
    %2737 = vmatprep.subr.mxu0 0.0
    %2738 = vmatpush1.msra.mxu0 %v2684
    %2739 = vmatprep.subr.mxu0 0.0
    %2740 = vmatpush1.msra.mxu0 %v2685
    %2741 = vmatprep.subr.mxu0 0.0
    %2742 = vmatpush1.msra.mxu0 %v2686
    %2743 = vmatprep.subr.mxu0 0.0
    %2744 = vmatpush1.msra.mxu0 %v2687
    %2745 = vmatprep.subr.mxu0 0.0
    %2746 = vmatpush1.msra.mxu0 %v2688
    %2747 = vmatprep.subr.mxu0 0.0
    %2748 = vmatpush1.msra.mxu0 %v2689
    %2749 = vmatprep.subr.mxu0 0.0
    %2750 = vmatpush1.msra.mxu0 %v2690
    %2751 = vmatprep.subr.mxu0 0.0
    %2752 = vmatpush1.msra.mxu0 %v2691
    %2753 = vmatprep.subr.mxu0 0.0
    %2754 = vmatpush1.msra.mxu0 %v2692
    %2755 = vmatprep.subr.mxu0 0.0
    %2756 = vmatpush1.msra.mxu0 %v2693
    %2757 = vmatprep.subr.mxu0 0.0
    %2758 = vmatpush1.msra.mxu0 %v2694
    %2759 = vmatprep.subr.mxu0 0.0
    %2760 = vmatpush1.msra.mxu0 %v2695
    %2761 = vmatprep.subr.mxu0 0.0
    %2762 = vmatpush1.msra.mxu0 %v2696
    %2763 = vmatprep.subr.mxu0 0.0
    %2764 = vmatpush1.msra.mxu0 %v2697
    %2765 = vmatprep.subr.mxu0 0.0
    %2766 = vmatpush1.msra.mxu0 %v2698
    %2767 = vmatprep.subr.mxu0 0.0
    %2768 = vmatpush1.msra.mxu0 %v2699
    %2769 = vmatprep.subr.mxu0 0.0
    %2770 = vmatpush1.msra.mxu0 %v2700
    %2771 = vmatprep.subr.mxu0 0.0
    %2772 = vmatpush1.msra.mxu0 %v2701
    %2773 = vmatprep.mubr.f32.mxu0 %v2669
    %2774 = vmatmul.mubr.f32.gmra.mrb[0].mxu0 %v2667
    %v2775 = vpop.f32.mrb[0].mxu0
    %v2776 = vadd.f32 %v2707, %v2775
    %v2777 = vpop.f32.mrb[0].mxu0
    %2778 = vdwg.mxu0
    %v2779 = vtanh.pop %v2776
    %2780 = vst [vmem:[#allocation3] sm:$0x3] %v2779
    // Predicated region
    $region50: #{codegen_forward.1} parent=1 // pred_check
      _
    $region51: #{codegen_forward.1} parent=1 // pred_check_branch
      %2782 = sbr.rel (0) target = $region53
    $region52: #{codegen_forward.1} parent=1 // pred_region
      %s2784 = ssub.s32 32, 32
      %2785 = vsyncadd [#allocation4], %s2784
      %s2787 = sshll.u32 [#allocation3], 4
      %s2788 = int_to_ptr.vmem [resolvable:$true] %s2787
      %2790 = dma.vmem_to_hbm [thread:$0]  %s2788, 32, %s12, [#allocation4]
    $region53: #{codegen_forward.1} parent=1 // pred_fallthru
      _
    // Predicated region
    $region54: #{codegen_forward.1} parent=1 // pred_check
      _
    $region55: #{codegen_forward.1} parent=1 // pred_check_branch
      %2792 = sbr.rel (0) target = $region57
    $region56: #{codegen_forward.1} parent=1 // pred_region
      %2793 = dma.done [#allocation4], 32
    $region57: #{codegen_forward.1} parent=1 // pred_fallthru
      _
    %2794 = vsyncpa [#allocation4], 1

</llo_original>
